<compile_context>
chip_gen: v6e
topology: v6e:2x2x1
jax: 0.10.0
libtpu: 0.0.40
codegen_flags: <defaults>
</compile_context>

<pallas_src>
import functools

import jax
import jax.numpy as jnp
from jax.experimental import pallas as pl
from jax.experimental.pallas import tpu as pltpu


# ---------------- per-generation tuning ----------------

@functools.lru_cache(maxsize=None)
def _vmem_limit_bytes():
    try:
        info = pltpu.get_tpu_info()
        cap = int(getattr(info, "vmem_capacity_bytes", 0) or 0)
    except Exception:
        cap = 0
    if cap < (16 << 20):
        cap = 64 << 20                      # conservative: v7x physical VMEM
    # ~75% of physical, clamped: ~96 MiB on v5e/v6e, ~48 MiB on v7x.
    return max(32 << 20, min(cap * 3 // 4, 100 << 20))


def _pick_query_tile(L, batch, target):
    """Largest multiple-of-16 divisor of L <= target (bf16 sublane packing)."""
    def best(limit):
        t = (min(limit, L) // 16) * 16
        while t >= 16:
            if L % t == 0:
                return t
            t -= 16
        return None

    tq = best(target)
    if tq is None:
        tq = L                               # awkward L: single (full) query tile
    if batch == 1 and tq == L and L >= 32:
        half = best(L // 2)                  # v7x: keep >=2 parallel iterations
        if half is not None:
            tq = half
    return tq


def _pick_row_tile(H, W):
    """Row-tile height for K2: divisor of H, lane-dense output (TH*W % 128 == 0)."""
    cands = [th for th in range(1, H) if H % th == 0]
    good = [th for th in cands if (th * W) % 128 == 0 and th <= 64]
    if good:
        return max(good)
    return H                                  # fallback: whole image per batch


# ---------------- Pallas kernels ----------------

def _attn_kernel(tq, inv_kernel, ak_ref, km_ref, mm_ref, ma_ref, v_ref, o_ref):
    # ak_ref : (1, L,  D)   key == query patches (bf16, raw)
    # km_ref : (1, 1,  L)   per-key multiplier = 1/max(||k||,1e-4) * mm * scale
    # mm_ref : (1, 1,  L)   per-key validity mask (for the post-softmax re-mask)
    # ma_ref : (1, TQ, 1)   per-query mask
    # v_ref  : (1, L,  DV)  value patches (bf16)
    # o_ref  : (1, TQ, DV)
    q0 = pl.multiple_of(pl.program_id(1) * tq, tq)
    q = ak_ref[0, pl.ds(q0, tq), :]                        # (TQ, D) slice of keys
    k = ak_ref[0]                                          # (L, D)
    # bf16 MXU matmul, f32 accumulation (contraction D = 9*C2).
    s = jax.lax.dot_general(q, k, (((1,), (1,)), ((), ())),
                            preferred_element_type=jnp.float32)   # (TQ, L)
    s = s * km_ref[0]            # == (Q @ K_norm^T) * key-mask * softmax_scale
    s = s * ma_ref[0]            # per-query mask
    mx = jnp.max(s, axis=-1, keepdims=True)
    e = jnp.exp(s - mx)
    p = e * pl.reciprocal(jnp.sum(e, axis=-1, keepdims=True), approx=True)
    p = jnp.maximum(p * mm_ref[0] * ma_ref[0], 1e-8)       # re-mask + clamp(1e-8)
    out = jnp.dot(p.astype(v_ref.dtype), v_ref[0],
                  preferred_element_type=jnp.float32)      # (TQ, DV)
    o_ref[0, :, :] = out * inv_kernel                      # the "/ float(kernel)"


def _fuse_kernel(rates, th, ow, rmax, y_ref, w_ref, b_ref, o_ref):
    # y_ref : (1, 1, TH+2R, W+2R, Cin)  row slab of R-padded y (bf16)
    # w_ref : (G, 9*Cin, Cg)            weights, (dh,dw,ci) contraction order (bf16)
    # b_ref : (1, G*Cg)                 biases (f32)
    # o_ref : (1, TH*W, G*Cg)
    cin = y_ref.shape[-1]
    outs = []
    for g, r in enumerate(rates):
        taps = []
        for dh in range(3):
            for dw in range(3):
                r0 = rmax + r * (dh - 1)
                c0 = rmax + r * (dw - 1)
                taps.append(y_ref[0, 0, r0:r0 + th, c0:c0 + ow, :]
                            .reshape(th * ow, cin))
        slab = jnp.concatenate(taps, axis=-1)                    # (TH*W, 9*Cin)
        outs.append(jnp.dot(slab, w_ref[g],
                            preferred_element_type=jnp.float32))  # (TH*W, Cg)
    o_ref[0, :, :] = jnp.maximum(jnp.concatenate(outs, axis=-1) + b_ref[...], 0.0)


# ---------------- JAX glue (pure data movement / tiny scalar work) ----------

def _bilinear_ac(x, out_h, out_w):
    """Bilinear resize with align_corners=True (matches F.interpolate)."""
    _, h, w, _ = x.shape

    def coords(out_n, in_n):
        if out_n == 1 or in_n == 1:
            return jnp.zeros((out_n,), jnp.float32)
        return jnp.arange(out_n, dtype=jnp.float32) * ((in_n - 1) / (out_n - 1))

    ys, xs = coords(out_h, h), coords(out_w, w)
    y0 = jnp.clip(jnp.floor(ys).astype(jnp.int32), 0, h - 1)
    x0 = jnp.clip(jnp.floor(xs).astype(jnp.int32), 0, w - 1)
    y1 = jnp.clip(y0 + 1, 0, h - 1)
    x1 = jnp.clip(x0 + 1, 0, w - 1)
    wy = (ys - y0.astype(jnp.float32))[None, :, None, None]
    wx = (xs - x0.astype(jnp.float32))[None, None, :, None]
    top = x[:, y0][:, :, x0] * (1 - wx) + x[:, y0][:, :, x1] * wx
    bot = x[:, y1][:, :, x0] * (1 - wx) + x[:, y1][:, :, x1] * wx
    return top * (1 - wy) + bot * wy


def _make_key_mask(mask_nchw, H1, W1, H2, W2):
    """mm[b, l] = 1 where the 4x4/stride-2/pad-1 patch of the resized mask is all zero."""
    b = mask_nchw.shape[0]
    m = jnp.transpose(mask_nchw, (0, 2, 3, 1)).astype(jnp.float32)
    m = _bilinear_ac(m, H1, W1)
    mp = jnp.pad(m, ((0, 0), (1, 1), (1, 1), (0, 0)))
    s = jax.lax.reduce_window(mp, 0.0, jax.lax.add,
                              (1, 4, 4, 1), (1, 2, 2, 1), 'VALID')
    mm = ((s / 16.0) == 0.0).astype(jnp.float32)      # (B, H2, W2, 1)
    return mm.reshape(b, 1, H2 * W2)


def _patches_3x3(x_nhwc):
    """im2col of 3x3/stride-1/pad-1 patches -> (B, H*W, 9*C)."""
    b, h, w, c = x_nhwc.shape
    xp = jnp.pad(x_nhwc, ((0, 0), (1, 1), (1, 1), (0, 0)))
    taps = [xp[:, kh:kh + h, kw:kw + w, :] for kh in range(3) for kw in range(3)]
    return jnp.concatenate(taps, axis=-1).reshape(b, h * w, 9 * c)


def _value_patches(x1_nhwc, H2, W2):
    """4x4/stride-2/pad-1 patches of x1 -> (B, L, 16*C1), tap-major layout."""
    b, _, _, c = x1_nhwc.shape
    xp = jnp.pad(x1_nhwc, ((0, 0), (1, 1), (1, 1), (0, 0)))
    taps = [xp[:, kh:kh + 2 * H2:2, kw:kw + 2 * W2:2, :]
            for kh in range(4) for kw in range(4)]
    v = jnp.stack(taps, axis=3)                        # (B, H2, W2, 16, C)
    return v.reshape(b, H2 * W2, 16 * c)


def _fold_stride2_k4(p, H2, W2, c):
    """Overlap-add of (B, L, 16*C) tap contributions == conv_transpose2d(stride=2, k=4, pad=1)."""
    b = p.shape[0]
    p6 = p.reshape(b, H2, W2, 4, 4, c)
    p0, p1, p2, p3 = (p6[:, :, :, i] for i in range(4))
    s3 = jnp.pad(p3, ((0, 0), (1, 0), (0, 0), (0, 0), (0, 0)))[:, :H2]
    s0 = jnp.pad(p0, ((0, 0), (0, 1), (0, 0), (0, 0), (0, 0)))[:, 1:]
    t = jnp.stack([p1 + s3, s0 + p2], axis=2).reshape(b, 2 * H2, W2, 4, c)
    t0, t1, t2, t3 = (t[:, :, :, i] for i in range(4))
    s3c = jnp.pad(t3, ((0, 0), (0, 0), (1, 0), (0, 0)))[:, :, :W2]
    s0c = jnp.pad(t0, ((0, 0), (0, 0), (0, 1), (0, 0)))[:, :, 1:]
    return jnp.stack([t1 + s3c, s0c + t2], axis=3).reshape(b, 2 * H2, 2 * W2, c)


# ---------------- public forward ----------------

def init_atnconv_params(key, input_channels, output_channels, groups):
    cg = output_channels // groups
    kw, kb = jax.random.split(key)
    w = jax.random.normal(kw, (groups, 3, 3, input_channels, cg),
                          jnp.float32) / jnp.sqrt(9.0 * input_channels)
    b = jax.random.normal(kb, (groups, cg), jnp.float32) * 0.01
    return dict(w_fuse=w, b_fuse=b)


def atnconv_forward(params, x1_nchw, x2_nchw, mask_nchw, mask_all_nchw,
                    softmax_scale=10.0, rates=(1, 2, 4, 8)):
    B, C1, H1, W1 = x1_nchw.shape
    _, C2, H2, W2 = x2_nchw.shape
    assert H1 == 2 * H2 and W1 == 2 * W2, "module assumes x1 = 2x resolution of x2 (rate=2)"
    kernel = 4                       # size * rate
    L, D, DV = H2 * W2, 9 * C2, 16 * C1
    vmem_limit = _vmem_limit_bytes()
    tq_target = 512 if vmem_limit >= (72 << 20) else 256   # bigger tiles on v5e/v6e

    x1 = jnp.transpose(x1_nchw, (0, 2, 3, 1)).astype(jnp.float32)   # NHWC
    x2 = jnp.transpose(x2_nchw, (0, 2, 3, 1)).astype(jnp.float32)   # NHWC

    # --- im2col glue: queries==keys (3x3 patches of x2), values (4x4 of x1) ---
    A_f32 = _patches_3x3(x2)                               # (B, L, D)  f32
    A = A_f32.astype(jnp.bfloat16)                         # bf16 MXU operand
    V = _value_patches(x1, H2, W2).astype(jnp.bfloat16)    # (B, L, DV) bf16
    k_scale = 1.0 / jnp.maximum(jnp.sqrt(jnp.sum(A_f32 * A_f32, axis=-1)), 1e-4)
    mm = _make_key_mask(mask_nchw, H1, W1, H2, W2)         # (B, 1, L)
    km = (k_scale.reshape(B, 1, L) * mm * float(softmax_scale)
          ).astype(jnp.float32)                            # fused per-key multiplier
    ma = _bilinear_ac(jnp.transpose(mask_all_nchw, (0, 2, 3, 1)).astype(jnp.float32),
                      H2, W2)
    ma_q = ma.reshape(B, L, 1)                             # per-query mask

    # --- K1: fused scores + masks + softmax + probs@V (bf16 matmuls, f32 acc) ---
    TQ = _pick_query_tile(L, B, tq_target)
    attn = functools.partial(_attn_kernel, TQ, 1.0 / float(kernel))
    P = pl.pallas_call(
        attn,
        out_shape=jax.ShapeDtypeStruct((B, L, DV), jnp.float32),
        grid=(B, L // TQ),
        in_specs=[
            pl.BlockSpec((1, L, D), lambda b, q: (b, 0, 0)),    # keys==queries (resident)
            pl.BlockSpec((1, 1, L), lambda b, q: (b, 0, 0)),    # km
            pl.BlockSpec((1, 1, L), lambda b, q: (b, 0, 0)),    # mm
            pl.BlockSpec((1, TQ, 1), lambda b, q: (b, q, 0)),   # per-query mask
            pl.BlockSpec((1, L, DV), lambda b, q: (b, 0, 0)),   # values (resident)
        ],
        out_specs=pl.BlockSpec((1, TQ, DV), lambda b, q: (b, q, 0)),
        compiler_params=pltpu.CompilerParams(
            dimension_semantics=("parallel", "parallel"),
            vmem_limit_bytes=vmem_limit),
    )(A, km, mm, ma_q, V)

    # --- fold (conv_transpose2d stride=2, k=4, pad=1; /4 already applied) ---
    y = _fold_stride2_k4(P, H2, W2, C1)                    # (B, H1, W1, C1) f32

    # --- K2: four dilated 3x3 convs + ReLU, fused & row-tiled ---
    G, _, _, _, Cg = params['w_fuse'].shape
    Cout = G * Cg
    R = int(max(rates))
    TH = _pick_row_tile(H1, W1)
    T = H1 // TH
    yp = jnp.pad(y, ((0, 0), (R, R), (R, R), (0, 0))).astype(jnp.bfloat16)
    # overlapping row slabs (halo = R rows each side); pure XLA data movement.
    slabs = jnp.stack([yp[:, t * TH: t * TH + TH + 2 * R, :, :] for t in range(T)],
                      axis=1)                              # (B, T, TH+2R, W+2R, C1)
    w_r = params['w_fuse'].reshape(G, 9 * C1, Cg).astype(jnp.bfloat16)
    b_r = params['b_fuse'].reshape(1, Cout).astype(jnp.float32)

    fuse = functools.partial(_fuse_kernel, tuple(int(r) for r in rates), TH, W1, R)
    out_flat = pl.pallas_call(
        fuse,
        out_shape=jax.ShapeDtypeStruct((B, H1 * W1, Cout), jnp.float32),
        grid=(B, T),
        in_specs=[
            pl.BlockSpec((1, 1, TH + 2 * R, W1 + 2 * R, C1),
                         lambda b, t: (b, t, 0, 0, 0)),
            pl.BlockSpec((G, 9 * C1, Cg), lambda b, t: (0, 0, 0)),
            pl.BlockSpec((1, Cout), lambda b, t: (0, 0)),
        ],
        out_specs=pl.BlockSpec((1, TH * W1, Cout), lambda b, t: (b, t, 0)),
        compiler_params=pltpu.CompilerParams(
            dimension_semantics=("parallel", "parallel"),
            vmem_limit_bytes=vmem_limit),
    )(slabs, w_r, b_r)

    out = out_flat.reshape(B, H1, W1, Cout)
    return jnp.transpose(out, (0, 3, 1, 2))                # back to NCHW


# ---------------- pure-JAX reference (validation only) ----------------

def atnconv_ref(params, x1_nchw, x2_nchw, mask_nchw, mask_all_nchw,
                softmax_scale=10.0, rates=(1, 2, 4, 8)):
    B, C1, H1, W1 = x1_nchw.shape
    _, C2, H2, W2 = x2_nchw.shape
    L = H2 * W2
    x1 = x1_nchw.astype(jnp.float32)
    x2 = x2_nchw.astype(jnp.float32)
    mm = _make_key_mask(mask_nchw, H1, W1, H2, W2)
    ma = _bilinear_ac(jnp.transpose(mask_all_nchw, (0, 2, 3, 1)).astype(jnp.float32),
                      H2, W2)
    ys = []
    for b in range(B):
        x2p = jnp.pad(x2[b], ((0, 0), (1, 1), (1, 1)))
        ri = jnp.arange(H2)[:, None, None, None] + jnp.arange(3)[None, None, :, None]
        ci = jnp.arange(W2)[None, :, None, None] + jnp.arange(3)[None, None, None, :]
        wi = jnp.transpose(x2p[:, ri, ci], (1, 2, 0, 3, 4)).reshape(L, C2, 3, 3)
        nrm = jnp.sqrt(jnp.sum(wi * wi, axis=(1, 2, 3), keepdims=True))
        wi_n = wi / jnp.maximum(nrm, 1e-4)
        yi = jax.lax.conv_general_dilated(
            x2[b][None], wi_n, (1, 1), [(1, 1), (1, 1)],
            dimension_numbers=('NCHW', 'OIHW', 'NCHW'))            # (1, L, H2, W2)
        mi = mm[b].reshape(1, L, 1, 1)
        mab = ma[b].reshape(1, 1, H2, W2)
        yi = yi * mi * mab
        yi = jax.nn.softmax(yi * softmax_scale, axis=1)
        yi = jnp.maximum(yi * mi * mab, 1e-8)
        x1p = jnp.pad(x1[b], ((0, 0), (1, 1), (1, 1)))
        ri4 = (2 * jnp.arange(H2))[:, None, None, None] + jnp.arange(4)[None, None, :, None]
        ci4 = (2 * jnp.arange(W2))[None, :, None, None] + jnp.arange(4)[None, None, None, :]
        raww = jnp.transpose(x1p[:, ri4, ci4], (1, 2, 0, 3, 4)).reshape(L, C1, 4, 4)
        wt = jnp.transpose(jnp.flip(raww, axis=(2, 3)), (1, 0, 2, 3))
        yb = jax.lax.conv_general_dilated(
            yi, wt, (1, 1), [(2, 2), (2, 2)], lhs_dilation=(2, 2),
            dimension_numbers=('NCHW', 'OIHW', 'NCHW'))            # convT equiv.
        ys.append(yb / 4.0)
    y = jnp.concatenate(ys, axis=0)                                # (B, C1, H1, W1)
    outs = []
    for g in range(params['w_fuse'].shape[0]):
        r = int(rates[g])
        wg = jnp.transpose(params['w_fuse'][g], (3, 2, 0, 1))
        og = jax.lax.conv_general_dilated(
            y, wg, (1, 1), [(r, r), (r, r)], rhs_dilation=(r, r),
            dimension_numbers=('NCHW', 'OIHW', 'NCHW'))
        outs.append(jax.nn.relu(og + params['b_fuse'][g].reshape(1, -1, 1, 1)))
    return jnp.concatenate(outs, axis=1)


if __name__ == "__main__":
    key = jax.random.PRNGKey(0)
    k1, k2, k3, kp = jax.random.split(key, 4)

    B, C1, H1, W1 = 2, 16, 16, 16        # x1: low-level features
    C2, H2, W2 = 16, 8, 8                # x2: high-level features (1/2 res)
    groups, out_ch = 4, 16

    x1 = jax.random.normal(k1, (B, C1, H1, W1), jnp.float32)
    x2 = jax.random.normal(k2, (B, C2, H2, W2), jnp.float32)
    # Binary hole mask (1 = hole) so some patches have exactly-zero mean, which
    # is what the module's m.eq(0.0) test keys on.
    mask = jnp.zeros((B, 1, H1, W1), jnp.float32).at[:, :, 5:12, 4:11].set(1.0)
    mask_all = jax.random.uniform(k3, (B, 1, H1, W1), jnp.float32)
    params = init_atnconv_params(kp, C1, out_ch, groups)

    out = jax.block_until_ready(
        jax.jit(atnconv_forward)(params, x1, x2, mask, mask_all))
    ref = jax.block_until_ready(atnconv_ref(params, x1, x2, mask, mask_all))

    assert out.shape == (B, out_ch, H1, W1), out.shape
    err = float(jnp.max(jnp.abs(out - ref)))
    assert err < 5e-2, f"max abs error too large: {err}"
    print("KERNEL_OK")
</pallas_src>

<mosaic_0001>
module attributes {stable_mosaic.version = 11 : i64} {
  func.func @_attn_kernel(%arg0: i32, %arg1: i32, %arg2: memref<1x64x144xbf16, #tpu.memory_space<vmem>>, %arg3: memref<1x1x64xf32, #tpu.memory_space<vmem>>, %arg4: memref<1x1x64xf32, #tpu.memory_space<vmem>>, %arg5: memref<1x64x1xf32, #tpu.memory_space<vmem>>, %arg6: memref<1x64x256xbf16, #tpu.memory_space<vmem>>, %arg7: memref<1x64x256xf32, #tpu.memory_space<vmem>>) attributes {dimension_semantics = [#tpu.dimension_semantics<parallel>, #tpu.dimension_semantics<parallel>], iteration_bounds = array<i64: 2, 1>, scalar_prefetch = 0 : i64, scratch_operands = 0 : i64, tpu.core_type = #tpu.core_type<tc>, window_params = [{transform_indices = @transform_0, window_bounds = array<i64: 1, 64, 144>}, {transform_indices = @transform_1, window_bounds = array<i64: 1, 1, 64>}, {transform_indices = @transform_2, window_bounds = array<i64: 1, 1, 64>}, {transform_indices = @transform_3, window_bounds = array<i64: 1, 64, 1>}, {transform_indices = @transform_4, window_bounds = array<i64: 1, 64, 256>}, {transform_indices = @transform_5, window_bounds = array<i64: 1, 64, 256>}]} {
    %c64_i32 = arith.constant 64 : i32
    %0 = arith.muli %arg1, %c64_i32 : i32
    %1 = tpu.assume_multiple %0, 64 : i32
    %c0 = arith.constant 0 : index
    %2 = arith.index_cast %1 : i32 to index
    %c0_0 = arith.constant 0 : index
    %3 = vector.load %arg2[%c0, %2, %c0_0] : memref<1x64x144xbf16, #tpu.memory_space<vmem>>, vector<1x64x144xbf16>
    %4 = vector.shape_cast %3 : vector<1x64x144xbf16> to vector<64x144xbf16>
    %c0_1 = arith.constant 0 : index
    %c0_2 = arith.constant 0 : index
    %c0_3 = arith.constant 0 : index
    %5 = vector.load %arg2[%c0_1, %c0_2, %c0_3] : memref<1x64x144xbf16, #tpu.memory_space<vmem>>, vector<1x64x144xbf16>
    %6 = vector.shape_cast %5 : vector<1x64x144xbf16> to vector<64x144xbf16>
    %cst = arith.constant dense<0.000000e+00> : vector<64x64xf32>
    %7 = tpu.matmul %4, %6, %cst {dimension_numbers = #tpu.dot_dimension_numbers<[1], [1], [0], [0], [0, 0, 1, 0], [], []>} : vector<64x144xbf16>, vector<64x144xbf16>, vector<64x64xf32> -> vector<64x64xf32>
    %c0_4 = arith.constant 0 : index
    %c0_5 = arith.constant 0 : index
    %c0_6 = arith.constant 0 : index
    %8 = vector.load %arg3[%c0_4, %c0_5, %c0_6] : memref<1x1x64xf32, #tpu.memory_space<vmem>>, vector<1x1x64xf32>
    %9 = vector.shape_cast %8 : vector<1x1x64xf32> to vector<1x64xf32>
    %10 = vector.broadcast %9 : vector<1x64xf32> to vector<64x64xf32>
    %11 = arith.mulf %7, %10 : vector<64x64xf32>
    %c0_7 = arith.constant 0 : index
    %c0_8 = arith.constant 0 : index
    %c0_9 = arith.constant 0 : index
    %12 = vector.load %arg5[%c0_7, %c0_8, %c0_9] : memref<1x64x1xf32, #tpu.memory_space<vmem>>, vector<1x64x1xf32>
    %13 = vector.shape_cast %12 : vector<1x64x1xf32> to vector<64x1xf32>
    %14 = vector.broadcast %13 : vector<64x1xf32> to vector<64x64xf32>
    %15 = arith.mulf %11, %14 : vector<64x64xf32>
    %cst_10 = arith.constant dense<0xFF800000> : vector<64xf32>
    %16 = vector.multi_reduction <maximumf>, %15, %cst_10 [1] : vector<64x64xf32> to vector<64xf32>
    %17 = vector.shape_cast %16 : vector<64xf32> to vector<64x1xf32>
    %18 = vector.broadcast %17 : vector<64x1xf32> to vector<64x64xf32>
    %19 = arith.subf %15, %18 : vector<64x64xf32>
    %20 = math.exp %19 : vector<64x64xf32>
    %cst_11 = arith.constant dense<0.000000e+00> : vector<64xf32>
    %21 = vector.multi_reduction <add>, %20, %cst_11 [1] : vector<64x64xf32> to vector<64xf32>
    %22 = vector.shape_cast %21 : vector<64xf32> to vector<64x1xf32>
    %23 = tpu.reciprocal %22 {approx = true} : vector<64x1xf32> -> vector<64x1xf32>
    %24 = vector.broadcast %23 : vector<64x1xf32> to vector<64x64xf32>
    %25 = arith.mulf %20, %24 : vector<64x64xf32>
    %c0_12 = arith.constant 0 : index
    %c0_13 = arith.constant 0 : index
    %c0_14 = arith.constant 0 : index
    %26 = vector.load %arg4[%c0_12, %c0_13, %c0_14] : memref<1x1x64xf32, #tpu.memory_space<vmem>>, vector<1x1x64xf32>
    %27 = vector.shape_cast %26 : vector<1x1x64xf32> to vector<1x64xf32>
    %28 = vector.broadcast %27 : vector<1x64xf32> to vector<64x64xf32>
    %29 = arith.mulf %25, %28 : vector<64x64xf32>
    %c0_15 = arith.constant 0 : index
    %c0_16 = arith.constant 0 : index
    %c0_17 = arith.constant 0 : index
    %30 = vector.load %arg5[%c0_15, %c0_16, %c0_17] : memref<1x64x1xf32, #tpu.memory_space<vmem>>, vector<1x64x1xf32>
    %31 = vector.shape_cast %30 : vector<1x64x1xf32> to vector<64x1xf32>
    %32 = vector.broadcast %31 : vector<64x1xf32> to vector<64x64xf32>
    %33 = arith.mulf %29, %32 : vector<64x64xf32>
    %cst_18 = arith.constant 9.99999993E-9 : f32
    %34 = vector.broadcast %cst_18 : f32 to vector<64x64xf32>
    %35 = arith.maximumf %33, %34 : vector<64x64xf32>
    %36 = arith.truncf %35 : vector<64x64xf32> to vector<64x64xbf16>
    %c0_19 = arith.constant 0 : index
    %c0_20 = arith.constant 0 : index
    %c0_21 = arith.constant 0 : index
    %37 = vector.load %arg6[%c0_19, %c0_20, %c0_21] : memref<1x64x256xbf16, #tpu.memory_space<vmem>>, vector<1x64x256xbf16>
    %38 = vector.shape_cast %37 : vector<1x64x256xbf16> to vector<64x256xbf16>
    %cst_22 = arith.constant dense<0.000000e+00> : vector<64x256xf32>
    %39 = tpu.matmul %36, %38, %cst_22 {dimension_numbers = #tpu.dot_dimension_numbers<[1], [0], [0], [1], [0, 0, 1, 1], [], []>} : vector<64x64xbf16>, vector<64x256xbf16>, vector<64x256xf32> -> vector<64x256xf32>
    %cst_23 = arith.constant 2.500000e-01 : f32
    %40 = vector.broadcast %cst_23 : f32 to vector<64x256xf32>
    %41 = arith.mulf %39, %40 : vector<64x256xf32>
    %c0_24 = arith.constant 0 : index
    %c0_25 = arith.constant 0 : index
    %c0_26 = arith.constant 0 : index
    %42 = vector.load %arg7[%c0_24, %c0_25, %c0_26] : memref<1x64x256xf32, #tpu.memory_space<vmem>>, vector<1x64x256xf32>
    %43 = vector.shape_cast %42 : vector<1x64x256xf32> to vector<64x256xf32>
    %44 = vector.shape_cast %41 : vector<64x256xf32> to vector<1x64x256xf32>
    tpu.vector_store %arg7[%c0_24, %c0_25, %c0_26], %44 {strides = array<i32>} : memref<1x64x256xf32, #tpu.memory_space<vmem>>, vector<1x64x256xf32>,
    return
  }
  func.func @transform_0(%arg0: i32, %arg1: i32) -> (i32, i32, i32) {
    %c0_i32 = arith.constant 0 : i32
    %c0_i32_0 = arith.constant 0 : i32
    %c0_i32_1 = arith.constant 0 : i32
    return %arg0, %c0_i32, %c0_i32_0 : i32, i32, i32
  }
  func.func @transform_1(%arg0: i32, %arg1: i32) -> (i32, i32, i32) {
    %c0_i32 = arith.constant 0 : i32
    %c0_i32_0 = arith.constant 0 : i32
    %c0_i32_1 = arith.constant 0 : i32
    return %arg0, %c0_i32, %c0_i32_0 : i32, i32, i32
  }
  func.func @transform_2(%arg0: i32, %arg1: i32) -> (i32, i32, i32) {
    %c0_i32 = arith.constant 0 : i32
    %c0_i32_0 = arith.constant 0 : i32
    %c0_i32_1 = arith.constant 0 : i32
    return %arg0, %c0_i32, %c0_i32_0 : i32, i32, i32
  }
  func.func @transform_3(%arg0: i32, %arg1: i32) -> (i32, i32, i32) {
    %c0_i32 = arith.constant 0 : i32
    %c0_i32_0 = arith.constant 0 : i32
    return %arg0, %arg1, %c0_i32 : i32, i32, i32
  }
  func.func @transform_4(%arg0: i32, %arg1: i32) -> (i32, i32, i32) {
    %c0_i32 = arith.constant 0 : i32
    %c0_i32_0 = arith.constant 0 : i32
    %c0_i32_1 = arith.constant 0 : i32
    return %arg0, %c0_i32, %c0_i32_0 : i32, i32, i32
  }
  func.func @transform_5(%arg0: i32, %arg1: i32) -> (i32, i32, i32) {
    %c0_i32 = arith.constant 0 : i32
    %c0_i32_0 = arith.constant 0 : i32
    return %arg0, %arg1, %c0_i32 : i32, i32, i32
  }
}

module attributes {stable_mosaic.version = 11 : i64} {
  func.func @_fuse_kernel(%arg0: i32, %arg1: i32, %arg2: memref<1x1x24x32x16xbf16, #tpu.memory_space<vmem>>, %arg3: memref<4x144x4xbf16, #tpu.memory_space<vmem>>, %arg4: memref<1x16xf32, #tpu.memory_space<vmem>>, %arg5: memref<1x128x16xf32, #tpu.memory_space<vmem>>) attributes {dimension_semantics = [#tpu.dimension_semantics<parallel>, #tpu.dimension_semantics<parallel>], iteration_bounds = array<i64: 2, 2>, scalar_prefetch = 0 : i64, scratch_operands = 0 : i64, tpu.core_type = #tpu.core_type<tc>, window_params = [{transform_indices = @transform_0, window_bounds = array<i64: 1, 1, 24, 32, 16>}, {pipeline_mode = #tpu.pipeline_mode<synchronous>, transform_indices = @transform_1, window_bounds = array<i64: 4, 144, 4>}, {pipeline_mode = #tpu.pipeline_mode<synchronous>, transform_indices = @transform_2, window_bounds = array<i64: 1, 16>}, {transform_indices = @transform_3, window_bounds = array<i64: 1, 128, 16>}]} {
    %c0 = arith.constant 0 : index
    %c0_0 = arith.constant 0 : index
    %c7 = arith.constant 7 : index
    %c7_1 = arith.constant 7 : index
    %c0_2 = arith.constant 0 : index
    %0 = vector.load %arg2[%c0, %c0_0, %c7, %c7_1, %c0_2] : memref<1x1x24x32x16xbf16, #tpu.memory_space<vmem>>, vector<1x1x8x16x16xbf16>
    %1 = vector.shape_cast %0 : vector<1x1x8x16x16xbf16> to vector<8x16x16xbf16>
    %2 = vector.shape_cast %1 : vector<8x16x16xbf16> to vector<128x16xbf16>
    %c0_3 = arith.constant 0 : index
    %c0_4 = arith.constant 0 : index
    %c7_5 = arith.constant 7 : index
    %c8 = arith.constant 8 : index
    %c0_6 = arith.constant 0 : index
    %3 = vector.load %arg2[%c0_3, %c0_4, %c7_5, %c8, %c0_6] : memref<1x1x24x32x16xbf16, #tpu.memory_space<vmem>>, vector<1x1x8x16x16xbf16>
    %4 = vector.shape_cast %3 : vector<1x1x8x16x16xbf16> to vector<8x16x16xbf16>
    %5 = vector.shape_cast %4 : vector<8x16x16xbf16> to vector<128x16xbf16>
    %c0_7 = arith.constant 0 : index
    %c0_8 = arith.constant 0 : index
    %c7_9 = arith.constant 7 : index
    %c9 = arith.constant 9 : index
    %c0_10 = arith.constant 0 : index
    %6 = vector.load %arg2[%c0_7, %c0_8, %c7_9, %c9, %c0_10] : memref<1x1x24x32x16xbf16, #tpu.memory_space<vmem>>, vector<1x1x8x16x16xbf16>
    %7 = vector.shape_cast %6 : vector<1x1x8x16x16xbf16> to vector<8x16x16xbf16>
    %8 = vector.shape_cast %7 : vector<8x16x16xbf16> to vector<128x16xbf16>
    %c0_11 = arith.constant 0 : index
    %c0_12 = arith.constant 0 : index
    %c8_13 = arith.constant 8 : index
    %c7_14 = arith.constant 7 : index
    %c0_15 = arith.constant 0 : index
    %9 = vector.load %arg2[%c0_11, %c0_12, %c8_13, %c7_14, %c0_15] : memref<1x1x24x32x16xbf16, #tpu.memory_space<vmem>>, vector<1x1x8x16x16xbf16>
    %10 = vector.shape_cast %9 : vector<1x1x8x16x16xbf16> to vector<8x16x16xbf16>
    %11 = vector.shape_cast %10 : vector<8x16x16xbf16> to vector<128x16xbf16>
    %c0_16 = arith.constant 0 : index
    %c0_17 = arith.constant 0 : index
    %c8_18 = arith.constant 8 : index
    %c8_19 = arith.constant 8 : index
    %c0_20 = arith.constant 0 : index
    %12 = vector.load %arg2[%c0_16, %c0_17, %c8_18, %c8_19, %c0_20] : memref<1x1x24x32x16xbf16, #tpu.memory_space<vmem>>, vector<1x1x8x16x16xbf16>
    %13 = vector.shape_cast %12 : vector<1x1x8x16x16xbf16> to vector<8x16x16xbf16>
    %14 = vector.shape_cast %13 : vector<8x16x16xbf16> to vector<128x16xbf16>
    %c0_21 = arith.constant 0 : index
    %c0_22 = arith.constant 0 : index
    %c8_23 = arith.constant 8 : index
    %c9_24 = arith.constant 9 : index
    %c0_25 = arith.constant 0 : index
    %15 = vector.load %arg2[%c0_21, %c0_22, %c8_23, %c9_24, %c0_25] : memref<1x1x24x32x16xbf16, #tpu.memory_space<vmem>>, vector<1x1x8x16x16xbf16>
    %16 = vector.shape_cast %15 : vector<1x1x8x16x16xbf16> to vector<8x16x16xbf16>
    %17 = vector.shape_cast %16 : vector<8x16x16xbf16> to vector<128x16xbf16>
    %c0_26 = arith.constant 0 : index
    %c0_27 = arith.constant 0 : index
    %c9_28 = arith.constant 9 : index
    %c7_29 = arith.constant 7 : index
    %c0_30 = arith.constant 0 : index
    %18 = vector.load %arg2[%c0_26, %c0_27, %c9_28, %c7_29, %c0_30] : memref<1x1x24x32x16xbf16, #tpu.memory_space<vmem>>, vector<1x1x8x16x16xbf16>
    %19 = vector.shape_cast %18 : vector<1x1x8x16x16xbf16> to vector<8x16x16xbf16>
    %20 = vector.shape_cast %19 : vector<8x16x16xbf16> to vector<128x16xbf16>
    %c0_31 = arith.constant 0 : index
    %c0_32 = arith.constant 0 : index
    %c9_33 = arith.constant 9 : index
    %c8_34 = arith.constant 8 : index
    %c0_35 = arith.constant 0 : index
    %21 = vector.load %arg2[%c0_31, %c0_32, %c9_33, %c8_34, %c0_35] : memref<1x1x24x32x16xbf16, #tpu.memory_space<vmem>>, vector<1x1x8x16x16xbf16>
    %22 = vector.shape_cast %21 : vector<1x1x8x16x16xbf16> to vector<8x16x16xbf16>
    %23 = vector.shape_cast %22 : vector<8x16x16xbf16> to vector<128x16xbf16>
    %c0_36 = arith.constant 0 : index
    %c0_37 = arith.constant 0 : index
    %c9_38 = arith.constant 9 : index
    %c9_39 = arith.constant 9 : index
    %c0_40 = arith.constant 0 : index
    %24 = vector.load %arg2[%c0_36, %c0_37, %c9_38, %c9_39, %c0_40] : memref<1x1x24x32x16xbf16, #tpu.memory_space<vmem>>, vector<1x1x8x16x16xbf16>
    %25 = vector.shape_cast %24 : vector<1x1x8x16x16xbf16> to vector<8x16x16xbf16>
    %26 = vector.shape_cast %25 : vector<8x16x16xbf16> to vector<128x16xbf16>
    %27 = tpu.concatenate %2, %5, %8, %11, %14, %17, %20, %23, %26 in 1 : vector<128x16xbf16>, vector<128x16xbf16>, vector<128x16xbf16>, vector<128x16xbf16>, vector<128x16xbf16>, vector<128x16xbf16>, vector<128x16xbf16>, vector<128x16xbf16>, vector<128x16xbf16> -> vector<128x144xbf16>
    %c0_41 = arith.constant 0 : index
    %c0_42 = arith.constant 0 : index
    %c0_43 = arith.constant 0 : index
    %28 = vector.load %arg3[%c0_41, %c0_42, %c0_43] : memref<4x144x4xbf16, #tpu.memory_space<vmem>>, vector<1x144x4xbf16>
    %29 = vector.shape_cast %28 : vector<1x144x4xbf16> to vector<144x4xbf16>
    %cst = arith.constant dense<0.000000e+00> : vector<128x4xf32>
    %30 = tpu.matmul %27, %29, %cst {dimension_numbers = #tpu.dot_dimension_numbers<[1], [0], [0], [1], [0, 0, 1, 1], [], []>} : vector<128x144xbf16>, vector<144x4xbf16>, vector<128x4xf32> -> vector<128x4xf32>
    %c0_44 = arith.constant 0 : index
    %c0_45 = arith.constant 0 : index
    %c6 = arith.constant 6 : index
    %c6_46 = arith.constant 6 : index
    %c0_47 = arith.constant 0 : index
    %31 = vector.load %arg2[%c0_44, %c0_45, %c6, %c6_46, %c0_47] : memref<1x1x24x32x16xbf16, #tpu.memory_space<vmem>>, vector<1x1x8x16x16xbf16>
    %32 = vector.shape_cast %31 : vector<1x1x8x16x16xbf16> to vector<8x16x16xbf16>
    %33 = vector.shape_cast %32 : vector<8x16x16xbf16> to vector<128x16xbf16>
    %c0_48 = arith.constant 0 : index
    %c0_49 = arith.constant 0 : index
    %c6_50 = arith.constant 6 : index
    %c8_51 = arith.constant 8 : index
    %c0_52 = arith.constant 0 : index
    %34 = vector.load %arg2[%c0_48, %c0_49, %c6_50, %c8_51, %c0_52] : memref<1x1x24x32x16xbf16, #tpu.memory_space<vmem>>, vector<1x1x8x16x16xbf16>
    %35 = vector.shape_cast %34 : vector<1x1x8x16x16xbf16> to vector<8x16x16xbf16>
    %36 = vector.shape_cast %35 : vector<8x16x16xbf16> to vector<128x16xbf16>
    %c0_53 = arith.constant 0 : index
    %c0_54 = arith.constant 0 : index
    %c6_55 = arith.constant 6 : index
    %c10 = arith.constant 10 : index
    %c0_56 = arith.constant 0 : index
    %37 = vector.load %arg2[%c0_53, %c0_54, %c6_55, %c10, %c0_56] : memref<1x1x24x32x16xbf16, #tpu.memory_space<vmem>>, vector<1x1x8x16x16xbf16>
    %38 = vector.shape_cast %37 : vector<1x1x8x16x16xbf16> to vector<8x16x16xbf16>
    %39 = vector.shape_cast %38 : vector<8x16x16xbf16> to vector<128x16xbf16>
    %c0_57 = arith.constant 0 : index
    %c0_58 = arith.constant 0 : index
    %c8_59 = arith.constant 8 : index
    %c6_60 = arith.constant 6 : index
    %c0_61 = arith.constant 0 : index
    %40 = vector.load %arg2[%c0_57, %c0_58, %c8_59, %c6_60, %c0_61] : memref<1x1x24x32x16xbf16, #tpu.memory_space<vmem>>, vector<1x1x8x16x16xbf16>
    %41 = vector.shape_cast %40 : vector<1x1x8x16x16xbf16> to vector<8x16x16xbf16>
    %42 = vector.shape_cast %41 : vector<8x16x16xbf16> to vector<128x16xbf16>
    %c0_62 = arith.constant 0 : index
    %c0_63 = arith.constant 0 : index
    %c8_64 = arith.constant 8 : index
    %c8_65 = arith.constant 8 : index
    %c0_66 = arith.constant 0 : index
    %43 = vector.load %arg2[%c0_62, %c0_63, %c8_64, %c8_65, %c0_66] : memref<1x1x24x32x16xbf16, #tpu.memory_space<vmem>>, vector<1x1x8x16x16xbf16>
    %44 = vector.shape_cast %43 : vector<1x1x8x16x16xbf16> to vector<8x16x16xbf16>
    %45 = vector.shape_cast %44 : vector<8x16x16xbf16> to vector<128x16xbf16>
    %c0_67 = arith.constant 0 : index
    %c0_68 = arith.constant 0 : index
    %c8_69 = arith.constant 8 : index
    %c10_70 = arith.constant 10 : index
    %c0_71 = arith.constant 0 : index
    %46 = vector.load %arg2[%c0_67, %c0_68, %c8_69, %c10_70, %c0_71] : memref<1x1x24x32x16xbf16, #tpu.memory_space<vmem>>, vector<1x1x8x16x16xbf16>
    %47 = vector.shape_cast %46 : vector<1x1x8x16x16xbf16> to vector<8x16x16xbf16>
    %48 = vector.shape_cast %47 : vector<8x16x16xbf16> to vector<128x16xbf16>
    %c0_72 = arith.constant 0 : index
    %c0_73 = arith.constant 0 : index
    %c10_74 = arith.constant 10 : index
    %c6_75 = arith.constant 6 : index
    %c0_76 = arith.constant 0 : index
    %49 = vector.load %arg2[%c0_72, %c0_73, %c10_74, %c6_75, %c0_76] : memref<1x1x24x32x16xbf16, #tpu.memory_space<vmem>>, vector<1x1x8x16x16xbf16>
    %50 = vector.shape_cast %49 : vector<1x1x8x16x16xbf16> to vector<8x16x16xbf16>
    %51 = vector.shape_cast %50 : vector<8x16x16xbf16> to vector<128x16xbf16>
    %c0_77 = arith.constant 0 : index
    %c0_78 = arith.constant 0 : index
    %c10_79 = arith.constant 10 : index
    %c8_80 = arith.constant 8 : index
    %c0_81 = arith.constant 0 : index
    %52 = vector.load %arg2[%c0_77, %c0_78, %c10_79, %c8_80, %c0_81] : memref<1x1x24x32x16xbf16, #tpu.memory_space<vmem>>, vector<1x1x8x16x16xbf16>
    %53 = vector.shape_cast %52 : vector<1x1x8x16x16xbf16> to vector<8x16x16xbf16>
    %54 = vector.shape_cast %53 : vector<8x16x16xbf16> to vector<128x16xbf16>
    %c0_82 = arith.constant 0 : index
    %c0_83 = arith.constant 0 : index
    %c10_84 = arith.constant 10 : index
    %c10_85 = arith.constant 10 : index
    %c0_86 = arith.constant 0 : index
    %55 = vector.load %arg2[%c0_82, %c0_83, %c10_84, %c10_85, %c0_86] : memref<1x1x24x32x16xbf16, #tpu.memory_space<vmem>>, vector<1x1x8x16x16xbf16>
    %56 = vector.shape_cast %55 : vector<1x1x8x16x16xbf16> to vector<8x16x16xbf16>
    %57 = vector.shape_cast %56 : vector<8x16x16xbf16> to vector<128x16xbf16>
    %58 = tpu.concatenate %33, %36, %39, %42, %45, %48, %51, %54, %57 in 1 : vector<128x16xbf16>, vector<128x16xbf16>, vector<128x16xbf16>, vector<128x16xbf16>, vector<128x16xbf16>, vector<128x16xbf16>, vector<128x16xbf16>, vector<128x16xbf16>, vector<128x16xbf16> -> vector<128x144xbf16>
    %c1 = arith.constant 1 : index
    %c0_87 = arith.constant 0 : index
    %c0_88 = arith.constant 0 : index
    %59 = vector.load %arg3[%c1, %c0_87, %c0_88] : memref<4x144x4xbf16, #tpu.memory_space<vmem>>, vector<1x144x4xbf16>
    %60 = vector.shape_cast %59 : vector<1x144x4xbf16> to vector<144x4xbf16>
    %cst_89 = arith.constant dense<0.000000e+00> : vector<128x4xf32>
    %61 = tpu.matmul %58, %60, %cst_89 {dimension_numbers = #tpu.dot_dimension_numbers<[1], [0], [0], [1], [0, 0, 1, 1], [], []>} : vector<128x144xbf16>, vector<144x4xbf16>, vector<128x4xf32> -> vector<128x4xf32>
    %c0_90 = arith.constant 0 : index
    %c0_91 = arith.constant 0 : index
    %c4 = arith.constant 4 : index
    %c4_92 = arith.constant 4 : index
    %c0_93 = arith.constant 0 : index
    %62 = vector.load %arg2[%c0_90, %c0_91, %c4, %c4_92, %c0_93] : memref<1x1x24x32x16xbf16, #tpu.memory_space<vmem>>, vector<1x1x8x16x16xbf16>
    %63 = vector.shape_cast %62 : vector<1x1x8x16x16xbf16> to vector<8x16x16xbf16>
    %64 = vector.shape_cast %63 : vector<8x16x16xbf16> to vector<128x16xbf16>
    %c0_94 = arith.constant 0 : index
    %c0_95 = arith.constant 0 : index
    %c4_96 = arith.constant 4 : index
    %c8_97 = arith.constant 8 : index
    %c0_98 = arith.constant 0 : index
    %65 = vector.load %arg2[%c0_94, %c0_95, %c4_96, %c8_97, %c0_98] : memref<1x1x24x32x16xbf16, #tpu.memory_space<vmem>>, vector<1x1x8x16x16xbf16>
    %66 = vector.shape_cast %65 : vector<1x1x8x16x16xbf16> to vector<8x16x16xbf16>
    %67 = vector.shape_cast %66 : vector<8x16x16xbf16> to vector<128x16xbf16>
    %c0_99 = arith.constant 0 : index
    %c0_100 = arith.constant 0 : index
    %c4_101 = arith.constant 4 : index
    %c12 = arith.constant 12 : index
    %c0_102 = arith.constant 0 : index
    %68 = vector.load %arg2[%c0_99, %c0_100, %c4_101, %c12, %c0_102] : memref<1x1x24x32x16xbf16, #tpu.memory_space<vmem>>, vector<1x1x8x16x16xbf16>
    %69 = vector.shape_cast %68 : vector<1x1x8x16x16xbf16> to vector<8x16x16xbf16>
    %70 = vector.shape_cast %69 : vector<8x16x16xbf16> to vector<128x16xbf16>
    %c0_103 = arith.constant 0 : index
    %c0_104 = arith.constant 0 : index
    %c8_105 = arith.constant 8 : index
    %c4_106 = arith.constant 4 : index
    %c0_107 = arith.constant 0 : index
    %71 = vector.load %arg2[%c0_103, %c0_104, %c8_105, %c4_106, %c0_107] : memref<1x1x24x32x16xbf16, #tpu.memory_space<vmem>>, vector<1x1x8x16x16xbf16>
    %72 = vector.shape_cast %71 : vector<1x1x8x16x16xbf16> to vector<8x16x16xbf16>
    %73 = vector.shape_cast %72 : vector<8x16x16xbf16> to vector<128x16xbf16>
    %c0_108 = arith.constant 0 : index
    %c0_109 = arith.constant 0 : index
    %c8_110 = arith.constant 8 : index
    %c8_111 = arith.constant 8 : index
    %c0_112 = arith.constant 0 : index
    %74 = vector.load %arg2[%c0_108, %c0_109, %c8_110, %c8_111, %c0_112] : memref<1x1x24x32x16xbf16, #tpu.memory_space<vmem>>, vector<1x1x8x16x16xbf16>
    %75 = vector.shape_cast %74 : vector<1x1x8x16x16xbf16> to vector<8x16x16xbf16>
    %76 = vector.shape_cast %75 : vector<8x16x16xbf16> to vector<128x16xbf16>
    %c0_113 = arith.constant 0 : index
    %c0_114 = arith.constant 0 : index
    %c8_115 = arith.constant 8 : index
    %c12_116 = arith.constant 12 : index
    %c0_117 = arith.constant 0 : index
    %77 = vector.load %arg2[%c0_113, %c0_114, %c8_115, %c12_116, %c0_117] : memref<1x1x24x32x16xbf16, #tpu.memory_space<vmem>>, vector<1x1x8x16x16xbf16>
    %78 = vector.shape_cast %77 : vector<1x1x8x16x16xbf16> to vector<8x16x16xbf16>
    %79 = vector.shape_cast %78 : vector<8x16x16xbf16> to vector<128x16xbf16>
    %c0_118 = arith.constant 0 : index
    %c0_119 = arith.constant 0 : index
    %c12_120 = arith.constant 12 : index
    %c4_121 = arith.constant 4 : index
    %c0_122 = arith.constant 0 : index
    %80 = vector.load %arg2[%c0_118, %c0_119, %c12_120, %c4_121, %c0_122] : memref<1x1x24x32x16xbf16, #tpu.memory_space<vmem>>, vector<1x1x8x16x16xbf16>
    %81 = vector.shape_cast %80 : vector<1x1x8x16x16xbf16> to vector<8x16x16xbf16>
    %82 = vector.shape_cast %81 : vector<8x16x16xbf16> to vector<128x16xbf16>
    %c0_123 = arith.constant 0 : index
    %c0_124 = arith.constant 0 : index
    %c12_125 = arith.constant 12 : index
    %c8_126 = arith.constant 8 : index
    %c0_127 = arith.constant 0 : index
    %83 = vector.load %arg2[%c0_123, %c0_124, %c12_125, %c8_126, %c0_127] : memref<1x1x24x32x16xbf16, #tpu.memory_space<vmem>>, vector<1x1x8x16x16xbf16>
    %84 = vector.shape_cast %83 : vector<1x1x8x16x16xbf16> to vector<8x16x16xbf16>
    %85 = vector.shape_cast %84 : vector<8x16x16xbf16> to vector<128x16xbf16>
    %c0_128 = arith.constant 0 : index
    %c0_129 = arith.constant 0 : index
    %c12_130 = arith.constant 12 : index
    %c12_131 = arith.constant 12 : index
    %c0_132 = arith.constant 0 : index
    %86 = vector.load %arg2[%c0_128, %c0_129, %c12_130, %c12_131, %c0_132] : memref<1x1x24x32x16xbf16, #tpu.memory_space<vmem>>, vector<1x1x8x16x16xbf16>
    %87 = vector.shape_cast %86 : vector<1x1x8x16x16xbf16> to vector<8x16x16xbf16>
    %88 = vector.shape_cast %87 : vector<8x16x16xbf16> to vector<128x16xbf16>
    %89 = tpu.concatenate %64, %67, %70, %73, %76, %79, %82, %85, %88 in 1 : vector<128x16xbf16>, vector<128x16xbf16>, vector<128x16xbf16>, vector<128x16xbf16>, vector<128x16xbf16>, vector<128x16xbf16>, vector<128x16xbf16>, vector<128x16xbf16>, vector<128x16xbf16> -> vector<128x144xbf16>
    %c2 = arith.constant 2 : index
    %c0_133 = arith.constant 0 : index
    %c0_134 = arith.constant 0 : index
    %90 = vector.load %arg3[%c2, %c0_133, %c0_134] : memref<4x144x4xbf16, #tpu.memory_space<vmem>>, vector<1x144x4xbf16>
    %91 = vector.shape_cast %90 : vector<1x144x4xbf16> to vector<144x4xbf16>
    %cst_135 = arith.constant dense<0.000000e+00> : vector<128x4xf32>
    %92 = tpu.matmul %89, %91, %cst_135 {dimension_numbers = #tpu.dot_dimension_numbers<[1], [0], [0], [1], [0, 0, 1, 1], [], []>} : vector<128x144xbf16>, vector<144x4xbf16>, vector<128x4xf32> -> vector<128x4xf32>
    %c0_136 = arith.constant 0 : index
    %c0_137 = arith.constant 0 : index
    %c0_138 = arith.constant 0 : index
    %c0_139 = arith.constant 0 : index
    %c0_140 = arith.constant 0 : index
    %93 = vector.load %arg2[%c0_136, %c0_137, %c0_138, %c0_139, %c0_140] : memref<1x1x24x32x16xbf16, #tpu.memory_space<vmem>>, vector<1x1x8x16x16xbf16>
    %94 = vector.shape_cast %93 : vector<1x1x8x16x16xbf16> to vector<8x16x16xbf16>
    %95 = vector.shape_cast %94 : vector<8x16x16xbf16> to vector<128x16xbf16>
    %c0_141 = arith.constant 0 : index
    %c0_142 = arith.constant 0 : index
    %c0_143 = arith.constant 0 : index
    %c8_144 = arith.constant 8 : index
    %c0_145 = arith.constant 0 : index
    %96 = vector.load %arg2[%c0_141, %c0_142, %c0_143, %c8_144, %c0_145] : memref<1x1x24x32x16xbf16, #tpu.memory_space<vmem>>, vector<1x1x8x16x16xbf16>
    %97 = vector.shape_cast %96 : vector<1x1x8x16x16xbf16> to vector<8x16x16xbf16>
    %98 = vector.shape_cast %97 : vector<8x16x16xbf16> to vector<128x16xbf16>
    %c0_146 = arith.constant 0 : index
    %c0_147 = arith.constant 0 : index
    %c0_148 = arith.constant 0 : index
    %c16 = arith.constant 16 : index
    %c0_149 = arith.constant 0 : index
    %99 = vector.load %arg2[%c0_146, %c0_147, %c0_148, %c16, %c0_149] : memref<1x1x24x32x16xbf16, #tpu.memory_space<vmem>>, vector<1x1x8x16x16xbf16>
    %100 = vector.shape_cast %99 : vector<1x1x8x16x16xbf16> to vector<8x16x16xbf16>
    %101 = vector.shape_cast %100 : vector<8x16x16xbf16> to vector<128x16xbf16>
    %c0_150 = arith.constant 0 : index
    %c0_151 = arith.constant 0 : index
    %c8_152 = arith.constant 8 : index
    %c0_153 = arith.constant 0 : index
    %c0_154 = arith.constant 0 : index
    %102 = vector.load %arg2[%c0_150, %c0_151, %c8_152, %c0_153, %c0_154] : memref<1x1x24x32x16xbf16, #tpu.memory_space<vmem>>, vector<1x1x8x16x16xbf16>
    %103 = vector.shape_cast %102 : vector<1x1x8x16x16xbf16> to vector<8x16x16xbf16>
    %104 = vector.shape_cast %103 : vector<8x16x16xbf16> to vector<128x16xbf16>
    %c0_155 = arith.constant 0 : index
    %c0_156 = arith.constant 0 : index
    %c8_157 = arith.constant 8 : index
    %c8_158 = arith.constant 8 : index
    %c0_159 = arith.constant 0 : index
    %105 = vector.load %arg2[%c0_155, %c0_156, %c8_157, %c8_158, %c0_159] : memref<1x1x24x32x16xbf16, #tpu.memory_space<vmem>>, vector<1x1x8x16x16xbf16>
    %106 = vector.shape_cast %105 : vector<1x1x8x16x16xbf16> to vector<8x16x16xbf16>
    %107 = vector.shape_cast %106 : vector<8x16x16xbf16> to vector<128x16xbf16>
    %c0_160 = arith.constant 0 : index
    %c0_161 = arith.constant 0 : index
    %c8_162 = arith.constant 8 : index
    %c16_163 = arith.constant 16 : index
    %c0_164 = arith.constant 0 : index
    %108 = vector.load %arg2[%c0_160, %c0_161, %c8_162, %c16_163, %c0_164] : memref<1x1x24x32x16xbf16, #tpu.memory_space<vmem>>, vector<1x1x8x16x16xbf16>
    %109 = vector.shape_cast %108 : vector<1x1x8x16x16xbf16> to vector<8x16x16xbf16>
    %110 = vector.shape_cast %109 : vector<8x16x16xbf16> to vector<128x16xbf16>
    %c0_165 = arith.constant 0 : index
    %c0_166 = arith.constant 0 : index
    %c16_167 = arith.constant 16 : index
    %c0_168 = arith.constant 0 : index
    %c0_169 = arith.constant 0 : index
    %111 = vector.load %arg2[%c0_165, %c0_166, %c16_167, %c0_168, %c0_169] : memref<1x1x24x32x16xbf16, #tpu.memory_space<vmem>>, vector<1x1x8x16x16xbf16>
    %112 = vector.shape_cast %111 : vector<1x1x8x16x16xbf16> to vector<8x16x16xbf16>
    %113 = vector.shape_cast %112 : vector<8x16x16xbf16> to vector<128x16xbf16>
    %c0_170 = arith.constant 0 : index
    %c0_171 = arith.constant 0 : index
    %c16_172 = arith.constant 16 : index
    %c8_173 = arith.constant 8 : index
    %c0_174 = arith.constant 0 : index
    %114 = vector.load %arg2[%c0_170, %c0_171, %c16_172, %c8_173, %c0_174] : memref<1x1x24x32x16xbf16, #tpu.memory_space<vmem>>, vector<1x1x8x16x16xbf16>
    %115 = vector.shape_cast %114 : vector<1x1x8x16x16xbf16> to vector<8x16x16xbf16>
    %116 = vector.shape_cast %115 : vector<8x16x16xbf16> to vector<128x16xbf16>
    %c0_175 = arith.constant 0 : index
    %c0_176 = arith.constant 0 : index
    %c16_177 = arith.constant 16 : index
    %c16_178 = arith.constant 16 : index
    %c0_179 = arith.constant 0 : index
    %117 = vector.load %arg2[%c0_175, %c0_176, %c16_177, %c16_178, %c0_179] : memref<1x1x24x32x16xbf16, #tpu.memory_space<vmem>>, vector<1x1x8x16x16xbf16>
    %118 = vector.shape_cast %117 : vector<1x1x8x16x16xbf16> to vector<8x16x16xbf16>
    %119 = vector.shape_cast %118 : vector<8x16x16xbf16> to vector<128x16xbf16>
    %120 = tpu.concatenate %95, %98, %101, %104, %107, %110, %113, %116, %119 in 1 : vector<128x16xbf16>, vector<128x16xbf16>, vector<128x16xbf16>, vector<128x16xbf16>, vector<128x16xbf16>, vector<128x16xbf16>, vector<128x16xbf16>, vector<128x16xbf16>, vector<128x16xbf16> -> vector<128x144xbf16>
    %c3 = arith.constant 3 : index
    %c0_180 = arith.constant 0 : index
    %c0_181 = arith.constant 0 : index
    %121 = vector.load %arg3[%c3, %c0_180, %c0_181] : memref<4x144x4xbf16, #tpu.memory_space<vmem>>, vector<1x144x4xbf16>
    %122 = vector.shape_cast %121 : vector<1x144x4xbf16> to vector<144x4xbf16>
    %cst_182 = arith.constant dense<0.000000e+00> : vector<128x4xf32>
    %123 = tpu.matmul %120, %122, %cst_182 {dimension_numbers = #tpu.dot_dimension_numbers<[1], [0], [0], [1], [0, 0, 1, 1], [], []>} : vector<128x144xbf16>, vector<144x4xbf16>, vector<128x4xf32> -> vector<128x4xf32>
    %124 = tpu.concatenate %30, %61, %92, %123 in 1 : vector<128x4xf32>, vector<128x4xf32>, vector<128x4xf32>, vector<128x4xf32> -> vector<128x16xf32>
    %c0_183 = arith.constant 0 : index
    %c0_184 = arith.constant 0 : index
    %125 = vector.load %arg4[%c0_183, %c0_184] : memref<1x16xf32, #tpu.memory_space<vmem>>, vector<1x16xf32>
    %126 = vector.broadcast %125 : vector<1x16xf32> to vector<128x16xf32>
    %127 = arith.addf %124, %126 : vector<128x16xf32>
    %cst_185 = arith.constant 0.000000e+00 : f32
    %128 = vector.broadcast %cst_185 : f32 to vector<128x16xf32>
    %129 = arith.maximumf %127, %128 : vector<128x16xf32>
    %c0_186 = arith.constant 0 : index
    %c0_187 = arith.constant 0 : index
    %c0_188 = arith.constant 0 : index
    %130 = vector.load %arg5[%c0_186, %c0_187, %c0_188] : memref<1x128x16xf32, #tpu.memory_space<vmem>>, vector<1x128x16xf32>
    %131 = vector.shape_cast %130 : vector<1x128x16xf32> to vector<128x16xf32>
    %132 = vector.shape_cast %129 : vector<128x16xf32> to vector<1x128x16xf32>
    tpu.vector_store %arg5[%c0_186, %c0_187, %c0_188], %132 {strides = array<i32>} : memref<1x128x16xf32, #tpu.memory_space<vmem>>, vector<1x128x16xf32>,
    return
  }
  func.func @transform_0(%arg0: i32, %arg1: i32) -> (i32, i32, i32, i32, i32) {
    %c0_i32 = arith.constant 0 : i32
    %c0_i32_0 = arith.constant 0 : i32
    %c0_i32_1 = arith.constant 0 : i32
    %c0_i32_2 = arith.constant 0 : i32
    return %arg0, %arg1, %c0_i32, %c0_i32_0, %c0_i32_1 : i32, i32, i32, i32, i32
  }
  func.func @transform_1(%arg0: i32, %arg1: i32) -> (i32, i32, i32) {
    %c0_i32 = arith.constant 0 : i32
    %c0_i32_0 = arith.constant 0 : i32
    %c0_i32_1 = arith.constant 0 : i32
    %c0_i32_2 = arith.constant 0 : i32
    return %c0_i32, %c0_i32_0, %c0_i32_1 : i32, i32, i32
  }
  func.func @transform_2(%arg0: i32, %arg1: i32) -> (i32, i32) {
    %c0_i32 = arith.constant 0 : i32
    %c0_i32_0 = arith.constant 0 : i32
    %c0_i32_1 = arith.constant 0 : i32
    return %c0_i32, %c0_i32_0 : i32, i32
  }
  func.func @transform_3(%arg0: i32, %arg1: i32) -> (i32, i32, i32) {
    %c0_i32 = arith.constant 0 : i32
    %c0_i32_0 = arith.constant 0 : i32
    return %arg0, %arg1, %c0_i32 : i32, i32, i32
  }
}

</mosaic_0001>

<llo_original>
// kernel: atnconv_forward.2
$region0: #{atnconv_forward.2}
  #allocation0 [shape = 'u32[]', space=smem, size = 0x4, offset = 0x4, fixed_abs, tag = 'smem constant byte address 0x4 - core index']
  #allocation1 [shape = 'u32[144,128]{1,0:T(1,128)}', space=vmem, size = 0x12000, scoped, tag = 'internal scratch']
  %s0 = inlined_call_operand.vmem [shape: bf16[2,64,144], index: 0, kind: input, shape index: {}]
  %s1 = inlined_call_operand.vmem [shape: f32[2,1,64], index: 1, kind: input, shape index: {}]
  %s2 = inlined_call_operand.vmem [shape: f32[2,1,64], index: 2, kind: input, shape index: {}]
  %s3 = inlined_call_operand.vmem [shape: f32[2,64,1], index: 3, kind: input, shape index: {}]
  %s4 = inlined_call_operand.vmem [shape: bf16[2,64,256], index: 4, kind: input, shape index: {}]
  %s5 = inlined_call_operand.vmem [shape: f32[2,64,256], index: 5, kind: output, shape index: {}]
  %s6 = sld [smem:[#allocation0]]
  $region53: #{atnconv_forward.2} parent=0
    _
  %s8 = ssub.s32 1, %s6
  %s9 = scalar_select 0, %s8, %s6
  loop: start=0, step=1, limit=4
  $region2: #{atnconv_forward.2} parent=0 // loop_pre_header
    _
  $region3: #{atnconv_forward.2} parent=0 // loop_header
    %s11 = sphi 0, %s15
    %p12 = scmp.ge.s32.totalorder %s11, 4
    %s18 = sphi 0, %s30
    %s19 = sphi 0, %s26
    %s20 = sphi 0, %s18
    %s21 = sphi 0, %s19
    %s22 = sphi 0, %s20
    %s23 = sphi 0, %s21
    %s33 = sphi 0, %s35
    %s36 = sphi 0, %s33
    %s37 = sphi 0, %s36
    %s53 = sphi 0, %s37
    %s59 = sphi 0, %s61
    %s62 = sphi 0, %s59
    %s63 = sphi 0, %s62
    %s79 = sphi 0, %s63
    %s85 = sphi 0, %s87
    %s88 = sphi 0, %s85
    %s89 = sphi 0, %s88
    %s105 = sphi 0, %s89
    %s113 = sphi 0, %s115
    %s116 = sphi 0, %s113
    %s117 = sphi 0, %s116
    %s133 = sphi 0, %s117
    %s139 = sphi 0, %s141
    %s142 = sphi 0, %s139
    %s143 = sphi 0, %s142
    %s159 = sphi 0, %s143
    %s167 = sphi 0, %s169
    %s170 = sphi 0, %s167
    %s171 = sphi 0, %s170
    %s187 = sphi 0, %s171
  $region4: #{atnconv_forward.2} parent=0 // loop_header_branch
    %14 = sbr.rel (%p12) target = $region8
  $region5: #{atnconv_forward.2} parent=0 // loop_body
    %s16 = ssub.s32 %s11, 1
    %s17 = ssub.s32 %s11, 2
    %s24 = sadd.s32 1, %s19
    %p25 = scmp.ge.s32.totalorder %s24, 1
    %s26 = scalar_select %p25, 0, %s24
    %s27 = sadd.s32 1, %s18
    %s28 = scalar_select %p25, %s27, %s18
    %p29 = scmp.ge.s32.totalorder %s28, 2
    %s30 = scalar_select %p29, 0, %s28
    %s31 = ssub.s32 %s18, %s30
    %p32 = scmp.eq.s32.totalorder %s31, 0
    %s34 = sadd.s32 %s33, 1
    %s35 = scalar_select %p32, %s33, %s34
    %p38 = pneg %p32
    %p39 = scmp.eq.s32.totalorder %s11, 1
    %p40 = por %p38, %p39
    %p41 = scmp.ne.s32.totalorder %s33, %s36
    %p42 = scmp.eq.s32.totalorder %s11, 0
    %p43 = por %p41, %p42
    %p44 = scmp.ne.s32.totalorder %s33, %s36
    %p45 = scmp.eq.s32.totalorder %s16, 1
    %p46 = por %p44, %p45
    %p47 = scmp.ne.s32.totalorder %s36, %s37
    %p48 = scmp.eq.s32.totalorder %s16, 0
    %p49 = por %p47, %p48
    %p50 = scmp.ne.s32.totalorder %s36, %s37
    %p51 = scmp.eq.s32.totalorder %s17, 1
    %p52 = por %p50, %p51
    %p54 = scmp.ne.s32.totalorder %s37, %s53
    %p55 = scmp.eq.s32.totalorder %s17, 0
    %p56 = por %p54, %p55
    %s57 = ssub.s32 %s18, %s30
    %p58 = scmp.eq.s32.totalorder %s57, 0
    %s60 = sadd.s32 %s59, 1
    %s61 = scalar_select %p58, %s59, %s60
    %p64 = pneg %p58
    %p65 = scmp.eq.s32.totalorder %s11, 1
    %p66 = por %p64, %p65
    %p67 = scmp.ne.s32.totalorder %s59, %s62
    %p68 = scmp.eq.s32.totalorder %s11, 0
    %p69 = por %p67, %p68
    %p70 = scmp.ne.s32.totalorder %s59, %s62
    %p71 = scmp.eq.s32.totalorder %s16, 1
    %p72 = por %p70, %p71
    %p73 = scmp.ne.s32.totalorder %s62, %s63
    %p74 = scmp.eq.s32.totalorder %s16, 0
    %p75 = por %p73, %p74
    %p76 = scmp.ne.s32.totalorder %s62, %s63
    %p77 = scmp.eq.s32.totalorder %s17, 1
    %p78 = por %p76, %p77
    %p80 = scmp.ne.s32.totalorder %s63, %s79
    %p81 = scmp.eq.s32.totalorder %s17, 0
    %p82 = por %p80, %p81
    %s83 = ssub.s32 %s18, %s30
    %p84 = scmp.eq.s32.totalorder %s83, 0
    %s86 = sadd.s32 %s85, 1
    %s87 = scalar_select %p84, %s85, %s86
    %p90 = pneg %p84
    %p91 = scmp.eq.s32.totalorder %s11, 1
    %p92 = por %p90, %p91
    %p93 = scmp.ne.s32.totalorder %s85, %s88
    %p94 = scmp.eq.s32.totalorder %s11, 0
    %p95 = por %p93, %p94
    %p96 = scmp.ne.s32.totalorder %s85, %s88
    %p97 = scmp.eq.s32.totalorder %s16, 1
    %p98 = por %p96, %p97
    %p99 = scmp.ne.s32.totalorder %s88, %s89
    %p100 = scmp.eq.s32.totalorder %s16, 0
    %p101 = por %p99, %p100
    %p102 = scmp.ne.s32.totalorder %s88, %s89
    %p103 = scmp.eq.s32.totalorder %s17, 1
    %p104 = por %p102, %p103
    %p106 = scmp.ne.s32.totalorder %s89, %s105
    %p107 = scmp.eq.s32.totalorder %s17, 0
    %p108 = por %p106, %p107
    %s109 = ssub.s32 %s18, %s30
    %s110 = ssub.s32 %s19, %s26
    %s111 = sor.u32 %s109, %s110
    %p112 = scmp.eq.s32.totalorder %s111, 0
    %s114 = sadd.s32 %s113, 1
    %s115 = scalar_select %p112, %s113, %s114
    %p118 = pneg %p112
    %p119 = scmp.eq.s32.totalorder %s11, 1
    %p120 = por %p118, %p119
    %p121 = scmp.ne.s32.totalorder %s113, %s116
    %p122 = scmp.eq.s32.totalorder %s11, 0
    %p123 = por %p121, %p122
    %p124 = scmp.ne.s32.totalorder %s113, %s116
    %p125 = scmp.eq.s32.totalorder %s16, 1
    %p126 = por %p124, %p125
    %p127 = scmp.ne.s32.totalorder %s116, %s117
    %p128 = scmp.eq.s32.totalorder %s16, 0
    %p129 = por %p127, %p128
    %p130 = scmp.ne.s32.totalorder %s116, %s117
    %p131 = scmp.eq.s32.totalorder %s17, 1
    %p132 = por %p130, %p131
    %p134 = scmp.ne.s32.totalorder %s117, %s133
    %p135 = scmp.eq.s32.totalorder %s17, 0
    %p136 = por %p134, %p135
    %s137 = ssub.s32 %s18, %s30
    %p138 = scmp.eq.s32.totalorder %s137, 0
    %s140 = sadd.s32 %s139, 1
    %s141 = scalar_select %p138, %s139, %s140
    %p144 = pneg %p138
    %p145 = scmp.eq.s32.totalorder %s11, 1
    %p146 = por %p144, %p145
    %p147 = scmp.ne.s32.totalorder %s139, %s142
    %p148 = scmp.eq.s32.totalorder %s11, 0
    %p149 = por %p147, %p148
    %p150 = scmp.ne.s32.totalorder %s139, %s142
    %p151 = scmp.eq.s32.totalorder %s16, 1
    %p152 = por %p150, %p151
    %p153 = scmp.ne.s32.totalorder %s142, %s143
    %p154 = scmp.eq.s32.totalorder %s16, 0
    %p155 = por %p153, %p154
    %p156 = scmp.ne.s32.totalorder %s142, %s143
    %p157 = scmp.eq.s32.totalorder %s17, 1
    %p158 = por %p156, %p157
    %p160 = scmp.ne.s32.totalorder %s143, %s159
    %p161 = scmp.eq.s32.totalorder %s17, 0
    %p162 = por %p160, %p161
    %s163 = ssub.s32 %s18, %s30
    %s164 = ssub.s32 %s19, %s26
    %s165 = sor.u32 %s163, %s164
    %p166 = scmp.eq.s32.totalorder %s165, 0
    %s168 = sadd.s32 %s167, 1
    %s169 = scalar_select %p166, %s167, %s168
    %p172 = pneg %p166
    %p173 = scmp.eq.s32.totalorder %s11, 1
    %p174 = por %p172, %p173
    %p175 = scmp.ne.s32.totalorder %s167, %s170
    %p176 = scmp.eq.s32.totalorder %s11, 0
    %p177 = por %p175, %p176
    %p178 = scmp.ne.s32.totalorder %s167, %s170
    %p179 = scmp.eq.s32.totalorder %s16, 1
    %p180 = por %p178, %p179
    %p181 = scmp.ne.s32.totalorder %s170, %s171
    %p182 = scmp.eq.s32.totalorder %s16, 0
    %p183 = por %p181, %p182
    %p184 = scmp.ne.s32.totalorder %s170, %s171
    %p185 = scmp.eq.s32.totalorder %s17, 1
    %p186 = por %p184, %p185
    %p188 = scmp.ne.s32.totalorder %s171, %s187
    %p189 = scmp.eq.s32.totalorder %s17, 0
    %p190 = por %p188, %p189
    %p191 = scmp.le.s32.totalorder 1, %s11
    %p192 = scmp.lt.s32.totalorder %s11, 3
    %p193 = pnand %p191, %p192
    %p194 = pneg %p193
    // Predicated region
    $region9: #{atnconv_forward.2} parent=5 // pred_check
      _
    $region10: #{atnconv_forward.2} parent=5 // pred_check_branch
      %196 = sbr.rel (%p193) target = $region12
    $region11: #{atnconv_forward.2} parent=5 // pred_region
      %s197 = ssub.s32 %s11, 1
    $region12: #{atnconv_forward.2} parent=5 // pred_fallthru
      _
    %p198 = scmp.lt.s32.totalorder %s11, 2
    // Predicated region
    $region13: #{atnconv_forward.2} parent=5 // pred_check
      %p199 = pneg %p198
    $region14: #{atnconv_forward.2} parent=5 // pred_check_branch
      %201 = sbr.rel (%p199) target = $region16
    $region15: #{atnconv_forward.2} parent=5 // pred_region
      // Predicated region
      $region17: #{atnconv_forward.2} parent=15 // pred_check
        %p202 = pneg %p43
      $region18: #{atnconv_forward.2} parent=15 // pred_check_branch
        %204 = sbr.rel (%p202) target = $region20
      $region19: #{atnconv_forward.2} parent=15 // pred_region
        %p205 = scmp.lt.s32.totalorder %s18, 1
        %s206 = scalar_select %p205, %s18, 1
        %s207 = smul.addr %s206, 16
        %s208 = smul.addr %s207, 4
        %s209 = scalar_lea.vmem %s0, %s208
      $region20: #{atnconv_forward.2} parent=15 // pred_fallthru
        _
      // Predicated region
      $region21: #{atnconv_forward.2} parent=15 // pred_check
        %p210 = pneg %p69
      $region22: #{atnconv_forward.2} parent=15 // pred_check_branch
        %212 = sbr.rel (%p210) target = $region24
      $region23: #{atnconv_forward.2} parent=15 // pred_region
        %p213 = scmp.lt.s32.totalorder %s18, 1
        %s214 = scalar_select %p213, %s18, 1
        %s215 = scalar_lea.vmem %s1, %s214
      $region24: #{atnconv_forward.2} parent=15 // pred_fallthru
        _
      // Predicated region
      $region25: #{atnconv_forward.2} parent=15 // pred_check
        %p216 = pneg %p95
      $region26: #{atnconv_forward.2} parent=15 // pred_check_branch
        %218 = sbr.rel (%p216) target = $region28
      $region27: #{atnconv_forward.2} parent=15 // pred_region
        %p219 = scmp.lt.s32.totalorder %s18, 1
        %s220 = scalar_select %p219, %s18, 1
        %s221 = scalar_lea.vmem %s2, %s220
      $region28: #{atnconv_forward.2} parent=15 // pred_fallthru
        _
      // Predicated region
      $region29: #{atnconv_forward.2} parent=15 // pred_check
        %p222 = pneg %p123
      $region30: #{atnconv_forward.2} parent=15 // pred_check_branch
        %224 = sbr.rel (%p222) target = $region32
      $region31: #{atnconv_forward.2} parent=15 // pred_region
        %s225 = smul.u32 8, %s19
        %p226 = scmp.lt.s32.totalorder %s18, 1
        %s227 = scalar_select %p226, %s18, 1
        %p228 = scmp.lt.s32.totalorder %s225, 7
        %s229 = scalar_select %p228, %s225, 7
        %s230 = smul.addr %s227, 8
        %s231 = sadd.s32 %s229, %s230
        %s232 = smul.addr %s231, 8
        %s233 = scalar_lea.vmem %s3, %s232
        %s234 = smul.u32 8, %s19
      $region32: #{atnconv_forward.2} parent=15 // pred_fallthru
        _
      // Predicated region
      $region33: #{atnconv_forward.2} parent=15 // pred_check
        %p235 = pneg %p149
      $region34: #{atnconv_forward.2} parent=15 // pred_check_branch
        %237 = sbr.rel (%p235) target = $region36
      $region35: #{atnconv_forward.2} parent=15 // pred_region
        %p238 = scmp.lt.s32.totalorder %s18, 1
        %s239 = scalar_select %p238, %s18, 1
        %s240 = smul.addr %s239, 16
        %s241 = smul.addr %s240, 4
        %s242 = scalar_lea.vmem %s4, %s241
      $region36: #{atnconv_forward.2} parent=15 // pred_fallthru
        _
    $region16: #{atnconv_forward.2} parent=5 // pred_fallthru
      _
    %p243 = scmp.le.s32.totalorder 1, %s11
    %p244 = scmp.lt.s32.totalorder %s11, 3
    %p245 = pnand %p243, %p244
    %p246 = pneg %p245
    // Predicated region
    $region37: #{atnconv_forward.2} parent=5 // pred_check
      _
    $region38: #{atnconv_forward.2} parent=5 // pred_check_branch
      %248 = sbr.rel (%p245) target = $region40
    $region39: #{atnconv_forward.2} parent=5 // pred_region
      %s249 = ssub.s32 %s11, 1
      %p250 = scmp.lt.s32.totalorder %s20, 1
      %s251 = scalar_select %p250, %s20, 1
      %s252 = smul.addr %s251, 16
      %s253 = smul.addr %s252, 4
      %s254 = scalar_lea.vmem %s0, %s253
      %p255 = pneg %p49
      %p256 = pneg %p46
      %p257 = scmp.lt.s32.totalorder %s20, 1
      %s258 = scalar_select %p257, %s20, 1
      %s259 = scalar_lea.vmem %s1, %s258
      %p260 = pneg %p75
      %p261 = pneg %p72
      %p262 = scmp.lt.s32.totalorder %s20, 1
      %s263 = scalar_select %p262, %s20, 1
      %s264 = scalar_lea.vmem %s2, %s263
      %p265 = pneg %p101
      %p266 = pneg %p98
      %s267 = smul.u32 8, %s21
      %p268 = scmp.lt.s32.totalorder %s20, 1
      %s269 = scalar_select %p268, %s20, 1
      %p270 = scmp.lt.s32.totalorder %s267, 7
      %s271 = scalar_select %p270, %s267, 7
      %s272 = smul.addr %s269, 8
      %s273 = sadd.s32 %s271, %s272
      %s274 = smul.addr %s273, 8
      %s275 = scalar_lea.vmem %s3, %s274
      %p276 = pneg %p129
      %p277 = pneg %p126
      %p278 = scmp.lt.s32.totalorder %s20, 1
      %s279 = scalar_select %p278, %s20, 1
      %s280 = smul.addr %s279, 16
      %s281 = smul.addr %s280, 4
      %s282 = scalar_lea.vmem %s4, %s281
      %p283 = pneg %p155
      %p284 = pneg %p152
      %p285 = pneg %p183
      %p286 = pneg %p180
      %s287 = smul.u32 8, %s21
      %p288 = scmp.lt.s32.totalorder %s20, 1
      %s289 = scalar_select %p288, %s20, 1
      %p290 = scmp.lt.s32.totalorder %s287, 7
      %s291 = scalar_select %p290, %s287, 7
      %s292 = smul.addr %s291, 2
      %s293 = smul.addr %s289, 16
      %s294 = sadd.s32 %s292, %s293
      %s295 = smul.addr %s294, 8
      %s296 = scalar_lea.vmem %s5, %s295
      %p297 = scmp.lt.s32.totalorder %s20, 1
      %s298 = scalar_select %p297, %s20, 1
      %s299 = smul.addr %s298, 16
      %s300 = smul.addr %s299, 4
      %s301 = scalar_lea.vmem %s0, %s300
      %p302 = scmp.lt.s32.totalorder %s20, 1
      %s303 = scalar_select %p302, %s20, 1
      %s304 = scalar_lea.vmem %s1, %s303
      %p305 = scmp.lt.s32.totalorder %s20, 1
      %s306 = scalar_select %p305, %s20, 1
      %s307 = scalar_lea.vmem %s2, %s306
      %s308 = smul.u32 8, %s21
      %p309 = scmp.lt.s32.totalorder %s20, 1
      %s310 = scalar_select %p309, %s20, 1
      %p311 = scmp.lt.s32.totalorder %s308, 7
      %s312 = scalar_select %p311, %s308, 7
      %s313 = smul.addr %s310, 8
      %s314 = sadd.s32 %s312, %s313
      %s315 = smul.addr %s314, 8
      %s316 = scalar_lea.vmem %s3, %s315
      %s317 = smul.u32 8, %s21
      %p318 = scmp.lt.s32.totalorder %s20, 1
      %s319 = scalar_select %p318, %s20, 1
      %s320 = smul.addr %s319, 16
      %s321 = smul.addr %s320, 4
      %s322 = scalar_lea.vmem %s4, %s321
      %s323 = smul.u32 8, %s21
      %p324 = scmp.lt.s32.totalorder %s20, 1
      %s325 = scalar_select %p324, %s20, 1
      %p326 = scmp.lt.s32.totalorder %s323, 7
      %s327 = scalar_select %p326, %s323, 7
      %s328 = smul.addr %s327, 2
      %s329 = smul.addr %s325, 16
      %s330 = sadd.s32 %s328, %s329
      %s331 = smul.addr %s330, 8
      %s332 = scalar_lea.vmem %s5, %s331
      %s333 = smul.u32 8, %s21
      %s335 = smul.u32 %s21, 64
      %s336 = sshra.s32 %s335, 3
      %s337 = sand.u32 %s335, 7
      %s338 = smul.u32 %s336, 2
      %s339 = smul.addr %s338, 4
      %s340 = scalar_lea.vmem %s301, %s339
      %v341 = vld [vmem:[%s340] sm:$0xff]
      %v342 = vld [vmem:[%s340 + $0x8] sm:$0xff]
      %v343 = vld [vmem:[%s340 + $0x10] sm:$0xff]
      %v344 = vld [vmem:[%s340 + $0x18] sm:$0xff]
      %v345 = vld [vmem:[%s340 + $0x20] sm:$0xff]
      %v346 = vld [vmem:[%s340 + $0x28] sm:$0xff]
      %v347 = vld [vmem:[%s340 + $0x30] sm:$0xff]
      %v348 = vld [vmem:[%s340 + $0x38] sm:$0xff]
      %v349 = vld [vmem:[%s301] sm:$0xff]
      %v350 = vld [vmem:[%s301 + $0x8] sm:$0xff]
      %v351 = vld [vmem:[%s301 + $0x10] sm:$0xff]
      %v352 = vld [vmem:[%s301 + $0x18] sm:$0xff]
      %v353 = vld [vmem:[%s301 + $0x20] sm:$0xff]
      %v354 = vld [vmem:[%s301 + $0x28] sm:$0xff]
      %v355 = vld [vmem:[%s301 + $0x30] sm:$0xff]
      %v356 = vld [vmem:[%s301 + $0x38] sm:$0xff]
      %v365 = vunpack.c.l.b16 %v341
      %v366 = vunpack.c.h.b16 %v341
      %v367 = vunpack.c.l.b16 %v342
      %v368 = vunpack.c.h.b16 %v342
      %v369 = vunpack.c.l.b16 %v343
      %v370 = vunpack.c.h.b16 %v343
      %v371 = vunpack.c.l.b16 %v344
      %v372 = vunpack.c.h.b16 %v344
      %v373 = vunpack.c.l.b16 %v345
      %v374 = vunpack.c.h.b16 %v345
      %v375 = vunpack.c.l.b16 %v346
      %v376 = vunpack.c.h.b16 %v346
      %v377 = vunpack.c.l.b16 %v347
      %v378 = vunpack.c.h.b16 %v347
      %v379 = vunpack.c.l.b16 %v348
      %v380 = vunpack.c.h.b16 %v348
      %v381 = vpack.c.b16 %v367, %v365
      %v382 = vpack.c.b16 %v368, %v366
      %v383 = vpack.c.b16 %v371, %v369
      %v384 = vpack.c.b16 %v372, %v370
      %v385 = vpack.c.b16 %v375, %v373
      %v386 = vpack.c.b16 %v376, %v374
      %v387 = vpack.c.b16 %v379, %v377
      %v388 = vpack.c.b16 %v380, %v378
      %v401 = vunpack.c.l.b16 %v349
      %v402 = vunpack.c.h.b16 %v349
      %v403 = vunpack.c.l.b16 %v350
      %v404 = vunpack.c.h.b16 %v350
      %v405 = vunpack.c.l.b16 %v351
      %v406 = vunpack.c.h.b16 %v351
      %v407 = vunpack.c.l.b16 %v352
      %v408 = vunpack.c.h.b16 %v352
      %v409 = vunpack.c.l.b16 %v353
      %v410 = vunpack.c.h.b16 %v353
      %v411 = vunpack.c.l.b16 %v354
      %v412 = vunpack.c.h.b16 %v354
      %v413 = vunpack.c.l.b16 %v355
      %v414 = vunpack.c.h.b16 %v355
      %v415 = vunpack.c.l.b16 %v356
      %v416 = vunpack.c.h.b16 %v356
      %v417 = vpack.c.b16 %v403, %v401
      %v418 = vpack.c.b16 %v404, %v402
      %v419 = vpack.c.b16 %v407, %v405
      %v420 = vpack.c.b16 %v408, %v406
      %v421 = vpack.c.b16 %v411, %v409
      %v422 = vpack.c.b16 %v412, %v410
      %v423 = vpack.c.b16 %v415, %v413
      %v424 = vpack.c.b16 %v416, %v414
      %vm429 = vcmask 130048
      %v431 = vsel %vm429, %v382, 0
      %v434 = vsel %vm429, %v384, 0
      %v437 = vsel %vm429, %v386, 0
      %v440 = vsel %vm429, %v388, 0
      %v443 = vsel %vm429, %v418, 0
      %v446 = vsel %vm429, %v420, 0
      %v449 = vsel %vm429, %v422, 0
      %v452 = vsel %vm429, %v424, 0
      %454 = vmatprep.subr.bf16.mxu0 0
      %455 = vmatpush1.bf16.xpose.msra.mxu0 0
      %456 = vmatprep.subr.bf16.mxu0 0
      %457 = vmatpush1.bf16.xpose.msra.mxu0 0
      %458 = vmatprep.subr.bf16.mxu0 0
      %459 = vmatpush1.bf16.xpose.msra.mxu0 0
      %460 = vmatprep.subr.bf16.mxu0 0
      %461 = vmatpush1.bf16.xpose.msra.mxu0 0
      %462 = vmatprep.subr.bf16.mxu0 %v452
      %463 = vmatpush1.bf16.xpose.msra.mxu0 %v423
      %464 = vmatprep.subr.bf16.mxu0 %v449
      %465 = vmatpush1.bf16.xpose.msra.mxu0 %v421
      %466 = vmatprep.subr.bf16.mxu0 %v446
      %467 = vmatpush1.bf16.xpose.msra.mxu0 %v419
      %468 = vmatprep.subr.bf16.mxu0 %v443
      %469 = vmatpush1.bf16.xpose.msra.mxu0 %v417
      %470 = vmatprep.subr.bf16.mxu0 0
      %471 = vmatpush2.bf16.xpose.msra.mxu0 0
      %472 = vmatprep.subr.bf16.mxu0 0
      %473 = vmatpush2.bf16.xpose.msra.mxu0 0
      %474 = vmatprep.subr.bf16.mxu0 0
      %475 = vmatpush2.bf16.xpose.msra.mxu0 0
      %476 = vmatprep.subr.bf16.mxu0 0
      %477 = vmatpush2.bf16.xpose.msra.mxu0 0
      %478 = vmatprep.subr.bf16.mxu0 0
      %479 = vmatpush2.bf16.xpose.msra.mxu0 0
      %480 = vmatprep.subr.bf16.mxu0 0
      %481 = vmatpush2.bf16.xpose.msra.mxu0 0
      %482 = vmatprep.subr.bf16.mxu0 0
      %483 = vmatpush2.bf16.xpose.msra.mxu0 0
      %484 = vmatprep.subr.bf16.mxu0 0
      %485 = vmatpush2.bf16.xpose.msra.mxu0 0
      %486 = vmatprep.mubr.bf16.mxu0 %v431
      %487 = vmatmul.mubr.bf16.gmra.mxu0 %v381
      %v488 = vpop.f32.mrf.mxu0
      %v489 = vadd.f32 0.0, %v488
      %v490 = vpop.f32.mrf.mxu0
      %v491 = vpop.f32.mrf.mxu0
      %v492 = vadd.f32 0.0, %v491
      %v493 = vpop.f32.mrf.mxu0
      %494 = vmatprep.mubr.bf16.mxu0 %v434
      %495 = vmatmul.mubr.bf16.gmra.mxu0 %v383
      %v496 = vpop.f32.mrf.mxu0
      %v497 = vadd.f32 0.0, %v496
      %v498 = vpop.f32.mrf.mxu0
      %v499 = vpop.f32.mrf.mxu0
      %v500 = vadd.f32 0.0, %v499
      %v501 = vpop.f32.mrf.mxu0
      %502 = vmatprep.mubr.bf16.mxu0 %v437
      %503 = vmatmul.mubr.bf16.gmra.mxu0 %v385
      %v504 = vpop.f32.mrf.mxu0
      %v505 = vadd.f32 0.0, %v504
      %v506 = vpop.f32.mrf.mxu0
      %v507 = vpop.f32.mrf.mxu0
      %v508 = vadd.f32 0.0, %v507
      %v509 = vpop.f32.mrf.mxu0
      %510 = vmatprep.mubr.bf16.mxu0 %v440
      %511 = vmatmul.mubr.bf16.gmra.mxu0 %v387
      %v512 = vpop.f32.mrf.mxu0
      %v513 = vadd.f32 0.0, %v512
      %v514 = vpop.f32.mrf.mxu0
      %v515 = vpop.f32.mrf.mxu0
      %v516 = vadd.f32 0.0, %v515
      %v517 = vpop.f32.mrf.mxu0
      %518 = vdwg.mxu0
      %v519 = vld [vmem:[%s304] sm:$0x1]
      %v521 = vlaneseq
      %v522 = vshrl.u32 %v521, 7
      %v523 = vsub.s32 0, %v522
      %v524 = vrot.slane %v519, %v523
      %v526 = vmul.f32 %v489, %v524
      %v527 = vmul.f32 %v492, %v524
      %v528 = vmul.f32 %v497, %v524
      %v529 = vmul.f32 %v500, %v524
      %v530 = vmul.f32 %v505, %v524
      %v531 = vmul.f32 %v508, %v524
      %v532 = vmul.f32 %v513, %v524
      %v533 = vmul.f32 %v516, %v524
      %v534 = vld [vmem:[%s316] sm:$0xff]
      %v535 = vld [vmem:[%s316 + $0x8] sm:$0xff]
      %v536 = vld [vmem:[%s316 + $0x10] sm:$0xff]
      %v537 = vld [vmem:[%s316 + $0x18] sm:$0xff]
      %v538 = vld [vmem:[%s316 + $0x20] sm:$0xff]
      %v539 = vld [vmem:[%s316 + $0x28] sm:$0xff]
      %v540 = vld [vmem:[%s316 + $0x30] sm:$0xff]
      %v541 = vld [vmem:[%s316 + $0x38] sm:$0xff]
      %543 = vset.pattern.permute.xlu0 0
      %544 = vperm.xlu0 %543, %v534
      %v545 = vpop.permute.xlu0 %544
      %548 = vset.pattern.permute.xlu0 0
      %549 = vperm.xlu0 %548, %v535
      %v550 = vpop.permute.xlu0 %549
      %553 = vset.pattern.permute.xlu0 0
      %554 = vperm.xlu0 %553, %v536
      %v555 = vpop.permute.xlu0 %554
      %558 = vset.pattern.permute.xlu0 0
      %559 = vperm.xlu0 %558, %v537
      %v560 = vpop.permute.xlu0 %559
      %563 = vset.pattern.permute.xlu0 0
      %564 = vperm.xlu0 %563, %v538
      %v565 = vpop.permute.xlu0 %564
      %568 = vset.pattern.permute.xlu0 0
      %569 = vperm.xlu0 %568, %v539
      %v570 = vpop.permute.xlu0 %569
      %573 = vset.pattern.permute.xlu0 0
      %574 = vperm.xlu0 %573, %v540
      %v575 = vpop.permute.xlu0 %574
      %578 = vset.pattern.permute.xlu0 0
      %579 = vperm.xlu0 %578, %v541
      %v580 = vpop.permute.xlu0 %579
      %v582 = vmul.f32 %v526, %v545
      %v583 = vmul.f32 %v527, %v550
      %v584 = vmul.f32 %v528, %v555
      %v585 = vmul.f32 %v529, %v560
      %v586 = vmul.f32 %v530, %v565
      %v587 = vmul.f32 %v531, %v570
      %v588 = vmul.f32 %v532, %v575
      %v589 = vmul.f32 %v533, %v580
      %vm590 = vcmask 523264
      %v591 = vsel %vm590, %v582, -inf
      %592 = vmax.xlane.f32.xlu0 %v591
      %v593 = vpop.xlane.xlu0 %592
      %v594 = vsel %vm590, %v583, -inf
      %595 = vmax.xlane.f32.xlu0 %v594
      %v596 = vpop.xlane.xlu0 %595
      %v597 = vsel %vm590, %v584, -inf
      %598 = vmax.xlane.f32.xlu0 %v597
      %v599 = vpop.xlane.xlu0 %598
      %v600 = vsel %vm590, %v585, -inf
      %601 = vmax.xlane.f32.xlu0 %v600
      %v602 = vpop.xlane.xlu0 %601
      %v603 = vsel %vm590, %v586, -inf
      %604 = vmax.xlane.f32.xlu0 %v603
      %v605 = vpop.xlane.xlu0 %604
      %v606 = vsel %vm590, %v587, -inf
      %607 = vmax.xlane.f32.xlu0 %v606
      %v608 = vpop.xlane.xlu0 %607
      %v609 = vsel %vm590, %v588, -inf
      %610 = vmax.xlane.f32.xlu0 %v609
      %v611 = vpop.xlane.xlu0 %610
      %v612 = vsel %vm590, %v589, -inf
      %613 = vmax.xlane.f32.xlu0 %v612
      %v614 = vpop.xlane.xlu0 %613
      %v615 = vsub.f32 %v582, %v593
      %v616 = vsub.f32 %v583, %v596
      %v617 = vsub.f32 %v584, %v599
      %v618 = vsub.f32 %v585, %v602
      %v619 = vsub.f32 %v586, %v605
      %v620 = vsub.f32 %v587, %v608
      %v621 = vsub.f32 %v588, %v611
      %v622 = vsub.f32 %v589, %v614
      %v623 = vmul.f32 %v615, 1.442695
      %v624 = vpow.pop %v623
      %v625 = vmul.f32 %v616, 1.442695
      %v626 = vpow.pop %v625
      %v627 = vmul.f32 %v617, 1.442695
      %v628 = vpow.pop %v627
      %v629 = vmul.f32 %v618, 1.442695
      %v630 = vpow.pop %v629
      %v631 = vmul.f32 %v619, 1.442695
      %v632 = vpow.pop %v631
      %v633 = vmul.f32 %v620, 1.442695
      %v634 = vpow.pop %v633
      %v635 = vmul.f32 %v621, 1.442695
      %v636 = vpow.pop %v635
      %v637 = vmul.f32 %v622, 1.442695
      %v638 = vpow.pop %v637
      %v639 = vsel %vm590, %v624, 0.0
      %640 = vadd.xlane.f32.xlu0 %v639
      %v641 = vpop.xlane.xlu0 %640
      %v642 = vsel %vm590, %v626, 0.0
      %643 = vadd.xlane.f32.xlu0 %v642
      %v644 = vpop.xlane.xlu0 %643
      %v645 = vsel %vm590, %v628, 0.0
      %646 = vadd.xlane.f32.xlu0 %v645
      %v647 = vpop.xlane.xlu0 %646
      %v648 = vsel %vm590, %v630, 0.0
      %649 = vadd.xlane.f32.xlu0 %v648
      %v650 = vpop.xlane.xlu0 %649
      %v651 = vsel %vm590, %v632, 0.0
      %652 = vadd.xlane.f32.xlu0 %v651
      %v653 = vpop.xlane.xlu0 %652
      %v654 = vsel %vm590, %v634, 0.0
      %655 = vadd.xlane.f32.xlu0 %v654
      %v656 = vpop.xlane.xlu0 %655
      %v657 = vsel %vm590, %v636, 0.0
      %658 = vadd.xlane.f32.xlu0 %v657
      %v659 = vpop.xlane.xlu0 %658
      %v660 = vsel %vm590, %v638, 0.0
      %661 = vadd.xlane.f32.xlu0 %v660
      %v662 = vpop.xlane.xlu0 %661
      %v663 = vrcp.pop %v641
      %v664 = vrcp.pop %v644
      %v665 = vrcp.pop %v647
      %v666 = vrcp.pop %v650
      %v667 = vrcp.pop %v653
      %v668 = vrcp.pop %v656
      %v669 = vrcp.pop %v659
      %v670 = vrcp.pop %v662
      %v671 = vmul.f32 %v624, %v663
      %v672 = vmul.f32 %v626, %v664
      %v673 = vmul.f32 %v628, %v665
      %v674 = vmul.f32 %v630, %v666
      %v675 = vmul.f32 %v632, %v667
      %v676 = vmul.f32 %v634, %v668
      %v677 = vmul.f32 %v636, %v669
      %v678 = vmul.f32 %v638, %v670
      %v679 = vld [vmem:[%s307] sm:$0x1]
      %v681 = vlaneseq
      %v682 = vshrl.u32 %v681, 7
      %v683 = vsub.s32 0, %v682
      %v684 = vrot.slane %v679, %v683
      %v686 = vmul.f32 %v671, %v684
      %v687 = vmul.f32 %v672, %v684
      %v688 = vmul.f32 %v673, %v684
      %v689 = vmul.f32 %v674, %v684
      %v690 = vmul.f32 %v675, %v684
      %v691 = vmul.f32 %v676, %v684
      %v692 = vmul.f32 %v677, %v684
      %v693 = vmul.f32 %v678, %v684
      %v694 = vmul.f32 %v686, %v545
      %v695 = vmul.f32 %v687, %v550
      %v696 = vmul.f32 %v688, %v555
      %v697 = vmul.f32 %v689, %v560
      %v698 = vmul.f32 %v690, %v565
      %v699 = vmul.f32 %v691, %v570
      %v700 = vmul.f32 %v692, %v575
      %v701 = vmul.f32 %v693, %v580
      %v702 = vmax.f32 %v694, 1e-08
      %v703 = vmax.f32 %v695, 1e-08
      %v704 = vmax.f32 %v696, 1e-08
      %v705 = vmax.f32 %v697, 1e-08
      %v706 = vmax.f32 %v698, 1e-08
      %v707 = vmax.f32 %v699, 1e-08
      %v708 = vmax.f32 %v700, 1e-08
      %v709 = vmax.f32 %v701, 1e-08
      %v710 = vpack.c.bf16 %v703, %v702
      %v711 = vpack.c.bf16 %v705, %v704
      %v712 = vpack.c.bf16 %v707, %v706
      %v713 = vpack.c.bf16 %v709, %v708
      %v714 = vld [vmem:[%s322] sm:$0xff]
      %v715 = vld [vmem:[%s322 + $0x8] sm:$0xff]
      %v716 = vld [vmem:[%s322 + $0x10] sm:$0xff]
      %v717 = vld [vmem:[%s322 + $0x18] sm:$0xff]
      %v718 = vld [vmem:[%s322 + $0x20] sm:$0xff]
      %v719 = vld [vmem:[%s322 + $0x28] sm:$0xff]
      %v720 = vld [vmem:[%s322 + $0x30] sm:$0xff]
      %v721 = vld [vmem:[%s322 + $0x38] sm:$0xff]
      %v730 = vunpack.c.l.b16 %v714
      %v731 = vunpack.c.h.b16 %v714
      %v732 = vunpack.c.l.b16 %v715
      %v733 = vunpack.c.h.b16 %v715
      %v734 = vunpack.c.l.b16 %v716
      %v735 = vunpack.c.h.b16 %v716
      %v736 = vunpack.c.l.b16 %v717
      %v737 = vunpack.c.h.b16 %v717
      %v738 = vunpack.c.l.b16 %v718
      %v739 = vunpack.c.h.b16 %v718
      %v740 = vunpack.c.l.b16 %v719
      %v741 = vunpack.c.h.b16 %v719
      %v742 = vunpack.c.l.b16 %v720
      %v743 = vunpack.c.h.b16 %v720
      %v744 = vunpack.c.l.b16 %v721
      %v745 = vunpack.c.h.b16 %v721
      %v746 = vpack.c.b16 %v732, %v730
      %v747 = vpack.c.b16 %v733, %v731
      %v748 = vpack.c.b16 %v736, %v734
      %v749 = vpack.c.b16 %v737, %v735
      %v750 = vpack.c.b16 %v740, %v738
      %v751 = vpack.c.b16 %v741, %v739
      %v752 = vpack.c.b16 %v744, %v742
      %v753 = vpack.c.b16 %v745, %v743
      %v763 = vsel %vm590, %v710, 0
      %v766 = vsel %vm590, %v711, 0
      %v769 = vsel %vm590, %v712, 0
      %v772 = vsel %vm590, %v713, 0
      %774 = vmatprep.subr.bf16.mxu0 0
      %775 = vmatpush1.bf16.msra.mxu0 0
      %776 = vmatprep.subr.bf16.mxu0 0
      %777 = vmatpush1.bf16.msra.mxu0 0
      %778 = vmatprep.subr.bf16.mxu0 0
      %779 = vmatpush1.bf16.msra.mxu0 0
      %780 = vmatprep.subr.bf16.mxu0 0
      %781 = vmatpush1.bf16.msra.mxu0 0
      %782 = vmatprep.subr.bf16.mxu0 %v753
      %783 = vmatpush1.bf16.msra.mxu0 %v752
      %784 = vmatprep.subr.bf16.mxu0 %v751
      %785 = vmatpush1.bf16.msra.mxu0 %v750
      %786 = vmatprep.subr.bf16.mxu0 %v749
      %787 = vmatpush1.bf16.msra.mxu0 %v748
      %788 = vmatprep.subr.bf16.mxu0 %v747
      %789 = vmatpush1.bf16.msra.mxu0 %v746
      %790 = vmatprep.subr.bf16.mxu0 0
      %791 = vmatpush2.bf16.msra.mxu0 0
      %792 = vmatprep.subr.bf16.mxu0 0
      %793 = vmatpush2.bf16.msra.mxu0 0
      %794 = vmatprep.subr.bf16.mxu0 0
      %795 = vmatpush2.bf16.msra.mxu0 0
      %796 = vmatprep.subr.bf16.mxu0 0
      %797 = vmatpush2.bf16.msra.mxu0 0
      %798 = vmatprep.subr.bf16.mxu0 0
      %799 = vmatpush2.bf16.msra.mxu0 0
      %800 = vmatprep.subr.bf16.mxu0 0
      %801 = vmatpush2.bf16.msra.mxu0 0
      %802 = vmatprep.subr.bf16.mxu0 0
      %803 = vmatpush2.bf16.msra.mxu0 0
      %804 = vmatprep.subr.bf16.mxu0 0
      %805 = vmatpush2.bf16.msra.mxu0 0
      %806 = vmatprep.mubr.bf16.mxu0 0
      %807 = vmatmul.mubr.bf16.gmra.mxu0 %v763
      %v808 = vpop.f32.mrf.mxu0
      %v809 = vadd.f32 0.0, %v808
      %v810 = vpop.f32.mrf.mxu0
      %v811 = vadd.f32 0.0, %v810
      %v812 = vpop.f32.mrf.mxu0
      %v813 = vadd.f32 0.0, %v812
      %v814 = vpop.f32.mrf.mxu0
      %v815 = vadd.f32 0.0, %v814
      %816 = vmatprep.mubr.bf16.mxu0 0
      %817 = vmatmul.mubr.bf16.gmra.mxu0 %v766
      %v818 = vpop.f32.mrf.mxu0
      %v819 = vadd.f32 0.0, %v818
      %v820 = vpop.f32.mrf.mxu0
      %v821 = vadd.f32 0.0, %v820
      %v822 = vpop.f32.mrf.mxu0
      %v823 = vadd.f32 0.0, %v822
      %v824 = vpop.f32.mrf.mxu0
      %v825 = vadd.f32 0.0, %v824
      %826 = vmatprep.mubr.bf16.mxu0 0
      %827 = vmatmul.mubr.bf16.gmra.mxu0 %v769
      %v828 = vpop.f32.mrf.mxu0
      %v829 = vadd.f32 0.0, %v828
      %v830 = vpop.f32.mrf.mxu0
      %v831 = vadd.f32 0.0, %v830
      %v832 = vpop.f32.mrf.mxu0
      %v833 = vadd.f32 0.0, %v832
      %v834 = vpop.f32.mrf.mxu0
      %v835 = vadd.f32 0.0, %v834
      %836 = vmatprep.mubr.bf16.mxu0 0
      %837 = vmatmul.mubr.bf16.gmra.mxu0 %v772
      %v838 = vpop.f32.mrf.mxu0
      %v839 = vadd.f32 0.0, %v838
      %v840 = vpop.f32.mrf.mxu0
      %v841 = vadd.f32 0.0, %v840
      %v842 = vpop.f32.mrf.mxu0
      %v843 = vadd.f32 0.0, %v842
      %v844 = vpop.f32.mrf.mxu0
      %v845 = vadd.f32 0.0, %v844
      %846 = vdwg.mxu0
      %v847 = vmul.f32 %v809, 0.25
      %v848 = vmul.f32 %v811, 0.25
      %v849 = vmul.f32 %v813, 0.25
      %v850 = vmul.f32 %v815, 0.25
      %v851 = vmul.f32 %v819, 0.25
      %v852 = vmul.f32 %v821, 0.25
      %v853 = vmul.f32 %v823, 0.25
      %v854 = vmul.f32 %v825, 0.25
      %v855 = vmul.f32 %v829, 0.25
      %v856 = vmul.f32 %v831, 0.25
      %v857 = vmul.f32 %v833, 0.25
      %v858 = vmul.f32 %v835, 0.25
      %v859 = vmul.f32 %v839, 0.25
      %v860 = vmul.f32 %v841, 0.25
      %v861 = vmul.f32 %v843, 0.25
      %v862 = vmul.f32 %v845, 0.25
      %863 = vst [vmem:[%s332] sm:$0xff] %v847
      %864 = vst [vmem:[%s332 + $0x8] sm:$0xff] %v848
      %865 = vst [vmem:[%s332 + $0x10] sm:$0xff] %v849
      %866 = vst [vmem:[%s332 + $0x18] sm:$0xff] %v850
      %867 = vst [vmem:[%s332 + $0x20] sm:$0xff] %v851
      %868 = vst [vmem:[%s332 + $0x28] sm:$0xff] %v852
      %869 = vst [vmem:[%s332 + $0x30] sm:$0xff] %v853
      %870 = vst [vmem:[%s332 + $0x38] sm:$0xff] %v854
      %871 = vst [vmem:[%s332 + $0x40] sm:$0xff] %v855
      %872 = vst [vmem:[%s332 + $0x48] sm:$0xff] %v856
      %873 = vst [vmem:[%s332 + $0x50] sm:$0xff] %v857
      %874 = vst [vmem:[%s332 + $0x58] sm:$0xff] %v858
      %875 = vst [vmem:[%s332 + $0x60] sm:$0xff] %v859
      %876 = vst [vmem:[%s332 + $0x68] sm:$0xff] %v860
      %877 = vst [vmem:[%s332 + $0x70] sm:$0xff] %v861
      %878 = vst [vmem:[%s332 + $0x78] sm:$0xff] %v862
      %s879 = smul.u32 8, %s21
      %p880 = scmp.lt.s32.totalorder %s20, 1
      %s881 = scalar_select %p880, %s20, 1
      %p882 = scmp.lt.s32.totalorder %s879, 7
      %s883 = scalar_select %p882, %s879, 7
      %s884 = smul.addr %s883, 2
      %s885 = smul.addr %s881, 16
      %s886 = sadd.s32 %s884, %s885
      %s887 = smul.addr %s886, 8
      %s888 = scalar_lea.vmem %s5, %s887
      // Predicated region
      $region41: #{atnconv_forward.2} parent=39 // pred_check
        %p889 = pneg %p180
      $region42: #{atnconv_forward.2} parent=39 // pred_check_branch
        %891 = sbr.rel (%p889) target = $region44
      $region43: #{atnconv_forward.2} parent=39 // pred_region
        %s892 = smul.u32 8, %s21
      $region44: #{atnconv_forward.2} parent=39 // pred_fallthru
        _
    $region40: #{atnconv_forward.2} parent=5 // pred_fallthru
      _
    %p893 = scmp.le.s32.totalorder 2, %s11
    // Predicated region
    $region45: #{atnconv_forward.2} parent=5 // pred_check
      %p894 = pneg %p893
    $region46: #{atnconv_forward.2} parent=5 // pred_check_branch
      %896 = sbr.rel (%p894) target = $region48
    $region47: #{atnconv_forward.2} parent=5 // pred_region
      %s897 = ssub.s32 %s11, 2
      // Predicated region
      $region49: #{atnconv_forward.2} parent=47 // pred_check
        %p898 = pneg %p186
      $region50: #{atnconv_forward.2} parent=47 // pred_check_branch
        %900 = sbr.rel (%p898) target = $region52
      $region51: #{atnconv_forward.2} parent=47 // pred_region
        %s901 = smul.u32 8, %s23
        %p902 = scmp.lt.s32.totalorder %s22, 1
        %s903 = scalar_select %p902, %s22, 1
        %p904 = scmp.lt.s32.totalorder %s901, 7
        %s905 = scalar_select %p904, %s901, 7
        %s906 = smul.addr %s905, 2
        %s907 = smul.addr %s903, 16
        %s908 = sadd.s32 %s906, %s907
        %s909 = smul.addr %s908, 8
        %s910 = scalar_lea.vmem %s5, %s909
      $region52: #{atnconv_forward.2} parent=47 // pred_fallthru
        _
    $region48: #{atnconv_forward.2} parent=5 // pred_fallthru
      _
  $region6: #{atnconv_forward.2} parent=0 // loop_footer
    %s15 = sadd.s32 1, %s11
  $region7: #{atnconv_forward.2} parent=0 // loop_footer_branch
    %10 = sbr.rel target = $region3
  $region8: #{atnconv_forward.2} parent=0 // loop_exit
    _

// kernel: atnconv_forward.3
$region0: #{atnconv_forward.3}
  #allocation0 [shape = 'u32[]', space=smem, size = 0x4, offset = 0x4, fixed_abs, tag = 'smem constant byte address 0x4 - core index']
  #allocation1 [shape = 'u32[144,128]{1,0:T(1,128)}', space=vmem, size = 0x12000, scoped, tag = 'internal scratch']
  %s0 = inlined_call_operand.vmem [shape: bf16[2,2,24,32,16], index: 0, kind: input, shape index: {}]
  %s1 = inlined_call_operand.vmem [shape: bf16[4,144,4], index: 1, kind: input, shape index: {}]
  %s2 = inlined_call_operand.vmem [shape: f32[1,16], index: 2, kind: input, shape index: {}]
  %s3 = inlined_call_operand.vmem [shape: f32[2,256,16], index: 3, kind: output, shape index: {}]
  %s4 = sld [smem:[#allocation0]]
  $region45: #{atnconv_forward.3} parent=0
    _
  %s6 = ssub.s32 1, %s4
  %s7 = scalar_select 0, %s6, %s4
  loop: start=0, step=1, limit=6
  $region2: #{atnconv_forward.3} parent=0 // loop_pre_header
    _
  $region3: #{atnconv_forward.3} parent=0 // loop_header
    %s9 = sphi 0, %s13
    %p10 = scmp.ge.s32.totalorder %s9, 6
    %s16 = sphi 0, %s28
    %s17 = sphi 0, %s24
    %s18 = sphi 0, %s16
    %s19 = sphi 0, %s17
    %s20 = sphi 0, %s18
    %s21 = sphi 0, %s19
    %s33 = sphi 0, %s35
    %s36 = sphi 0, %s33
    %s37 = sphi 0, %s36
    %s53 = sphi 0, %s37
    %s57 = sphi 0, %s57
    %s59 = sphi 0, %s57
    %s60 = sphi 0, %s59
    %s74 = sphi 0, %s60
    %s78 = sphi 0, %s78
    %s80 = sphi 0, %s78
    %s81 = sphi 0, %s80
    %s95 = sphi 0, %s81
    %s103 = sphi 0, %s105
    %s106 = sphi 0, %s103
    %s107 = sphi 0, %s106
    %s123 = sphi 0, %s107
  $region4: #{atnconv_forward.3} parent=0 // loop_header_branch
    %12 = sbr.rel (%p10) target = $region8
  $region5: #{atnconv_forward.3} parent=0 // loop_body
    %s14 = ssub.s32 %s9, 1
    %s15 = ssub.s32 %s9, 2
    %s22 = sadd.s32 1, %s17
    %p23 = scmp.ge.s32.totalorder %s22, 2
    %s24 = scalar_select %p23, 0, %s22
    %s25 = sadd.s32 1, %s16
    %s26 = scalar_select %p23, %s25, %s16
    %p27 = scmp.ge.s32.totalorder %s26, 2
    %s28 = scalar_select %p27, 0, %s26
    %s29 = ssub.s32 %s16, %s28
    %s30 = ssub.s32 %s17, %s24
    %s31 = sor.u32 %s29, %s30
    %p32 = scmp.eq.s32.totalorder %s31, 0
    %s34 = sadd.s32 %s33, 1
    %s35 = scalar_select %p32, %s33, %s34
    %p38 = pneg %p32
    %p39 = scmp.eq.s32.totalorder %s9, 3
    %p40 = por %p38, %p39
    %p41 = scmp.ne.s32.totalorder %s33, %s36
    %p42 = scmp.eq.s32.totalorder %s9, 0
    %p43 = por %p41, %p42
    %p44 = scmp.ne.s32.totalorder %s33, %s36
    %p45 = scmp.eq.s32.totalorder %s14, 3
    %p46 = por %p44, %p45
    %p47 = scmp.ne.s32.totalorder %s36, %s37
    %p48 = scmp.eq.s32.totalorder %s14, 0
    %p49 = por %p47, %p48
    %p50 = scmp.ne.s32.totalorder %s36, %s37
    %p51 = scmp.eq.s32.totalorder %s15, 3
    %p52 = por %p50, %p51
    %p54 = scmp.ne.s32.totalorder %s37, %s53
    %p55 = scmp.eq.s32.totalorder %s15, 0
    %p56 = por %p54, %p55
    %s58 = sadd.s32 %s57, 1
    %p61 = scmp.eq.s32.totalorder %s9, 3
    %p62 = scmp.ne.s32.totalorder %s57, %s59
    %p63 = scmp.eq.s32.totalorder %s9, 0
    %p64 = por %p62, %p63
    %p65 = scmp.ne.s32.totalorder %s57, %s59
    %p66 = scmp.eq.s32.totalorder %s14, 3
    %p67 = por %p65, %p66
    %p68 = scmp.ne.s32.totalorder %s59, %s60
    %p69 = scmp.eq.s32.totalorder %s14, 0
    %p70 = por %p68, %p69
    %p71 = scmp.ne.s32.totalorder %s59, %s60
    %p72 = scmp.eq.s32.totalorder %s15, 3
    %p73 = por %p71, %p72
    %p75 = scmp.ne.s32.totalorder %s60, %s74
    %p76 = scmp.eq.s32.totalorder %s15, 0
    %p77 = por %p75, %p76
    %s79 = sadd.s32 %s78, 1
    %p82 = scmp.eq.s32.totalorder %s9, 3
    %p83 = scmp.ne.s32.totalorder %s78, %s80
    %p84 = scmp.eq.s32.totalorder %s9, 0
    %p85 = por %p83, %p84
    %p86 = scmp.ne.s32.totalorder %s78, %s80
    %p87 = scmp.eq.s32.totalorder %s14, 3
    %p88 = por %p86, %p87
    %p89 = scmp.ne.s32.totalorder %s80, %s81
    %p90 = scmp.eq.s32.totalorder %s14, 0
    %p91 = por %p89, %p90
    %p92 = scmp.ne.s32.totalorder %s80, %s81
    %p93 = scmp.eq.s32.totalorder %s15, 3
    %p94 = por %p92, %p93
    %p96 = scmp.ne.s32.totalorder %s81, %s95
    %p97 = scmp.eq.s32.totalorder %s15, 0
    %p98 = por %p96, %p97
    %s99 = ssub.s32 %s16, %s28
    %s100 = ssub.s32 %s17, %s24
    %s101 = sor.u32 %s99, %s100
    %p102 = scmp.eq.s32.totalorder %s101, 0
    %s104 = sadd.s32 %s103, 1
    %s105 = scalar_select %p102, %s103, %s104
    %p108 = pneg %p102
    %p109 = scmp.eq.s32.totalorder %s9, 3
    %p110 = por %p108, %p109
    %p111 = scmp.ne.s32.totalorder %s103, %s106
    %p112 = scmp.eq.s32.totalorder %s9, 0
    %p113 = por %p111, %p112
    %p114 = scmp.ne.s32.totalorder %s103, %s106
    %p115 = scmp.eq.s32.totalorder %s14, 3
    %p116 = por %p114, %p115
    %p117 = scmp.ne.s32.totalorder %s106, %s107
    %p118 = scmp.eq.s32.totalorder %s14, 0
    %p119 = por %p117, %p118
    %p120 = scmp.ne.s32.totalorder %s106, %s107
    %p121 = scmp.eq.s32.totalorder %s15, 3
    %p122 = por %p120, %p121
    %p124 = scmp.ne.s32.totalorder %s107, %s123
    %p125 = scmp.eq.s32.totalorder %s15, 0
    %p126 = por %p124, %p125
    %p127 = scmp.le.s32.totalorder 1, %s9
    %p128 = scmp.lt.s32.totalorder %s9, 5
    %p129 = pnand %p127, %p128
    %p130 = pneg %p129
    // Predicated region
    $region9: #{atnconv_forward.3} parent=5 // pred_check
      _
    $region10: #{atnconv_forward.3} parent=5 // pred_check_branch
      %132 = sbr.rel (%p129) target = $region12
    $region11: #{atnconv_forward.3} parent=5 // pred_region
      %s133 = ssub.s32 %s9, 1
      // Predicated region
      $region13: #{atnconv_forward.3} parent=11 // pred_check
        %p134 = pneg %p70
      $region14: #{atnconv_forward.3} parent=11 // pred_check_branch
        %136 = sbr.rel (%p134) target = $region16
      $region15: #{atnconv_forward.3} parent=11 // pred_region
        _
      $region16: #{atnconv_forward.3} parent=11 // pred_fallthru
        _
      // Predicated region
      $region17: #{atnconv_forward.3} parent=11 // pred_check
        %p137 = pneg %p91
      $region18: #{atnconv_forward.3} parent=11 // pred_check_branch
        %139 = sbr.rel (%p137) target = $region20
      $region19: #{atnconv_forward.3} parent=11 // pred_region
        _
      $region20: #{atnconv_forward.3} parent=11 // pred_fallthru
        _
    $region12: #{atnconv_forward.3} parent=5 // pred_fallthru
      _
    %p140 = scmp.lt.s32.totalorder %s9, 4
    // Predicated region
    $region21: #{atnconv_forward.3} parent=5 // pred_check
      %p141 = pneg %p140
    $region22: #{atnconv_forward.3} parent=5 // pred_check_branch
      %143 = sbr.rel (%p141) target = $region24
    $region23: #{atnconv_forward.3} parent=5 // pred_region
      // Predicated region
      $region25: #{atnconv_forward.3} parent=23 // pred_check
        %p144 = pneg %p43
      $region26: #{atnconv_forward.3} parent=23 // pred_check_branch
        %146 = sbr.rel (%p144) target = $region28
      $region27: #{atnconv_forward.3} parent=23 // pred_region
        %p147 = scmp.lt.s32.totalorder %s16, 1
        %s148 = scalar_select %p147, %s16, 1
        %p149 = scmp.lt.s32.totalorder %s17, 1
        %s150 = scalar_select %p149, %s17, 1
        %s151 = smul.addr %s150, 96
        %s152 = smul.addr %s148, 192
        %s153 = sadd.s32 %s151, %s152
        %s154 = smul.addr %s153, 4
        %s155 = scalar_lea.vmem %s0, %s154
      $region28: #{atnconv_forward.3} parent=23 // pred_fallthru
        _
    $region24: #{atnconv_forward.3} parent=5 // pred_fallthru
      _
    %p156 = scmp.le.s32.totalorder 1, %s9
    %p157 = scmp.lt.s32.totalorder %s9, 5
    %p158 = pnand %p156, %p157
    %p159 = pneg %p158
    // Predicated region
    $region29: #{atnconv_forward.3} parent=5 // pred_check
      _
    $region30: #{atnconv_forward.3} parent=5 // pred_check_branch
      %161 = sbr.rel (%p158) target = $region32
    $region31: #{atnconv_forward.3} parent=5 // pred_region
      %s162 = ssub.s32 %s9, 1
      %p163 = scmp.lt.s32.totalorder %s18, 1
      %s164 = scalar_select %p163, %s18, 1
      %p165 = scmp.lt.s32.totalorder %s19, 1
      %s166 = scalar_select %p165, %s19, 1
      %s167 = smul.addr %s166, 96
      %s168 = smul.addr %s164, 192
      %s169 = sadd.s32 %s167, %s168
      %s170 = smul.addr %s169, 4
      %s171 = scalar_lea.vmem %s0, %s170
      %p172 = pneg %p49
      %p173 = pneg %p46
      %p174 = pneg %p70
      %p175 = pneg %p67
      %p176 = pneg %p91
      %p177 = pneg %p88
      %p178 = pneg %p119
      %p179 = pneg %p116
      %s180 = smul.u32 16, %s19
      %p181 = scmp.lt.s32.totalorder %s18, 1
      %s182 = scalar_select %p181, %s18, 1
      %p183 = scmp.lt.s32.totalorder %s180, 31
      %s184 = scalar_select %p183, %s180, 31
      %s185 = smul.addr %s182, 32
      %s186 = sadd.s32 %s184, %s185
      %s187 = smul.addr %s186, 8
      %s188 = scalar_lea.vmem %s3, %s187
      %p189 = scmp.lt.s32.totalorder %s18, 1
      %s190 = scalar_select %p189, %s18, 1
      %p191 = scmp.lt.s32.totalorder %s19, 1
      %s192 = scalar_select %p191, %s19, 1
      %s193 = smul.addr %s192, 96
      %s194 = smul.addr %s190, 192
      %s195 = sadd.s32 %s193, %s194
      %s196 = smul.addr %s195, 4
      %s197 = scalar_lea.vmem %s0, %s196
      %s198 = smul.u32 16, %s19
      %p199 = scmp.lt.s32.totalorder %s18, 1
      %s200 = scalar_select %p199, %s18, 1
      %p201 = scmp.lt.s32.totalorder %s198, 31
      %s202 = scalar_select %p201, %s198, 31
      %s203 = smul.addr %s200, 32
      %s204 = sadd.s32 %s202, %s203
      %s205 = smul.addr %s204, 8
      %s206 = scalar_lea.vmem %s3, %s205
      %s207 = smul.u32 16, %s19
      %s209 = scalar_lea.vmem %s197, 112
      %v210 = vld [vmem:[%s209] sm:$0x8]
      %v211 = vld [vmem:[%s209 + $0x4] sm:$0xf]
      %v212 = vld [vmem:[%s209 + $0x8] sm:$0xf]
      %v213 = vld [vmem:[%s209 + $0x10] sm:$0x8]
      %v214 = vld [vmem:[%s209 + $0x14] sm:$0xf]
      %v215 = vld [vmem:[%s209 + $0x18] sm:$0xf]
      %v216 = vld [vmem:[%s209 + $0x20] sm:$0x8]
      %v217 = vld [vmem:[%s209 + $0x24] sm:$0xf]
      %v218 = vld [vmem:[%s209 + $0x28] sm:$0xf]
      %v219 = vld [vmem:[%s209 + $0x30] sm:$0x8]
      %v220 = vld [vmem:[%s209 + $0x34] sm:$0xf]
      %v221 = vld [vmem:[%s209 + $0x38] sm:$0xf]
      %v222 = vld [vmem:[%s209 + $0x40] sm:$0x8]
      %v223 = vld [vmem:[%s209 + $0x44] sm:$0xf]
      %v224 = vld [vmem:[%s209 + $0x48] sm:$0xf]
      %v225 = vld [vmem:[%s209 + $0x50] sm:$0x8]
      %v226 = vld [vmem:[%s209 + $0x54] sm:$0xf]
      %v227 = vld [vmem:[%s209 + $0x58] sm:$0xf]
      %v228 = vld [vmem:[%s209 + $0x60] sm:$0x8]
      %v229 = vld [vmem:[%s209 + $0x64] sm:$0xf]
      %v230 = vld [vmem:[%s209 + $0x68] sm:$0xf]
      %v231 = vld [vmem:[%s209 + $0x70] sm:$0x8]
      %v232 = vld [vmem:[%s209 + $0x74] sm:$0xf]
      %v233 = vld [vmem:[%s209 + $0x78] sm:$0xf]
      %vm234 = vsmask.f32 256
      %vm235 = vsmask.f32 4368
      %vm236 = vmor %vm234, %vm235
      %v238 = vshrl.u32 %v210, 16
      %v240 = vrot.slane %v238, 7
      %v241 = vrot.slane %v240, 4
      %v243 = vshrl.u32 %v211, 16
      %v245 = vrot.slane %v243, 7
      %v246 = vshll.u32 %v211, 16
      %v248 = vor.u32 %v245, %v246
      %v249 = vsel %vm236, %v241, %v248
      %v250 = vrot.slane %v245, 4
      %v252 = vshrl.u32 %v212, 16
      %v254 = vrot.slane %v252, 7
      %v255 = vshll.u32 %v212, 16
      %v257 = vor.u32 %v254, %v255
      %v258 = vsel %vm236, %v250, %v257
      %v260 = vshrl.u32 %v213, 16
      %v262 = vrot.slane %v260, 7
      %v263 = vrot.slane %v262, 4
      %v265 = vshrl.u32 %v214, 16
      %v267 = vrot.slane %v265, 7
      %v268 = vshll.u32 %v214, 16
      %v270 = vor.u32 %v267, %v268
      %v271 = vsel %vm236, %v263, %v270
      %v272 = vrot.slane %v267, 4
      %v274 = vshrl.u32 %v215, 16
      %v276 = vrot.slane %v274, 7
      %v277 = vshll.u32 %v215, 16
      %v279 = vor.u32 %v276, %v277
      %v280 = vsel %vm236, %v272, %v279
      %v282 = vshrl.u32 %v216, 16
      %v284 = vrot.slane %v282, 7
      %v285 = vrot.slane %v284, 4
      %v287 = vshrl.u32 %v217, 16
      %v289 = vrot.slane %v287, 7
      %v290 = vshll.u32 %v217, 16
      %v292 = vor.u32 %v289, %v290
      %v293 = vsel %vm236, %v285, %v292
      %v294 = vrot.slane %v289, 4
      %v296 = vshrl.u32 %v218, 16
      %v298 = vrot.slane %v296, 7
      %v299 = vshll.u32 %v218, 16
      %v301 = vor.u32 %v298, %v299
      %v302 = vsel %vm236, %v294, %v301
      %v304 = vshrl.u32 %v219, 16
      %v306 = vrot.slane %v304, 7
      %v307 = vrot.slane %v306, 4
      %v309 = vshrl.u32 %v220, 16
      %v311 = vrot.slane %v309, 7
      %v312 = vshll.u32 %v220, 16
      %v314 = vor.u32 %v311, %v312
      %v315 = vsel %vm236, %v307, %v314
      %v316 = vrot.slane %v311, 4
      %v318 = vshrl.u32 %v221, 16
      %v320 = vrot.slane %v318, 7
      %v321 = vshll.u32 %v221, 16
      %v323 = vor.u32 %v320, %v321
      %v324 = vsel %vm236, %v316, %v323
      %v326 = vshrl.u32 %v222, 16
      %v328 = vrot.slane %v326, 7
      %v329 = vrot.slane %v328, 4
      %v331 = vshrl.u32 %v223, 16
      %v333 = vrot.slane %v331, 7
      %v334 = vshll.u32 %v223, 16
      %v336 = vor.u32 %v333, %v334
      %v337 = vsel %vm236, %v329, %v336
      %v338 = vrot.slane %v333, 4
      %v340 = vshrl.u32 %v224, 16
      %v342 = vrot.slane %v340, 7
      %v343 = vshll.u32 %v224, 16
      %v345 = vor.u32 %v342, %v343
      %v346 = vsel %vm236, %v338, %v345
      %v348 = vshrl.u32 %v225, 16
      %v350 = vrot.slane %v348, 7
      %v351 = vrot.slane %v350, 4
      %v353 = vshrl.u32 %v226, 16
      %v355 = vrot.slane %v353, 7
      %v356 = vshll.u32 %v226, 16
      %v358 = vor.u32 %v355, %v356
      %v359 = vsel %vm236, %v351, %v358
      %v360 = vrot.slane %v355, 4
      %v362 = vshrl.u32 %v227, 16
      %v364 = vrot.slane %v362, 7
      %v365 = vshll.u32 %v227, 16
      %v367 = vor.u32 %v364, %v365
      %v368 = vsel %vm236, %v360, %v367
      %v370 = vshrl.u32 %v228, 16
      %v372 = vrot.slane %v370, 7
      %v373 = vrot.slane %v372, 4
      %v375 = vshrl.u32 %v229, 16
      %v377 = vrot.slane %v375, 7
      %v378 = vshll.u32 %v229, 16
      %v380 = vor.u32 %v377, %v378
      %v381 = vsel %vm236, %v373, %v380
      %v382 = vrot.slane %v377, 4
      %v384 = vshrl.u32 %v230, 16
      %v386 = vrot.slane %v384, 7
      %v387 = vshll.u32 %v230, 16
      %v389 = vor.u32 %v386, %v387
      %v390 = vsel %vm236, %v382, %v389
      %v392 = vshrl.u32 %v231, 16
      %v394 = vrot.slane %v392, 7
      %v395 = vrot.slane %v394, 4
      %v397 = vshrl.u32 %v232, 16
      %v399 = vrot.slane %v397, 7
      %v400 = vshll.u32 %v232, 16
      %v402 = vor.u32 %v399, %v400
      %v403 = vsel %vm236, %v395, %v402
      %v404 = vrot.slane %v399, 4
      %v406 = vshrl.u32 %v233, 16
      %v408 = vrot.slane %v406, 7
      %v409 = vshll.u32 %v233, 16
      %v411 = vor.u32 %v408, %v409
      %v412 = vsel %vm236, %v404, %v411
      %v413 = vld [vmem:[%s209 + $0xc] sm:$0x1]
      %v414 = vld [vmem:[%s209 + $0x1c] sm:$0x1]
      %v415 = vld [vmem:[%s209 + $0x2c] sm:$0x1]
      %v416 = vld [vmem:[%s209 + $0x3c] sm:$0x1]
      %v417 = vld [vmem:[%s209 + $0x4c] sm:$0x1]
      %v418 = vld [vmem:[%s209 + $0x5c] sm:$0x1]
      %v419 = vld [vmem:[%s209 + $0x6c] sm:$0x1]
      %v420 = vld [vmem:[%s209 + $0x7c] sm:$0x1]
      %vm421 = vsmask.f32 3328
      %vm422 = vsmask.f32 7440
      %vm423 = vmor %vm421, %vm422
      %v424 = vrot.slane %v243, 4
      %v425 = vrot.slane %v246, 5
      %v426 = vor.u32 %v424, %v425
      %v427 = vrot.slane %v426, 4
      %v428 = vrot.slane %v255, 5
      %v429 = vsel %vm423, %v427, %v428
      %v430 = vrot.slane %v252, 4
      %v431 = vor.u32 %v430, %v428
      %v432 = vrot.slane %v431, 4
      %v434 = vshll.u32 %v413, 16
      %v436 = vrot.slane %v434, 5
      %v437 = vsel %vm423, %v432, %v436
      %v438 = vrot.slane %v265, 4
      %v439 = vrot.slane %v268, 5
      %v440 = vor.u32 %v438, %v439
      %v441 = vrot.slane %v440, 4
      %v442 = vrot.slane %v277, 5
      %v443 = vsel %vm423, %v441, %v442
      %v444 = vrot.slane %v274, 4
      %v445 = vor.u32 %v444, %v442
      %v446 = vrot.slane %v445, 4
      %v448 = vshll.u32 %v414, 16
      %v450 = vrot.slane %v448, 5
      %v451 = vsel %vm423, %v446, %v450
      %v452 = vrot.slane %v287, 4
      %v453 = vrot.slane %v290, 5
      %v454 = vor.u32 %v452, %v453
      %v455 = vrot.slane %v454, 4
      %v456 = vrot.slane %v299, 5
      %v457 = vsel %vm423, %v455, %v456
      %v458 = vrot.slane %v296, 4
      %v459 = vor.u32 %v458, %v456
      %v460 = vrot.slane %v459, 4
      %v462 = vshll.u32 %v415, 16
      %v464 = vrot.slane %v462, 5
      %v465 = vsel %vm423, %v460, %v464
      %v466 = vrot.slane %v309, 4
      %v467 = vrot.slane %v312, 5
      %v468 = vor.u32 %v466, %v467
      %v469 = vrot.slane %v468, 4
      %v470 = vrot.slane %v321, 5
      %v471 = vsel %vm423, %v469, %v470
      %v472 = vrot.slane %v318, 4
      %v473 = vor.u32 %v472, %v470
      %v474 = vrot.slane %v473, 4
      %v476 = vshll.u32 %v416, 16
      %v478 = vrot.slane %v476, 5
      %v479 = vsel %vm423, %v474, %v478
      %v480 = vrot.slane %v331, 4
      %v481 = vrot.slane %v334, 5
      %v482 = vor.u32 %v480, %v481
      %v483 = vrot.slane %v482, 4
      %v484 = vrot.slane %v343, 5
      %v485 = vsel %vm423, %v483, %v484
      %v486 = vrot.slane %v340, 4
      %v487 = vor.u32 %v486, %v484
      %v488 = vrot.slane %v487, 4
      %v490 = vshll.u32 %v417, 16
      %v492 = vrot.slane %v490, 5
      %v493 = vsel %vm423, %v488, %v492
      %v494 = vrot.slane %v353, 4
      %v495 = vrot.slane %v356, 5
      %v496 = vor.u32 %v494, %v495
      %v497 = vrot.slane %v496, 4
      %v498 = vrot.slane %v365, 5
      %v499 = vsel %vm423, %v497, %v498
      %v500 = vrot.slane %v362, 4
      %v501 = vor.u32 %v500, %v498
      %v502 = vrot.slane %v501, 4
      %v504 = vshll.u32 %v418, 16
      %v506 = vrot.slane %v504, 5
      %v507 = vsel %vm423, %v502, %v506
      %v508 = vrot.slane %v375, 4
      %v509 = vrot.slane %v378, 5
      %v510 = vor.u32 %v508, %v509
      %v511 = vrot.slane %v510, 4
      %v512 = vrot.slane %v387, 5
      %v513 = vsel %vm423, %v511, %v512
      %v514 = vrot.slane %v384, 4
      %v515 = vor.u32 %v514, %v512
      %v516 = vrot.slane %v515, 4
      %v518 = vshll.u32 %v419, 16
      %v520 = vrot.slane %v518, 5
      %v521 = vsel %vm423, %v516, %v520
      %v522 = vrot.slane %v397, 4
      %v523 = vrot.slane %v400, 5
      %v524 = vor.u32 %v522, %v523
      %v525 = vrot.slane %v524, 4
      %v526 = vrot.slane %v409, 5
      %v527 = vsel %vm423, %v525, %v526
      %v528 = vrot.slane %v406, 4
      %v529 = vor.u32 %v528, %v526
      %v530 = vrot.slane %v529, 4
      %v532 = vshll.u32 %v420, 16
      %v534 = vrot.slane %v532, 5
      %v535 = vsel %vm423, %v530, %v534
      %s536 = scalar_lea.vmem %s197, 128
      %v537 = vld [vmem:[%s536] sm:$0x8]
      %v538 = vld [vmem:[%s536 + $0x4] sm:$0xf]
      %v539 = vld [vmem:[%s536 + $0x8] sm:$0xf]
      %v540 = vld [vmem:[%s536 + $0x10] sm:$0x8]
      %v541 = vld [vmem:[%s536 + $0x14] sm:$0xf]
      %v542 = vld [vmem:[%s536 + $0x18] sm:$0xf]
      %v543 = vld [vmem:[%s536 + $0x20] sm:$0x8]
      %v544 = vld [vmem:[%s536 + $0x24] sm:$0xf]
      %v545 = vld [vmem:[%s536 + $0x28] sm:$0xf]
      %v546 = vld [vmem:[%s536 + $0x30] sm:$0x8]
      %v547 = vld [vmem:[%s536 + $0x34] sm:$0xf]
      %v548 = vld [vmem:[%s536 + $0x38] sm:$0xf]
      %v549 = vld [vmem:[%s536 + $0x40] sm:$0x8]
      %v550 = vld [vmem:[%s536 + $0x44] sm:$0xf]
      %v551 = vld [vmem:[%s536 + $0x48] sm:$0xf]
      %v552 = vld [vmem:[%s536 + $0x50] sm:$0x8]
      %v553 = vld [vmem:[%s536 + $0x54] sm:$0xf]
      %v554 = vld [vmem:[%s536 + $0x58] sm:$0xf]
      %v555 = vld [vmem:[%s536 + $0x60] sm:$0x8]
      %v556 = vld [vmem:[%s536 + $0x64] sm:$0xf]
      %v557 = vld [vmem:[%s536 + $0x68] sm:$0xf]
      %v558 = vld [vmem:[%s536 + $0x70] sm:$0x8]
      %v559 = vld [vmem:[%s536 + $0x74] sm:$0xf]
      %v560 = vld [vmem:[%s536 + $0x78] sm:$0xf]
      %v562 = vshrl.u32 %v537, 16
      %v564 = vrot.slane %v562, 7
      %v565 = vrot.slane %v564, 4
      %v567 = vshrl.u32 %v538, 16
      %v569 = vrot.slane %v567, 7
      %v570 = vshll.u32 %v538, 16
      %v572 = vor.u32 %v569, %v570
      %v573 = vsel %vm236, %v565, %v572
      %v574 = vrot.slane %v569, 4
      %v576 = vshrl.u32 %v539, 16
      %v578 = vrot.slane %v576, 7
      %v579 = vshll.u32 %v539, 16
      %v581 = vor.u32 %v578, %v579
      %v582 = vsel %vm236, %v574, %v581
      %v584 = vshrl.u32 %v540, 16
      %v586 = vrot.slane %v584, 7
      %v587 = vrot.slane %v586, 4
      %v589 = vshrl.u32 %v541, 16
      %v591 = vrot.slane %v589, 7
      %v592 = vshll.u32 %v541, 16
      %v594 = vor.u32 %v591, %v592
      %v595 = vsel %vm236, %v587, %v594
      %v596 = vrot.slane %v591, 4
      %v598 = vshrl.u32 %v542, 16
      %v600 = vrot.slane %v598, 7
      %v601 = vshll.u32 %v542, 16
      %v603 = vor.u32 %v600, %v601
      %v604 = vsel %vm236, %v596, %v603
      %v606 = vshrl.u32 %v543, 16
      %v608 = vrot.slane %v606, 7
      %v609 = vrot.slane %v608, 4
      %v611 = vshrl.u32 %v544, 16
      %v613 = vrot.slane %v611, 7
      %v614 = vshll.u32 %v544, 16
      %v616 = vor.u32 %v613, %v614
      %v617 = vsel %vm236, %v609, %v616
      %v618 = vrot.slane %v613, 4
      %v620 = vshrl.u32 %v545, 16
      %v622 = vrot.slane %v620, 7
      %v623 = vshll.u32 %v545, 16
      %v625 = vor.u32 %v622, %v623
      %v626 = vsel %vm236, %v618, %v625
      %v628 = vshrl.u32 %v546, 16
      %v630 = vrot.slane %v628, 7
      %v631 = vrot.slane %v630, 4
      %v633 = vshrl.u32 %v547, 16
      %v635 = vrot.slane %v633, 7
      %v636 = vshll.u32 %v547, 16
      %v638 = vor.u32 %v635, %v636
      %v639 = vsel %vm236, %v631, %v638
      %v640 = vrot.slane %v635, 4
      %v642 = vshrl.u32 %v548, 16
      %v644 = vrot.slane %v642, 7
      %v645 = vshll.u32 %v548, 16
      %v647 = vor.u32 %v644, %v645
      %v648 = vsel %vm236, %v640, %v647
      %v650 = vshrl.u32 %v549, 16
      %v652 = vrot.slane %v650, 7
      %v653 = vrot.slane %v652, 4
      %v655 = vshrl.u32 %v550, 16
      %v657 = vrot.slane %v655, 7
      %v658 = vshll.u32 %v550, 16
      %v660 = vor.u32 %v657, %v658
      %v661 = vsel %vm236, %v653, %v660
      %v662 = vrot.slane %v657, 4
      %v664 = vshrl.u32 %v551, 16
      %v666 = vrot.slane %v664, 7
      %v667 = vshll.u32 %v551, 16
      %v669 = vor.u32 %v666, %v667
      %v670 = vsel %vm236, %v662, %v669
      %v672 = vshrl.u32 %v552, 16
      %v674 = vrot.slane %v672, 7
      %v675 = vrot.slane %v674, 4
      %v677 = vshrl.u32 %v553, 16
      %v679 = vrot.slane %v677, 7
      %v680 = vshll.u32 %v553, 16
      %v682 = vor.u32 %v679, %v680
      %v683 = vsel %vm236, %v675, %v682
      %v684 = vrot.slane %v679, 4
      %v686 = vshrl.u32 %v554, 16
      %v688 = vrot.slane %v686, 7
      %v689 = vshll.u32 %v554, 16
      %v691 = vor.u32 %v688, %v689
      %v692 = vsel %vm236, %v684, %v691
      %v694 = vshrl.u32 %v555, 16
      %v696 = vrot.slane %v694, 7
      %v697 = vrot.slane %v696, 4
      %v699 = vshrl.u32 %v556, 16
      %v701 = vrot.slane %v699, 7
      %v702 = vshll.u32 %v556, 16
      %v704 = vor.u32 %v701, %v702
      %v705 = vsel %vm236, %v697, %v704
      %v706 = vrot.slane %v701, 4
      %v708 = vshrl.u32 %v557, 16
      %v710 = vrot.slane %v708, 7
      %v711 = vshll.u32 %v557, 16
      %v713 = vor.u32 %v710, %v711
      %v714 = vsel %vm236, %v706, %v713
      %v716 = vshrl.u32 %v558, 16
      %v718 = vrot.slane %v716, 7
      %v719 = vrot.slane %v718, 4
      %v721 = vshrl.u32 %v559, 16
      %v723 = vrot.slane %v721, 7
      %v724 = vshll.u32 %v559, 16
      %v726 = vor.u32 %v723, %v724
      %v727 = vsel %vm236, %v719, %v726
      %v728 = vrot.slane %v723, 4
      %v730 = vshrl.u32 %v560, 16
      %v732 = vrot.slane %v730, 7
      %v733 = vshll.u32 %v560, 16
      %v735 = vor.u32 %v732, %v733
      %v736 = vsel %vm236, %v728, %v735
      %v737 = vld [vmem:[%s536 + $0xc] sm:$0x1]
      %v738 = vld [vmem:[%s536 + $0x1c] sm:$0x1]
      %v739 = vld [vmem:[%s536 + $0x2c] sm:$0x1]
      %v740 = vld [vmem:[%s536 + $0x3c] sm:$0x1]
      %v741 = vld [vmem:[%s536 + $0x4c] sm:$0x1]
      %v742 = vld [vmem:[%s536 + $0x5c] sm:$0x1]
      %v743 = vld [vmem:[%s536 + $0x6c] sm:$0x1]
      %v744 = vld [vmem:[%s536 + $0x7c] sm:$0x1]
      %v745 = vrot.slane %v567, 4
      %v746 = vrot.slane %v570, 5
      %v747 = vor.u32 %v745, %v746
      %v748 = vrot.slane %v747, 4
      %v749 = vrot.slane %v579, 5
      %v750 = vsel %vm423, %v748, %v749
      %v751 = vrot.slane %v576, 4
      %v752 = vor.u32 %v751, %v749
      %v753 = vrot.slane %v752, 4
      %v755 = vshll.u32 %v737, 16
      %v757 = vrot.slane %v755, 5
      %v758 = vsel %vm423, %v753, %v757
      %v759 = vrot.slane %v589, 4
      %v760 = vrot.slane %v592, 5
      %v761 = vor.u32 %v759, %v760
      %v762 = vrot.slane %v761, 4
      %v763 = vrot.slane %v601, 5
      %v764 = vsel %vm423, %v762, %v763
      %v765 = vrot.slane %v598, 4
      %v766 = vor.u32 %v765, %v763
      %v767 = vrot.slane %v766, 4
      %v769 = vshll.u32 %v738, 16
      %v771 = vrot.slane %v769, 5
      %v772 = vsel %vm423, %v767, %v771
      %v773 = vrot.slane %v611, 4
      %v774 = vrot.slane %v614, 5
      %v775 = vor.u32 %v773, %v774
      %v776 = vrot.slane %v775, 4
      %v777 = vrot.slane %v623, 5
      %v778 = vsel %vm423, %v776, %v777
      %v779 = vrot.slane %v620, 4
      %v780 = vor.u32 %v779, %v777
      %v781 = vrot.slane %v780, 4
      %v783 = vshll.u32 %v739, 16
      %v785 = vrot.slane %v783, 5
      %v786 = vsel %vm423, %v781, %v785
      %v787 = vrot.slane %v633, 4
      %v788 = vrot.slane %v636, 5
      %v789 = vor.u32 %v787, %v788
      %v790 = vrot.slane %v789, 4
      %v791 = vrot.slane %v645, 5
      %v792 = vsel %vm423, %v790, %v791
      %v793 = vrot.slane %v642, 4
      %v794 = vor.u32 %v793, %v791
      %v795 = vrot.slane %v794, 4
      %v797 = vshll.u32 %v740, 16
      %v799 = vrot.slane %v797, 5
      %v800 = vsel %vm423, %v795, %v799
      %v801 = vrot.slane %v655, 4
      %v802 = vrot.slane %v658, 5
      %v803 = vor.u32 %v801, %v802
      %v804 = vrot.slane %v803, 4
      %v805 = vrot.slane %v667, 5
      %v806 = vsel %vm423, %v804, %v805
      %v807 = vrot.slane %v664, 4
      %v808 = vor.u32 %v807, %v805
      %v809 = vrot.slane %v808, 4
      %v811 = vshll.u32 %v741, 16
      %v813 = vrot.slane %v811, 5
      %v814 = vsel %vm423, %v809, %v813
      %v815 = vrot.slane %v677, 4
      %v816 = vrot.slane %v680, 5
      %v817 = vor.u32 %v815, %v816
      %v818 = vrot.slane %v817, 4
      %v819 = vrot.slane %v689, 5
      %v820 = vsel %vm423, %v818, %v819
      %v821 = vrot.slane %v686, 4
      %v822 = vor.u32 %v821, %v819
      %v823 = vrot.slane %v822, 4
      %v825 = vshll.u32 %v742, 16
      %v827 = vrot.slane %v825, 5
      %v828 = vsel %vm423, %v823, %v827
      %v829 = vrot.slane %v699, 4
      %v830 = vrot.slane %v702, 5
      %v831 = vor.u32 %v829, %v830
      %v832 = vrot.slane %v831, 4
      %v833 = vrot.slane %v711, 5
      %v834 = vsel %vm423, %v832, %v833
      %v835 = vrot.slane %v708, 4
      %v836 = vor.u32 %v835, %v833
      %v837 = vrot.slane %v836, 4
      %v839 = vshll.u32 %v743, 16
      %v841 = vrot.slane %v839, 5
      %v842 = vsel %vm423, %v837, %v841
      %v843 = vrot.slane %v721, 4
      %v844 = vrot.slane %v724, 5
      %v845 = vor.u32 %v843, %v844
      %v846 = vrot.slane %v845, 4
      %v847 = vrot.slane %v733, 5
      %v848 = vsel %vm423, %v846, %v847
      %v849 = vrot.slane %v730, 4
      %v850 = vor.u32 %v849, %v847
      %v851 = vrot.slane %v850, 4
      %v853 = vshll.u32 %v744, 16
      %v855 = vrot.slane %v853, 5
      %v856 = vsel %vm423, %v851, %v855
      %s857 = scalar_lea.vmem %s197, 144
      %v858 = vld [vmem:[%s857] sm:$0x8]
      %v859 = vld [vmem:[%s857 + $0x4] sm:$0xf]
      %v860 = vld [vmem:[%s857 + $0x8] sm:$0xf]
      %v861 = vld [vmem:[%s857 + $0x10] sm:$0x8]
      %v862 = vld [vmem:[%s857 + $0x14] sm:$0xf]
      %v863 = vld [vmem:[%s857 + $0x18] sm:$0xf]
      %v864 = vld [vmem:[%s857 + $0x20] sm:$0x8]
      %v865 = vld [vmem:[%s857 + $0x24] sm:$0xf]
      %v866 = vld [vmem:[%s857 + $0x28] sm:$0xf]
      %v867 = vld [vmem:[%s857 + $0x30] sm:$0x8]
      %v868 = vld [vmem:[%s857 + $0x34] sm:$0xf]
      %v869 = vld [vmem:[%s857 + $0x38] sm:$0xf]
      %v870 = vld [vmem:[%s857 + $0x40] sm:$0x8]
      %v871 = vld [vmem:[%s857 + $0x44] sm:$0xf]
      %v872 = vld [vmem:[%s857 + $0x48] sm:$0xf]
      %v873 = vld [vmem:[%s857 + $0x50] sm:$0x8]
      %v874 = vld [vmem:[%s857 + $0x54] sm:$0xf]
      %v875 = vld [vmem:[%s857 + $0x58] sm:$0xf]
      %v876 = vld [vmem:[%s857 + $0x60] sm:$0x8]
      %v877 = vld [vmem:[%s857 + $0x64] sm:$0xf]
      %v878 = vld [vmem:[%s857 + $0x68] sm:$0xf]
      %v879 = vld [vmem:[%s857 + $0x70] sm:$0x8]
      %v880 = vld [vmem:[%s857 + $0x74] sm:$0xf]
      %v881 = vld [vmem:[%s857 + $0x78] sm:$0xf]
      %v883 = vshrl.u32 %v858, 16
      %v885 = vrot.slane %v883, 7
      %v886 = vrot.slane %v885, 4
      %v888 = vshrl.u32 %v859, 16
      %v890 = vrot.slane %v888, 7
      %v891 = vshll.u32 %v859, 16
      %v893 = vor.u32 %v890, %v891
      %v894 = vsel %vm236, %v886, %v893
      %v895 = vrot.slane %v890, 4
      %v897 = vshrl.u32 %v860, 16
      %v899 = vrot.slane %v897, 7
      %v900 = vshll.u32 %v860, 16
      %v902 = vor.u32 %v899, %v900
      %v903 = vsel %vm236, %v895, %v902
      %v905 = vshrl.u32 %v861, 16
      %v907 = vrot.slane %v905, 7
      %v908 = vrot.slane %v907, 4
      %v910 = vshrl.u32 %v862, 16
      %v912 = vrot.slane %v910, 7
      %v913 = vshll.u32 %v862, 16
      %v915 = vor.u32 %v912, %v913
      %v916 = vsel %vm236, %v908, %v915
      %v917 = vrot.slane %v912, 4
      %v919 = vshrl.u32 %v863, 16
      %v921 = vrot.slane %v919, 7
      %v922 = vshll.u32 %v863, 16
      %v924 = vor.u32 %v921, %v922
      %v925 = vsel %vm236, %v917, %v924
      %v927 = vshrl.u32 %v864, 16
      %v929 = vrot.slane %v927, 7
      %v930 = vrot.slane %v929, 4
      %v932 = vshrl.u32 %v865, 16
      %v934 = vrot.slane %v932, 7
      %v935 = vshll.u32 %v865, 16
      %v937 = vor.u32 %v934, %v935
      %v938 = vsel %vm236, %v930, %v937
      %v939 = vrot.slane %v934, 4
      %v941 = vshrl.u32 %v866, 16
      %v943 = vrot.slane %v941, 7
      %v944 = vshll.u32 %v866, 16
      %v946 = vor.u32 %v943, %v944
      %v947 = vsel %vm236, %v939, %v946
      %v949 = vshrl.u32 %v867, 16
      %v951 = vrot.slane %v949, 7
      %v952 = vrot.slane %v951, 4
      %v954 = vshrl.u32 %v868, 16
      %v956 = vrot.slane %v954, 7
      %v957 = vshll.u32 %v868, 16
      %v959 = vor.u32 %v956, %v957
      %v960 = vsel %vm236, %v952, %v959
      %v961 = vrot.slane %v956, 4
      %v963 = vshrl.u32 %v869, 16
      %v965 = vrot.slane %v963, 7
      %v966 = vshll.u32 %v869, 16
      %v968 = vor.u32 %v965, %v966
      %v969 = vsel %vm236, %v961, %v968
      %v971 = vshrl.u32 %v870, 16
      %v973 = vrot.slane %v971, 7
      %v974 = vrot.slane %v973, 4
      %v976 = vshrl.u32 %v871, 16
      %v978 = vrot.slane %v976, 7
      %v979 = vshll.u32 %v871, 16
      %v981 = vor.u32 %v978, %v979
      %v982 = vsel %vm236, %v974, %v981
      %v983 = vrot.slane %v978, 4
      %v985 = vshrl.u32 %v872, 16
      %v987 = vrot.slane %v985, 7
      %v988 = vshll.u32 %v872, 16
      %v990 = vor.u32 %v987, %v988
      %v991 = vsel %vm236, %v983, %v990
      %v993 = vshrl.u32 %v873, 16
      %v995 = vrot.slane %v993, 7
      %v996 = vrot.slane %v995, 4
      %v998 = vshrl.u32 %v874, 16
      %v1000 = vrot.slane %v998, 7
      %v1001 = vshll.u32 %v874, 16
      %v1003 = vor.u32 %v1000, %v1001
      %v1004 = vsel %vm236, %v996, %v1003
      %v1005 = vrot.slane %v1000, 4
      %v1007 = vshrl.u32 %v875, 16
      %v1009 = vrot.slane %v1007, 7
      %v1010 = vshll.u32 %v875, 16
      %v1012 = vor.u32 %v1009, %v1010
      %v1013 = vsel %vm236, %v1005, %v1012
      %v1015 = vshrl.u32 %v876, 16
      %v1017 = vrot.slane %v1015, 7
      %v1018 = vrot.slane %v1017, 4
      %v1020 = vshrl.u32 %v877, 16
      %v1022 = vrot.slane %v1020, 7
      %v1023 = vshll.u32 %v877, 16
      %v1025 = vor.u32 %v1022, %v1023
      %v1026 = vsel %vm236, %v1018, %v1025
      %v1027 = vrot.slane %v1022, 4
      %v1029 = vshrl.u32 %v878, 16
      %v1031 = vrot.slane %v1029, 7
      %v1032 = vshll.u32 %v878, 16
      %v1034 = vor.u32 %v1031, %v1032
      %v1035 = vsel %vm236, %v1027, %v1034
      %v1037 = vshrl.u32 %v879, 16
      %v1039 = vrot.slane %v1037, 7
      %v1040 = vrot.slane %v1039, 4
      %v1042 = vshrl.u32 %v880, 16
      %v1044 = vrot.slane %v1042, 7
      %v1045 = vshll.u32 %v880, 16
      %v1047 = vor.u32 %v1044, %v1045
      %v1048 = vsel %vm236, %v1040, %v1047
      %v1049 = vrot.slane %v1044, 4
      %v1051 = vshrl.u32 %v881, 16
      %v1053 = vrot.slane %v1051, 7
      %v1054 = vshll.u32 %v881, 16
      %v1056 = vor.u32 %v1053, %v1054
      %v1057 = vsel %vm236, %v1049, %v1056
      %v1058 = vld [vmem:[%s857 + $0xc] sm:$0x1]
      %v1059 = vld [vmem:[%s857 + $0x1c] sm:$0x1]
      %v1060 = vld [vmem:[%s857 + $0x2c] sm:$0x1]
      %v1061 = vld [vmem:[%s857 + $0x3c] sm:$0x1]
      %v1062 = vld [vmem:[%s857 + $0x4c] sm:$0x1]
      %v1063 = vld [vmem:[%s857 + $0x5c] sm:$0x1]
      %v1064 = vld [vmem:[%s857 + $0x6c] sm:$0x1]
      %v1065 = vld [vmem:[%s857 + $0x7c] sm:$0x1]
      %v1066 = vrot.slane %v888, 4
      %v1067 = vrot.slane %v891, 5
      %v1068 = vor.u32 %v1066, %v1067
      %v1069 = vrot.slane %v1068, 4
      %v1070 = vrot.slane %v900, 5
      %v1071 = vsel %vm423, %v1069, %v1070
      %v1072 = vrot.slane %v897, 4
      %v1073 = vor.u32 %v1072, %v1070
      %v1074 = vrot.slane %v1073, 4
      %v1076 = vshll.u32 %v1058, 16
      %v1078 = vrot.slane %v1076, 5
      %v1079 = vsel %vm423, %v1074, %v1078
      %v1080 = vrot.slane %v910, 4
      %v1081 = vrot.slane %v913, 5
      %v1082 = vor.u32 %v1080, %v1081
      %v1083 = vrot.slane %v1082, 4
      %v1084 = vrot.slane %v922, 5
      %v1085 = vsel %vm423, %v1083, %v1084
      %v1086 = vrot.slane %v919, 4
      %v1087 = vor.u32 %v1086, %v1084
      %v1088 = vrot.slane %v1087, 4
      %v1090 = vshll.u32 %v1059, 16
      %v1092 = vrot.slane %v1090, 5
      %v1093 = vsel %vm423, %v1088, %v1092
      %v1094 = vrot.slane %v932, 4
      %v1095 = vrot.slane %v935, 5
      %v1096 = vor.u32 %v1094, %v1095
      %v1097 = vrot.slane %v1096, 4
      %v1098 = vrot.slane %v944, 5
      %v1099 = vsel %vm423, %v1097, %v1098
      %v1100 = vrot.slane %v941, 4
      %v1101 = vor.u32 %v1100, %v1098
      %v1102 = vrot.slane %v1101, 4
      %v1104 = vshll.u32 %v1060, 16
      %v1106 = vrot.slane %v1104, 5
      %v1107 = vsel %vm423, %v1102, %v1106
      %v1108 = vrot.slane %v954, 4
      %v1109 = vrot.slane %v957, 5
      %v1110 = vor.u32 %v1108, %v1109
      %v1111 = vrot.slane %v1110, 4
      %v1112 = vrot.slane %v966, 5
      %v1113 = vsel %vm423, %v1111, %v1112
      %v1114 = vrot.slane %v963, 4
      %v1115 = vor.u32 %v1114, %v1112
      %v1116 = vrot.slane %v1115, 4
      %v1118 = vshll.u32 %v1061, 16
      %v1120 = vrot.slane %v1118, 5
      %v1121 = vsel %vm423, %v1116, %v1120
      %v1122 = vrot.slane %v976, 4
      %v1123 = vrot.slane %v979, 5
      %v1124 = vor.u32 %v1122, %v1123
      %v1125 = vrot.slane %v1124, 4
      %v1126 = vrot.slane %v988, 5
      %v1127 = vsel %vm423, %v1125, %v1126
      %v1128 = vrot.slane %v985, 4
      %v1129 = vor.u32 %v1128, %v1126
      %v1130 = vrot.slane %v1129, 4
      %v1132 = vshll.u32 %v1062, 16
      %v1134 = vrot.slane %v1132, 5
      %v1135 = vsel %vm423, %v1130, %v1134
      %v1136 = vrot.slane %v998, 4
      %v1137 = vrot.slane %v1001, 5
      %v1138 = vor.u32 %v1136, %v1137
      %v1139 = vrot.slane %v1138, 4
      %v1140 = vrot.slane %v1010, 5
      %v1141 = vsel %vm423, %v1139, %v1140
      %v1142 = vrot.slane %v1007, 4
      %v1143 = vor.u32 %v1142, %v1140
      %v1144 = vrot.slane %v1143, 4
      %v1146 = vshll.u32 %v1063, 16
      %v1148 = vrot.slane %v1146, 5
      %v1149 = vsel %vm423, %v1144, %v1148
      %v1150 = vrot.slane %v1020, 4
      %v1151 = vrot.slane %v1023, 5
      %v1152 = vor.u32 %v1150, %v1151
      %v1153 = vrot.slane %v1152, 4
      %v1154 = vrot.slane %v1032, 5
      %v1155 = vsel %vm423, %v1153, %v1154
      %v1156 = vrot.slane %v1029, 4
      %v1157 = vor.u32 %v1156, %v1154
      %v1158 = vrot.slane %v1157, 4
      %v1160 = vshll.u32 %v1064, 16
      %v1162 = vrot.slane %v1160, 5
      %v1163 = vsel %vm423, %v1158, %v1162
      %v1164 = vrot.slane %v1042, 4
      %v1165 = vrot.slane %v1045, 5
      %v1166 = vor.u32 %v1164, %v1165
      %v1167 = vrot.slane %v1166, 4
      %v1168 = vrot.slane %v1054, 5
      %v1169 = vsel %vm423, %v1167, %v1168
      %v1170 = vrot.slane %v1051, 4
      %v1171 = vor.u32 %v1170, %v1168
      %v1172 = vrot.slane %v1171, 4
      %v1174 = vshll.u32 %v1065, 16
      %v1176 = vrot.slane %v1174, 5
      %v1177 = vsel %vm423, %v1172, %v1176
      %v1178 = vunpack.c.l.b16 %v249
      %v1179 = vunpack.c.l.b16 %v258
      %v1180 = vunpack.c.l.b16 %v271
      %v1181 = vunpack.c.l.b16 %v280
      %v1182 = vunpack.c.l.b16 %v293
      %v1183 = vunpack.c.l.b16 %v302
      %v1184 = vunpack.c.l.b16 %v315
      %v1185 = vunpack.c.l.b16 %v324
      %v1186 = vunpack.c.l.b16 %v337
      %v1187 = vunpack.c.l.b16 %v346
      %v1188 = vunpack.c.l.b16 %v359
      %v1189 = vunpack.c.l.b16 %v368
      %v1190 = vunpack.c.l.b16 %v381
      %v1191 = vunpack.c.l.b16 %v390
      %v1192 = vunpack.c.l.b16 %v403
      %v1193 = vunpack.c.l.b16 %v412
      %v1194 = vpack.c.b16 %v1179, %v1178
      %v1195 = vpack.c.b16 %v1181, %v1180
      %v1196 = vpack.c.b16 %v1183, %v1182
      %v1197 = vpack.c.b16 %v1185, %v1184
      %v1198 = vpack.c.b16 %v1187, %v1186
      %v1199 = vpack.c.b16 %v1189, %v1188
      %v1200 = vpack.c.b16 %v1191, %v1190
      %v1201 = vpack.c.b16 %v1193, %v1192
      %v1218 = vunpack.c.l.b16 %v211
      %v1219 = vunpack.c.l.b16 %v212
      %v1220 = vunpack.c.l.b16 %v214
      %v1221 = vunpack.c.l.b16 %v215
      %v1222 = vunpack.c.l.b16 %v217
      %v1223 = vunpack.c.l.b16 %v218
      %v1224 = vunpack.c.l.b16 %v220
      %v1225 = vunpack.c.l.b16 %v221
      %v1226 = vunpack.c.l.b16 %v223
      %v1227 = vunpack.c.l.b16 %v224
      %v1228 = vunpack.c.l.b16 %v226
      %v1229 = vunpack.c.l.b16 %v227
      %v1230 = vunpack.c.l.b16 %v229
      %v1231 = vunpack.c.l.b16 %v230
      %v1232 = vunpack.c.l.b16 %v232
      %v1233 = vunpack.c.l.b16 %v233
      %v1234 = vpack.c.b16 %v1219, %v1218
      %v1235 = vpack.c.b16 %v1221, %v1220
      %v1236 = vpack.c.b16 %v1223, %v1222
      %v1237 = vpack.c.b16 %v1225, %v1224
      %v1238 = vpack.c.b16 %v1227, %v1226
      %v1239 = vpack.c.b16 %v1229, %v1228
      %v1240 = vpack.c.b16 %v1231, %v1230
      %v1241 = vpack.c.b16 %v1233, %v1232
      %1242 = vrot.lane.b32.xlu0 %v1234, 16
      %v1243 = vpop.permute.xlu0 %1242
      %1244 = vrot.lane.b32.xlu0 %v1235, 16
      %v1245 = vpop.permute.xlu0 %1244
      %1246 = vrot.lane.b32.xlu0 %v1236, 16
      %v1247 = vpop.permute.xlu0 %1246
      %1248 = vrot.lane.b32.xlu0 %v1237, 16
      %v1249 = vpop.permute.xlu0 %1248
      %1250 = vrot.lane.b32.xlu0 %v1238, 16
      %v1251 = vpop.permute.xlu0 %1250
      %1252 = vrot.lane.b32.xlu0 %v1239, 16
      %v1253 = vpop.permute.xlu0 %1252
      %1254 = vrot.lane.b32.xlu0 %v1240, 16
      %v1255 = vpop.permute.xlu0 %1254
      %1256 = vrot.lane.b32.xlu0 %v1241, 16
      %v1257 = vpop.permute.xlu0 %1256
      %v1258 = vunpack.c.l.b16 %v429
      %v1259 = vunpack.c.l.b16 %v437
      %v1260 = vunpack.c.l.b16 %v443
      %v1261 = vunpack.c.l.b16 %v451
      %v1262 = vunpack.c.l.b16 %v457
      %v1263 = vunpack.c.l.b16 %v465
      %v1264 = vunpack.c.l.b16 %v471
      %v1265 = vunpack.c.l.b16 %v479
      %v1266 = vunpack.c.l.b16 %v485
      %v1267 = vunpack.c.l.b16 %v493
      %v1268 = vunpack.c.l.b16 %v499
      %v1269 = vunpack.c.l.b16 %v507
      %v1270 = vunpack.c.l.b16 %v513
      %v1271 = vunpack.c.l.b16 %v521
      %v1272 = vunpack.c.l.b16 %v527
      %v1273 = vunpack.c.l.b16 %v535
      %v1274 = vpack.c.b16 %v1259, %v1258
      %v1275 = vpack.c.b16 %v1261, %v1260
      %v1276 = vpack.c.b16 %v1263, %v1262
      %v1277 = vpack.c.b16 %v1265, %v1264
      %v1278 = vpack.c.b16 %v1267, %v1266
      %v1279 = vpack.c.b16 %v1269, %v1268
      %v1280 = vpack.c.b16 %v1271, %v1270
      %v1281 = vpack.c.b16 %v1273, %v1272
      %1282 = vrot.lane.b32.xlu0 %v1274, 32
      %v1283 = vpop.permute.xlu0 %1282
      %1284 = vrot.lane.b32.xlu0 %v1275, 32
      %v1285 = vpop.permute.xlu0 %1284
      %1286 = vrot.lane.b32.xlu0 %v1276, 32
      %v1287 = vpop.permute.xlu0 %1286
      %1288 = vrot.lane.b32.xlu0 %v1277, 32
      %v1289 = vpop.permute.xlu0 %1288
      %1290 = vrot.lane.b32.xlu0 %v1278, 32
      %v1291 = vpop.permute.xlu0 %1290
      %1292 = vrot.lane.b32.xlu0 %v1279, 32
      %v1293 = vpop.permute.xlu0 %1292
      %1294 = vrot.lane.b32.xlu0 %v1280, 32
      %v1295 = vpop.permute.xlu0 %1294
      %1296 = vrot.lane.b32.xlu0 %v1281, 32
      %v1297 = vpop.permute.xlu0 %1296
      %v1298 = vunpack.c.l.b16 %v573
      %v1299 = vunpack.c.l.b16 %v582
      %v1300 = vunpack.c.l.b16 %v595
      %v1301 = vunpack.c.l.b16 %v604
      %v1302 = vunpack.c.l.b16 %v617
      %v1303 = vunpack.c.l.b16 %v626
      %v1304 = vunpack.c.l.b16 %v639
      %v1305 = vunpack.c.l.b16 %v648
      %v1306 = vunpack.c.l.b16 %v661
      %v1307 = vunpack.c.l.b16 %v670
      %v1308 = vunpack.c.l.b16 %v683
      %v1309 = vunpack.c.l.b16 %v692
      %v1310 = vunpack.c.l.b16 %v705
      %v1311 = vunpack.c.l.b16 %v714
      %v1312 = vunpack.c.l.b16 %v727
      %v1313 = vunpack.c.l.b16 %v736
      %v1314 = vpack.c.b16 %v1299, %v1298
      %v1315 = vpack.c.b16 %v1301, %v1300
      %v1316 = vpack.c.b16 %v1303, %v1302
      %v1317 = vpack.c.b16 %v1305, %v1304
      %v1318 = vpack.c.b16 %v1307, %v1306
      %v1319 = vpack.c.b16 %v1309, %v1308
      %v1320 = vpack.c.b16 %v1311, %v1310
      %v1321 = vpack.c.b16 %v1313, %v1312
      %1322 = vrot.lane.b32.xlu0 %v1314, 48
      %v1323 = vpop.permute.xlu0 %1322
      %1324 = vrot.lane.b32.xlu0 %v1315, 48
      %v1325 = vpop.permute.xlu0 %1324
      %1326 = vrot.lane.b32.xlu0 %v1316, 48
      %v1327 = vpop.permute.xlu0 %1326
      %1328 = vrot.lane.b32.xlu0 %v1317, 48
      %v1329 = vpop.permute.xlu0 %1328
      %1330 = vrot.lane.b32.xlu0 %v1318, 48
      %v1331 = vpop.permute.xlu0 %1330
      %1332 = vrot.lane.b32.xlu0 %v1319, 48
      %v1333 = vpop.permute.xlu0 %1332
      %1334 = vrot.lane.b32.xlu0 %v1320, 48
      %v1335 = vpop.permute.xlu0 %1334
      %1336 = vrot.lane.b32.xlu0 %v1321, 48
      %v1337 = vpop.permute.xlu0 %1336
      %v1354 = vunpack.c.l.b16 %v538
      %v1355 = vunpack.c.l.b16 %v539
      %v1356 = vunpack.c.l.b16 %v541
      %v1357 = vunpack.c.l.b16 %v542
      %v1358 = vunpack.c.l.b16 %v544
      %v1359 = vunpack.c.l.b16 %v545
      %v1360 = vunpack.c.l.b16 %v547
      %v1361 = vunpack.c.l.b16 %v548
      %v1362 = vunpack.c.l.b16 %v550
      %v1363 = vunpack.c.l.b16 %v551
      %v1364 = vunpack.c.l.b16 %v553
      %v1365 = vunpack.c.l.b16 %v554
      %v1366 = vunpack.c.l.b16 %v556
      %v1367 = vunpack.c.l.b16 %v557
      %v1368 = vunpack.c.l.b16 %v559
      %v1369 = vunpack.c.l.b16 %v560
      %v1370 = vpack.c.b16 %v1355, %v1354
      %v1371 = vpack.c.b16 %v1357, %v1356
      %v1372 = vpack.c.b16 %v1359, %v1358
      %v1373 = vpack.c.b16 %v1361, %v1360
      %v1374 = vpack.c.b16 %v1363, %v1362
      %v1375 = vpack.c.b16 %v1365, %v1364
      %v1376 = vpack.c.b16 %v1367, %v1366
      %v1377 = vpack.c.b16 %v1369, %v1368
      %1378 = vrot.lane.b32.xlu0 %v1370, 64
      %v1379 = vpop.permute.xlu0 %1378
      %1380 = vrot.lane.b32.xlu0 %v1371, 64
      %v1381 = vpop.permute.xlu0 %1380
      %1382 = vrot.lane.b32.xlu0 %v1372, 64
      %v1383 = vpop.permute.xlu0 %1382
      %1384 = vrot.lane.b32.xlu0 %v1373, 64
      %v1385 = vpop.permute.xlu0 %1384
      %1386 = vrot.lane.b32.xlu0 %v1374, 64
      %v1387 = vpop.permute.xlu0 %1386
      %1388 = vrot.lane.b32.xlu0 %v1375, 64
      %v1389 = vpop.permute.xlu0 %1388
      %1390 = vrot.lane.b32.xlu0 %v1376, 64
      %v1391 = vpop.permute.xlu0 %1390
      %1392 = vrot.lane.b32.xlu0 %v1377, 64
      %v1393 = vpop.permute.xlu0 %1392
      %v1394 = vunpack.c.l.b16 %v750
      %v1395 = vunpack.c.l.b16 %v758
      %v1396 = vunpack.c.l.b16 %v764
      %v1397 = vunpack.c.l.b16 %v772
      %v1398 = vunpack.c.l.b16 %v778
      %v1399 = vunpack.c.l.b16 %v786
      %v1400 = vunpack.c.l.b16 %v792
      %v1401 = vunpack.c.l.b16 %v800
      %v1402 = vunpack.c.l.b16 %v806
      %v1403 = vunpack.c.l.b16 %v814
      %v1404 = vunpack.c.l.b16 %v820
      %v1405 = vunpack.c.l.b16 %v828
      %v1406 = vunpack.c.l.b16 %v834
      %v1407 = vunpack.c.l.b16 %v842
      %v1408 = vunpack.c.l.b16 %v848
      %v1409 = vunpack.c.l.b16 %v856
      %v1410 = vpack.c.b16 %v1395, %v1394
      %v1411 = vpack.c.b16 %v1397, %v1396
      %v1412 = vpack.c.b16 %v1399, %v1398
      %v1413 = vpack.c.b16 %v1401, %v1400
      %v1414 = vpack.c.b16 %v1403, %v1402
      %v1415 = vpack.c.b16 %v1405, %v1404
      %v1416 = vpack.c.b16 %v1407, %v1406
      %v1417 = vpack.c.b16 %v1409, %v1408
      %1418 = vrot.lane.b32.xlu0 %v1410, 80
      %v1419 = vpop.permute.xlu0 %1418
      %1420 = vrot.lane.b32.xlu0 %v1411, 80
      %v1421 = vpop.permute.xlu0 %1420
      %1422 = vrot.lane.b32.xlu0 %v1412, 80
      %v1423 = vpop.permute.xlu0 %1422
      %1424 = vrot.lane.b32.xlu0 %v1413, 80
      %v1425 = vpop.permute.xlu0 %1424
      %1426 = vrot.lane.b32.xlu0 %v1414, 80
      %v1427 = vpop.permute.xlu0 %1426
      %1428 = vrot.lane.b32.xlu0 %v1415, 80
      %v1429 = vpop.permute.xlu0 %1428
      %1430 = vrot.lane.b32.xlu0 %v1416, 80
      %v1431 = vpop.permute.xlu0 %1430
      %1432 = vrot.lane.b32.xlu0 %v1417, 80
      %v1433 = vpop.permute.xlu0 %1432
      %v1434 = vunpack.c.l.b16 %v894
      %v1435 = vunpack.c.l.b16 %v903
      %v1436 = vunpack.c.l.b16 %v916
      %v1437 = vunpack.c.l.b16 %v925
      %v1438 = vunpack.c.l.b16 %v938
      %v1439 = vunpack.c.l.b16 %v947
      %v1440 = vunpack.c.l.b16 %v960
      %v1441 = vunpack.c.l.b16 %v969
      %v1442 = vunpack.c.l.b16 %v982
      %v1443 = vunpack.c.l.b16 %v991
      %v1444 = vunpack.c.l.b16 %v1004
      %v1445 = vunpack.c.l.b16 %v1013
      %v1446 = vunpack.c.l.b16 %v1026
      %v1447 = vunpack.c.l.b16 %v1035
      %v1448 = vunpack.c.l.b16 %v1048
      %v1449 = vunpack.c.l.b16 %v1057
      %v1450 = vpack.c.b16 %v1435, %v1434
      %v1451 = vpack.c.b16 %v1437, %v1436
      %v1452 = vpack.c.b16 %v1439, %v1438
      %v1453 = vpack.c.b16 %v1441, %v1440
      %v1454 = vpack.c.b16 %v1443, %v1442
      %v1455 = vpack.c.b16 %v1445, %v1444
      %v1456 = vpack.c.b16 %v1447, %v1446
      %v1457 = vpack.c.b16 %v1449, %v1448
      %1458 = vrot.lane.b32.xlu0 %v1450, 96
      %v1459 = vpop.permute.xlu0 %1458
      %1460 = vrot.lane.b32.xlu0 %v1451, 96
      %v1461 = vpop.permute.xlu0 %1460
      %1462 = vrot.lane.b32.xlu0 %v1452, 96
      %v1463 = vpop.permute.xlu0 %1462
      %1464 = vrot.lane.b32.xlu0 %v1453, 96
      %v1465 = vpop.permute.xlu0 %1464
      %1466 = vrot.lane.b32.xlu0 %v1454, 96
      %v1467 = vpop.permute.xlu0 %1466
      %1468 = vrot.lane.b32.xlu0 %v1455, 96
      %v1469 = vpop.permute.xlu0 %1468
      %1470 = vrot.lane.b32.xlu0 %v1456, 96
      %v1471 = vpop.permute.xlu0 %1470
      %1472 = vrot.lane.b32.xlu0 %v1457, 96
      %v1473 = vpop.permute.xlu0 %1472
      %v1490 = vunpack.c.l.b16 %v859
      %v1491 = vunpack.c.l.b16 %v860
      %v1492 = vunpack.c.l.b16 %v862
      %v1493 = vunpack.c.l.b16 %v863
      %v1494 = vunpack.c.l.b16 %v865
      %v1495 = vunpack.c.l.b16 %v866
      %v1496 = vunpack.c.l.b16 %v868
      %v1497 = vunpack.c.l.b16 %v869
      %v1498 = vunpack.c.l.b16 %v871
      %v1499 = vunpack.c.l.b16 %v872
      %v1500 = vunpack.c.l.b16 %v874
      %v1501 = vunpack.c.l.b16 %v875
      %v1502 = vunpack.c.l.b16 %v877
      %v1503 = vunpack.c.l.b16 %v878
      %v1504 = vunpack.c.l.b16 %v880
      %v1505 = vunpack.c.l.b16 %v881
      %v1506 = vpack.c.b16 %v1491, %v1490
      %v1507 = vpack.c.b16 %v1493, %v1492
      %v1508 = vpack.c.b16 %v1495, %v1494
      %v1509 = vpack.c.b16 %v1497, %v1496
      %v1510 = vpack.c.b16 %v1499, %v1498
      %v1511 = vpack.c.b16 %v1501, %v1500
      %v1512 = vpack.c.b16 %v1503, %v1502
      %v1513 = vpack.c.b16 %v1505, %v1504
      %1514 = vrot.lane.b32.xlu0 %v1506, 112
      %v1515 = vpop.permute.xlu0 %1514
      %1516 = vrot.lane.b32.xlu0 %v1507, 112
      %v1517 = vpop.permute.xlu0 %1516
      %1518 = vrot.lane.b32.xlu0 %v1508, 112
      %v1519 = vpop.permute.xlu0 %1518
      %1520 = vrot.lane.b32.xlu0 %v1509, 112
      %v1521 = vpop.permute.xlu0 %1520
      %1522 = vrot.lane.b32.xlu0 %v1510, 112
      %v1523 = vpop.permute.xlu0 %1522
      %1524 = vrot.lane.b32.xlu0 %v1511, 112
      %v1525 = vpop.permute.xlu0 %1524
      %1526 = vrot.lane.b32.xlu0 %v1512, 112
      %v1527 = vpop.permute.xlu0 %1526
      %1528 = vrot.lane.b32.xlu0 %v1513, 112
      %v1529 = vpop.permute.xlu0 %1528
      %v1530 = vunpack.c.l.b16 %v1071
      %v1531 = vunpack.c.l.b16 %v1079
      %v1532 = vunpack.c.l.b16 %v1085
      %v1533 = vunpack.c.l.b16 %v1093
      %v1534 = vunpack.c.l.b16 %v1099
      %v1535 = vunpack.c.l.b16 %v1107
      %v1536 = vunpack.c.l.b16 %v1113
      %v1537 = vunpack.c.l.b16 %v1121
      %v1538 = vunpack.c.l.b16 %v1127
      %v1539 = vunpack.c.l.b16 %v1135
      %v1540 = vunpack.c.l.b16 %v1141
      %v1541 = vunpack.c.l.b16 %v1149
      %v1542 = vunpack.c.l.b16 %v1155
      %v1543 = vunpack.c.l.b16 %v1163
      %v1544 = vunpack.c.l.b16 %v1169
      %v1545 = vunpack.c.l.b16 %v1177
      %v1546 = vpack.c.b16 %v1531, %v1530
      %v1547 = vpack.c.b16 %v1533, %v1532
      %v1548 = vpack.c.b16 %v1535, %v1534
      %v1549 = vpack.c.b16 %v1537, %v1536
      %v1550 = vpack.c.b16 %v1539, %v1538
      %v1551 = vpack.c.b16 %v1541, %v1540
      %v1552 = vpack.c.b16 %v1543, %v1542
      %v1553 = vpack.c.b16 %v1545, %v1544
      %vm1554 = vcmask 130048
      %v1557 = vsel %vm1554, %v1194, %v1243
      %v1560 = vsel %vm1554, %v1195, %v1245
      %v1563 = vsel %vm1554, %v1196, %v1247
      %v1566 = vsel %vm1554, %v1197, %v1249
      %v1569 = vsel %vm1554, %v1198, %v1251
      %v1572 = vsel %vm1554, %v1199, %v1253
      %v1575 = vsel %vm1554, %v1200, %v1255
      %v1578 = vsel %vm1554, %v1201, %v1257
      %vm1579 = vcmask 261120
      %v1581 = vsel %vm1579, %v1557, %v1283
      %v1583 = vsel %vm1579, %v1560, %v1285
      %v1585 = vsel %vm1579, %v1563, %v1287
      %v1587 = vsel %vm1579, %v1566, %v1289
      %v1589 = vsel %vm1579, %v1569, %v1291
      %v1591 = vsel %vm1579, %v1572, %v1293
      %v1593 = vsel %vm1579, %v1575, %v1295
      %v1595 = vsel %vm1579, %v1578, %v1297
      %vm1596 = vcmask 392192
      %v1598 = vsel %vm1596, %v1581, %v1323
      %v1600 = vsel %vm1596, %v1583, %v1325
      %v1602 = vsel %vm1596, %v1585, %v1327
      %v1604 = vsel %vm1596, %v1587, %v1329
      %v1606 = vsel %vm1596, %v1589, %v1331
      %v1608 = vsel %vm1596, %v1591, %v1333
      %v1610 = vsel %vm1596, %v1593, %v1335
      %v1612 = vsel %vm1596, %v1595, %v1337
      %vm1613 = vcmask 523264
      %v1615 = vsel %vm1613, %v1598, %v1379
      %v1617 = vsel %vm1613, %v1600, %v1381
      %v1619 = vsel %vm1613, %v1602, %v1383
      %v1621 = vsel %vm1613, %v1604, %v1385
      %v1623 = vsel %vm1613, %v1606, %v1387
      %v1625 = vsel %vm1613, %v1608, %v1389
      %v1627 = vsel %vm1613, %v1610, %v1391
      %v1629 = vsel %vm1613, %v1612, %v1393
      %vm1630 = vcmask 654336
      %v1632 = vsel %vm1630, %v1615, %v1419
      %v1634 = vsel %vm1630, %v1617, %v1421
      %v1636 = vsel %vm1630, %v1619, %v1423
      %v1638 = vsel %vm1630, %v1621, %v1425
      %v1640 = vsel %vm1630, %v1623, %v1427
      %v1642 = vsel %vm1630, %v1625, %v1429
      %v1644 = vsel %vm1630, %v1627, %v1431
      %v1646 = vsel %vm1630, %v1629, %v1433
      %vm1647 = vcmask 785408
      %v1649 = vsel %vm1647, %v1632, %v1459
      %v1651 = vsel %vm1647, %v1634, %v1461
      %v1653 = vsel %vm1647, %v1636, %v1463
      %v1655 = vsel %vm1647, %v1638, %v1465
      %v1657 = vsel %vm1647, %v1640, %v1467
      %v1659 = vsel %vm1647, %v1642, %v1469
      %v1661 = vsel %vm1647, %v1644, %v1471
      %v1663 = vsel %vm1647, %v1646, %v1473
      %vm1664 = vcmask 916480
      %v1666 = vsel %vm1664, %v1649, %v1515
      %v1669 = vsel %vm1664, %v1651, %v1517
      %v1672 = vsel %vm1664, %v1653, %v1519
      %v1675 = vsel %vm1664, %v1655, %v1521
      %v1678 = vsel %vm1664, %v1657, %v1523
      %v1681 = vsel %vm1664, %v1659, %v1525
      %v1684 = vsel %vm1664, %v1661, %v1527
      %v1687 = vsel %vm1664, %v1663, %v1529
      %v1689 = vld [vmem:[%s1] sm:$0xf]
      %v1690 = vld [vmem:[%s1 + $0x4] sm:$0xf]
      %v1691 = vld [vmem:[%s1 + $0x8] sm:$0xf]
      %v1692 = vld [vmem:[%s1 + $0xc] sm:$0xf]
      %v1693 = vld [vmem:[%s1 + $0x10] sm:$0xf]
      %v1694 = vld [vmem:[%s1 + $0x14] sm:$0xf]
      %v1695 = vld [vmem:[%s1 + $0x18] sm:$0xf]
      %v1696 = vld [vmem:[%s1 + $0x1c] sm:$0xf]
      %v1697 = vld [vmem:[%s1 + $0x20] sm:$0xf]
      %v1698 = vld [vmem:[%s1 + $0x24] sm:$0xf]
      %v1699 = vld [vmem:[%s1 + $0x28] sm:$0xf]
      %v1700 = vld [vmem:[%s1 + $0x2c] sm:$0xf]
      %v1701 = vld [vmem:[%s1 + $0x30] sm:$0xf]
      %v1702 = vld [vmem:[%s1 + $0x34] sm:$0xf]
      %v1703 = vld [vmem:[%s1 + $0x38] sm:$0xf]
      %v1704 = vld [vmem:[%s1 + $0x3c] sm:$0xf]
      %v1705 = vld [vmem:[%s1 + $0x40] sm:$0xf]
      %v1706 = vld [vmem:[%s1 + $0x44] sm:$0xf]
      %v1725 = vunpack.c.l.b16 %v1689
      %v1726 = vunpack.c.l.b16 %v1690
      %v1727 = vunpack.c.l.b16 %v1691
      %v1728 = vunpack.c.l.b16 %v1692
      %v1729 = vunpack.c.l.b16 %v1693
      %v1730 = vunpack.c.l.b16 %v1694
      %v1731 = vunpack.c.l.b16 %v1695
      %v1732 = vunpack.c.l.b16 %v1696
      %v1733 = vunpack.c.l.b16 %v1697
      %v1734 = vunpack.c.l.b16 %v1698
      %v1735 = vunpack.c.l.b16 %v1699
      %v1736 = vunpack.c.l.b16 %v1700
      %v1737 = vunpack.c.l.b16 %v1701
      %v1738 = vunpack.c.l.b16 %v1702
      %v1739 = vunpack.c.l.b16 %v1703
      %v1740 = vunpack.c.l.b16 %v1704
      %v1741 = vunpack.c.l.b16 %v1705
      %v1742 = vunpack.c.l.b16 %v1706
      %v1743 = vpack.c.b16 %v1726, %v1725
      %v1744 = vpack.c.b16 %v1728, %v1727
      %v1745 = vpack.c.b16 %v1730, %v1729
      %v1746 = vpack.c.b16 %v1732, %v1731
      %v1747 = vpack.c.b16 %v1734, %v1733
      %v1748 = vpack.c.b16 %v1736, %v1735
      %v1749 = vpack.c.b16 %v1738, %v1737
      %v1750 = vpack.c.b16 %v1740, %v1739
      %v1751 = vpack.c.b16 %v1742, %v1741
      %v1762 = vsel %vm1554, %v1546, 0
      %v1765 = vsel %vm1554, %v1547, 0
      %v1768 = vsel %vm1554, %v1548, 0
      %v1771 = vsel %vm1554, %v1549, 0
      %v1774 = vsel %vm1554, %v1550, 0
      %v1777 = vsel %vm1554, %v1551, 0
      %v1780 = vsel %vm1554, %v1552, 0
      %v1783 = vsel %vm1554, %v1553, 0
      %1785 = vmatprep.subr.bf16.mxu0 0
      %1786 = vmatpush1.bf16.msra.mxu0 %v1750
      %1787 = vmatprep.subr.bf16.mxu0 0
      %1788 = vmatpush1.bf16.msra.mxu0 %v1749
      %1789 = vmatprep.subr.bf16.mxu0 0
      %1790 = vmatpush1.bf16.msra.mxu0 %v1748
      %1791 = vmatprep.subr.bf16.mxu0 0
      %1792 = vmatpush1.bf16.msra.mxu0 %v1747
      %1793 = vmatprep.subr.bf16.mxu0 0
      %1794 = vmatpush1.bf16.msra.mxu0 %v1746
      %1795 = vmatprep.subr.bf16.mxu0 0
      %1796 = vmatpush1.bf16.msra.mxu0 %v1745
      %1797 = vmatprep.subr.bf16.mxu0 0
      %1798 = vmatpush1.bf16.msra.mxu0 %v1744
      %1799 = vmatprep.subr.bf16.mxu0 0
      %1800 = vmatpush1.bf16.msra.mxu0 %v1743
      %1801 = vmatprep.subr.bf16.mxu0 0
      %1802 = vmatpush2.bf16.msra.mxu0 0
      %1803 = vmatprep.subr.bf16.mxu0 0
      %1804 = vmatpush2.bf16.msra.mxu0 0
      %1805 = vmatprep.subr.bf16.mxu0 0
      %1806 = vmatpush2.bf16.msra.mxu0 0
      %1807 = vmatprep.subr.bf16.mxu0 0
      %1808 = vmatpush2.bf16.msra.mxu0 0
      %1809 = vmatprep.subr.bf16.mxu0 0
      %1810 = vmatpush2.bf16.msra.mxu0 0
      %1811 = vmatprep.subr.bf16.mxu0 0
      %1812 = vmatpush2.bf16.msra.mxu0 0
      %1813 = vmatprep.subr.bf16.mxu0 0
      %1814 = vmatpush2.bf16.msra.mxu0 0
      %1815 = vmatprep.subr.bf16.mxu0 0
      %1816 = vmatpush2.bf16.msra.mxu0 %v1751
      %1817 = vmatprep.mubr.bf16.mxu0 %v1762
      %1818 = vmatmul.mubr.bf16.gmra.mxu0 %v1666
      %v1819 = vpop.f32.mrf.mxu0
      %v1820 = vadd.f32 0.0, %v1819
      %v1821 = vpop.f32.mrf.mxu0
      %v1822 = vpop.f32.mrf.mxu0
      %v1823 = vadd.f32 0.0, %v1822
      %v1824 = vpop.f32.mrf.mxu0
      %1825 = vmatprep.mubr.bf16.mxu0 %v1765
      %1826 = vmatmul.mubr.bf16.gmra.mxu0 %v1669
      %v1827 = vpop.f32.mrf.mxu0
      %v1828 = vadd.f32 0.0, %v1827
      %v1829 = vpop.f32.mrf.mxu0
      %v1830 = vpop.f32.mrf.mxu0
      %v1831 = vadd.f32 0.0, %v1830
      %v1832 = vpop.f32.mrf.mxu0
      %1833 = vmatprep.mubr.bf16.mxu0 %v1768
      %1834 = vmatmul.mubr.bf16.gmra.mxu0 %v1672
      %v1835 = vpop.f32.mrf.mxu0
      %v1836 = vadd.f32 0.0, %v1835
      %v1837 = vpop.f32.mrf.mxu0
      %v1838 = vpop.f32.mrf.mxu0
      %v1839 = vadd.f32 0.0, %v1838
      %v1840 = vpop.f32.mrf.mxu0
      %1841 = vmatprep.mubr.bf16.mxu0 %v1771
      %1842 = vmatmul.mubr.bf16.gmra.mxu0 %v1675
      %v1843 = vpop.f32.mrf.mxu0
      %v1844 = vadd.f32 0.0, %v1843
      %v1845 = vpop.f32.mrf.mxu0
      %v1846 = vpop.f32.mrf.mxu0
      %v1847 = vadd.f32 0.0, %v1846
      %v1848 = vpop.f32.mrf.mxu0
      %1849 = vmatprep.mubr.bf16.mxu0 %v1774
      %1850 = vmatmul.mubr.bf16.gmra.mxu0 %v1678
      %v1851 = vpop.f32.mrf.mxu0
      %v1852 = vadd.f32 0.0, %v1851
      %v1853 = vpop.f32.mrf.mxu0
      %v1854 = vpop.f32.mrf.mxu0
      %v1855 = vadd.f32 0.0, %v1854
      %v1856 = vpop.f32.mrf.mxu0
      %1857 = vmatprep.mubr.bf16.mxu0 %v1777
      %1858 = vmatmul.mubr.bf16.gmra.mxu0 %v1681
      %v1859 = vpop.f32.mrf.mxu0
      %v1860 = vadd.f32 0.0, %v1859
      %v1861 = vpop.f32.mrf.mxu0
      %v1862 = vpop.f32.mrf.mxu0
      %v1863 = vadd.f32 0.0, %v1862
      %v1864 = vpop.f32.mrf.mxu0
      %1865 = vmatprep.mubr.bf16.mxu0 %v1780
      %1866 = vmatmul.mubr.bf16.gmra.mxu0 %v1684
      %v1867 = vpop.f32.mrf.mxu0
      %v1868 = vadd.f32 0.0, %v1867
      %v1869 = vpop.f32.mrf.mxu0
      %v1870 = vpop.f32.mrf.mxu0
      %v1871 = vadd.f32 0.0, %v1870
      %v1872 = vpop.f32.mrf.mxu0
      %1873 = vmatprep.mubr.bf16.mxu0 %v1783
      %1874 = vmatmul.mubr.bf16.gmra.mxu0 %v1687
      %v1875 = vpop.f32.mrf.mxu0
      %v1876 = vadd.f32 0.0, %v1875
      %v1877 = vpop.f32.mrf.mxu0
      %v1878 = vpop.f32.mrf.mxu0
      %v1879 = vadd.f32 0.0, %v1878
      %v1880 = vpop.f32.mrf.mxu0
      %1881 = vdwg.mxu0
      %s1882 = scalar_lea.vmem %s197, 96
      %v1883 = vld [vmem:[%s1882] sm:$0x8]
      %v1884 = vld [vmem:[%s1882 + $0x4] sm:$0xf]
      %v1885 = vld [vmem:[%s1882 + $0x8] sm:$0x7]
      %v1886 = vld [vmem:[%s1882 + $0x10] sm:$0x8]
      %v1887 = vld [vmem:[%s1882 + $0x14] sm:$0xf]
      %v1888 = vld [vmem:[%s1882 + $0x18] sm:$0x7]
      %v1889 = vld [vmem:[%s1882 + $0x20] sm:$0x8]
      %v1890 = vld [vmem:[%s1882 + $0x24] sm:$0xf]
      %v1891 = vld [vmem:[%s1882 + $0x28] sm:$0x7]
      %v1892 = vld [vmem:[%s1882 + $0x30] sm:$0x8]
      %v1893 = vld [vmem:[%s1882 + $0x34] sm:$0xf]
      %v1894 = vld [vmem:[%s1882 + $0x38] sm:$0x7]
      %v1895 = vld [vmem:[%s1882 + $0x40] sm:$0x8]
      %v1896 = vld [vmem:[%s1882 + $0x44] sm:$0xf]
      %v1897 = vld [vmem:[%s1882 + $0x48] sm:$0x7]
      %v1898 = vld [vmem:[%s1882 + $0x50] sm:$0x8]
      %v1899 = vld [vmem:[%s1882 + $0x54] sm:$0xf]
      %v1900 = vld [vmem:[%s1882 + $0x58] sm:$0x7]
      %v1901 = vld [vmem:[%s1882 + $0x60] sm:$0x8]
      %v1902 = vld [vmem:[%s1882 + $0x64] sm:$0xf]
      %v1903 = vld [vmem:[%s1882 + $0x68] sm:$0x7]
      %v1904 = vld [vmem:[%s1882 + $0x70] sm:$0x8]
      %v1905 = vld [vmem:[%s1882 + $0x74] sm:$0xf]
      %v1906 = vld [vmem:[%s1882 + $0x78] sm:$0x7]
      %vm1931 = vcmask 1040384
      %vm1932 = vcmask 1044484
      %vm1933 = vmor %vm1931, %vm1932
      %v1934 = vrot.slane %v1883, 7
      %v1935 = vrot.slane %v1934, 4
      %v1936 = vrot.slane %v1884, 7
      %v1937 = vsel %vm1933, %v1935, %v1936
      %v1938 = vrot.slane %v1936, 4
      %v1939 = vrot.slane %v1885, 7
      %v1940 = vsel %vm1933, %v1938, %v1939
      %v1941 = vrot.slane %v1886, 7
      %v1942 = vrot.slane %v1941, 4
      %v1943 = vrot.slane %v1887, 7
      %v1944 = vsel %vm1933, %v1942, %v1943
      %v1945 = vrot.slane %v1943, 4
      %v1946 = vrot.slane %v1888, 7
      %v1947 = vsel %vm1933, %v1945, %v1946
      %v1948 = vrot.slane %v1889, 7
      %v1949 = vrot.slane %v1948, 4
      %v1950 = vrot.slane %v1890, 7
      %v1951 = vsel %vm1933, %v1949, %v1950
      %v1952 = vrot.slane %v1950, 4
      %v1953 = vrot.slane %v1891, 7
      %v1954 = vsel %vm1933, %v1952, %v1953
      %v1955 = vrot.slane %v1892, 7
      %v1956 = vrot.slane %v1955, 4
      %v1957 = vrot.slane %v1893, 7
      %v1958 = vsel %vm1933, %v1956, %v1957
      %v1959 = vrot.slane %v1957, 4
      %v1960 = vrot.slane %v1894, 7
      %v1961 = vsel %vm1933, %v1959, %v1960
      %v1962 = vrot.slane %v1895, 7
      %v1963 = vrot.slane %v1962, 4
      %v1964 = vrot.slane %v1896, 7
      %v1965 = vsel %vm1933, %v1963, %v1964
      %v1966 = vrot.slane %v1964, 4
      %v1967 = vrot.slane %v1897, 7
      %v1968 = vsel %vm1933, %v1966, %v1967
      %v1969 = vrot.slane %v1898, 7
      %v1970 = vrot.slane %v1969, 4
      %v1971 = vrot.slane %v1899, 7
      %v1972 = vsel %vm1933, %v1970, %v1971
      %v1973 = vrot.slane %v1971, 4
      %v1974 = vrot.slane %v1900, 7
      %v1975 = vsel %vm1933, %v1973, %v1974
      %v1976 = vrot.slane %v1901, 7
      %v1977 = vrot.slane %v1976, 4
      %v1978 = vrot.slane %v1902, 7
      %v1979 = vsel %vm1933, %v1977, %v1978
      %v1980 = vrot.slane %v1978, 4
      %v1981 = vrot.slane %v1903, 7
      %v1982 = vsel %vm1933, %v1980, %v1981
      %v1983 = vrot.slane %v1904, 7
      %v1984 = vrot.slane %v1983, 4
      %v1985 = vrot.slane %v1905, 7
      %v1986 = vsel %vm1933, %v1984, %v1985
      %v1987 = vrot.slane %v1985, 4
      %v1988 = vrot.slane %v1906, 7
      %v1989 = vsel %vm1933, %v1987, %v1988
      %v1990 = vld [vmem:[%s1882 + $0x8] sm:$0xf]
      %v1991 = vld [vmem:[%s1882 + $0x18] sm:$0xf]
      %v1992 = vld [vmem:[%s1882 + $0x28] sm:$0xf]
      %v1993 = vld [vmem:[%s1882 + $0x38] sm:$0xf]
      %v1994 = vld [vmem:[%s1882 + $0x48] sm:$0xf]
      %v1995 = vld [vmem:[%s1882 + $0x58] sm:$0xf]
      %v1996 = vld [vmem:[%s1882 + $0x68] sm:$0xf]
      %v1997 = vld [vmem:[%s1882 + $0x78] sm:$0xf]
      %v1998 = vld [vmem:[%s1882 + $0x4] sm:$0xe]
      %v1999 = vld [vmem:[%s1882 + $0xc] sm:$0x1]
      %v2000 = vld [vmem:[%s1882 + $0x14] sm:$0xe]
      %v2001 = vld [vmem:[%s1882 + $0x1c] sm:$0x1]
      %v2002 = vld [vmem:[%s1882 + $0x24] sm:$0xe]
      %v2003 = vld [vmem:[%s1882 + $0x2c] sm:$0x1]
      %v2004 = vld [vmem:[%s1882 + $0x34] sm:$0xe]
      %v2005 = vld [vmem:[%s1882 + $0x3c] sm:$0x1]
      %v2006 = vld [vmem:[%s1882 + $0x44] sm:$0xe]
      %v2007 = vld [vmem:[%s1882 + $0x4c] sm:$0x1]
      %v2008 = vld [vmem:[%s1882 + $0x54] sm:$0xe]
      %v2009 = vld [vmem:[%s1882 + $0x5c] sm:$0x1]
      %v2010 = vld [vmem:[%s1882 + $0x64] sm:$0xe]
      %v2011 = vld [vmem:[%s1882 + $0x6c] sm:$0x1]
      %v2012 = vld [vmem:[%s1882 + $0x74] sm:$0xe]
      %v2013 = vld [vmem:[%s1882 + $0x7c] sm:$0x1]
      %vm2038 = vcmask 1042432
      %vm2039 = vcmask 1046532
      %vm2040 = vmor %vm2038, %vm2039
      %v2041 = vrot.slane %v1998, 5
      %v2042 = vrot.slane %v2041, 4
      %v2043 = vrot.slane %v1990, 5
      %v2044 = vsel %vm2040, %v2042, %v2043
      %v2045 = vrot.slane %v2043, 4
      %v2046 = vrot.slane %v1999, 5
      %v2047 = vsel %vm2040, %v2045, %v2046
      %v2048 = vrot.slane %v2000, 5
      %v2049 = vrot.slane %v2048, 4
      %v2050 = vrot.slane %v1991, 5
      %v2051 = vsel %vm2040, %v2049, %v2050
      %v2052 = vrot.slane %v2050, 4
      %v2053 = vrot.slane %v2001, 5
      %v2054 = vsel %vm2040, %v2052, %v2053
      %v2055 = vrot.slane %v2002, 5
      %v2056 = vrot.slane %v2055, 4
      %v2057 = vrot.slane %v1992, 5
      %v2058 = vsel %vm2040, %v2056, %v2057
      %v2059 = vrot.slane %v2057, 4
      %v2060 = vrot.slane %v2003, 5
      %v2061 = vsel %vm2040, %v2059, %v2060
      %v2062 = vrot.slane %v2004, 5
      %v2063 = vrot.slane %v2062, 4
      %v2064 = vrot.slane %v1993, 5
      %v2065 = vsel %vm2040, %v2063, %v2064
      %v2066 = vrot.slane %v2064, 4
      %v2067 = vrot.slane %v2005, 5
      %v2068 = vsel %vm2040, %v2066, %v2067
      %v2069 = vrot.slane %v2006, 5
      %v2070 = vrot.slane %v2069, 4
      %v2071 = vrot.slane %v1994, 5
      %v2072 = vsel %vm2040, %v2070, %v2071
      %v2073 = vrot.slane %v2071, 4
      %v2074 = vrot.slane %v2007, 5
      %v2075 = vsel %vm2040, %v2073, %v2074
      %v2076 = vrot.slane %v2008, 5
      %v2077 = vrot.slane %v2076, 4
      %v2078 = vrot.slane %v1995, 5
      %v2079 = vsel %vm2040, %v2077, %v2078
      %v2080 = vrot.slane %v2078, 4
      %v2081 = vrot.slane %v2009, 5
      %v2082 = vsel %vm2040, %v2080, %v2081
      %v2083 = vrot.slane %v2010, 5
      %v2084 = vrot.slane %v2083, 4
      %v2085 = vrot.slane %v1996, 5
      %v2086 = vsel %vm2040, %v2084, %v2085
      %v2087 = vrot.slane %v2085, 4
      %v2088 = vrot.slane %v2011, 5
      %v2089 = vsel %vm2040, %v2087, %v2088
      %v2090 = vrot.slane %v2012, 5
      %v2091 = vrot.slane %v2090, 4
      %v2092 = vrot.slane %v1997, 5
      %v2093 = vsel %vm2040, %v2091, %v2092
      %v2094 = vrot.slane %v2092, 4
      %v2095 = vrot.slane %v2013, 5
      %v2096 = vsel %vm2040, %v2094, %v2095
      %v2097 = vld [vmem:[%s536 + $0x8] sm:$0x7]
      %v2098 = vld [vmem:[%s536 + $0x18] sm:$0x7]
      %v2099 = vld [vmem:[%s536 + $0x28] sm:$0x7]
      %v2100 = vld [vmem:[%s536 + $0x38] sm:$0x7]
      %v2101 = vld [vmem:[%s536 + $0x48] sm:$0x7]
      %v2102 = vld [vmem:[%s536 + $0x58] sm:$0x7]
      %v2103 = vld [vmem:[%s536 + $0x68] sm:$0x7]
      %v2104 = vld [vmem:[%s536 + $0x78] sm:$0x7]
      %v2121 = vrot.slane %v537, 7
      %v2122 = vrot.slane %v2121, 4
      %v2123 = vrot.slane %v538, 7
      %v2124 = vsel %vm1933, %v2122, %v2123
      %v2125 = vrot.slane %v2123, 4
      %v2126 = vrot.slane %v2097, 7
      %v2127 = vsel %vm1933, %v2125, %v2126
      %v2128 = vrot.slane %v540, 7
      %v2129 = vrot.slane %v2128, 4
      %v2130 = vrot.slane %v541, 7
      %v2131 = vsel %vm1933, %v2129, %v2130
      %v2132 = vrot.slane %v2130, 4
      %v2133 = vrot.slane %v2098, 7
      %v2134 = vsel %vm1933, %v2132, %v2133
      %v2135 = vrot.slane %v543, 7
      %v2136 = vrot.slane %v2135, 4
      %v2137 = vrot.slane %v544, 7
      %v2138 = vsel %vm1933, %v2136, %v2137
      %v2139 = vrot.slane %v2137, 4
      %v2140 = vrot.slane %v2099, 7
      %v2141 = vsel %vm1933, %v2139, %v2140
      %v2142 = vrot.slane %v546, 7
      %v2143 = vrot.slane %v2142, 4
      %v2144 = vrot.slane %v547, 7
      %v2145 = vsel %vm1933, %v2143, %v2144
      %v2146 = vrot.slane %v2144, 4
      %v2147 = vrot.slane %v2100, 7
      %v2148 = vsel %vm1933, %v2146, %v2147
      %v2149 = vrot.slane %v549, 7
      %v2150 = vrot.slane %v2149, 4
      %v2151 = vrot.slane %v550, 7
      %v2152 = vsel %vm1933, %v2150, %v2151
      %v2153 = vrot.slane %v2151, 4
      %v2154 = vrot.slane %v2101, 7
      %v2155 = vsel %vm1933, %v2153, %v2154
      %v2156 = vrot.slane %v552, 7
      %v2157 = vrot.slane %v2156, 4
      %v2158 = vrot.slane %v553, 7
      %v2159 = vsel %vm1933, %v2157, %v2158
      %v2160 = vrot.slane %v2158, 4
      %v2161 = vrot.slane %v2102, 7
      %v2162 = vsel %vm1933, %v2160, %v2161
      %v2163 = vrot.slane %v555, 7
      %v2164 = vrot.slane %v2163, 4
      %v2165 = vrot.slane %v556, 7
      %v2166 = vsel %vm1933, %v2164, %v2165
      %v2167 = vrot.slane %v2165, 4
      %v2168 = vrot.slane %v2103, 7
      %v2169 = vsel %vm1933, %v2167, %v2168
      %v2170 = vrot.slane %v558, 7
      %v2171 = vrot.slane %v2170, 4
      %v2172 = vrot.slane %v559, 7
      %v2173 = vsel %vm1933, %v2171, %v2172
      %v2174 = vrot.slane %v2172, 4
      %v2175 = vrot.slane %v2104, 7
      %v2176 = vsel %vm1933, %v2174, %v2175
      %v2177 = vld [vmem:[%s536 + $0x4] sm:$0xe]
      %v2178 = vld [vmem:[%s536 + $0x14] sm:$0xe]
      %v2179 = vld [vmem:[%s536 + $0x24] sm:$0xe]
      %v2180 = vld [vmem:[%s536 + $0x34] sm:$0xe]
      %v2181 = vld [vmem:[%s536 + $0x44] sm:$0xe]
      %v2182 = vld [vmem:[%s536 + $0x54] sm:$0xe]
      %v2183 = vld [vmem:[%s536 + $0x64] sm:$0xe]
      %v2184 = vld [vmem:[%s536 + $0x74] sm:$0xe]
      %v2201 = vrot.slane %v2177, 5
      %v2202 = vrot.slane %v2201, 4
      %v2203 = vrot.slane %v539, 5
      %v2204 = vsel %vm2040, %v2202, %v2203
      %v2205 = vrot.slane %v2203, 4
      %v2206 = vrot.slane %v737, 5
      %v2207 = vsel %vm2040, %v2205, %v2206
      %v2208 = vrot.slane %v2178, 5
      %v2209 = vrot.slane %v2208, 4
      %v2210 = vrot.slane %v542, 5
      %v2211 = vsel %vm2040, %v2209, %v2210
      %v2212 = vrot.slane %v2210, 4
      %v2213 = vrot.slane %v738, 5
      %v2214 = vsel %vm2040, %v2212, %v2213
      %v2215 = vrot.slane %v2179, 5
      %v2216 = vrot.slane %v2215, 4
      %v2217 = vrot.slane %v545, 5
      %v2218 = vsel %vm2040, %v2216, %v2217
      %v2219 = vrot.slane %v2217, 4
      %v2220 = vrot.slane %v739, 5
      %v2221 = vsel %vm2040, %v2219, %v2220
      %v2222 = vrot.slane %v2180, 5
      %v2223 = vrot.slane %v2222, 4
      %v2224 = vrot.slane %v548, 5
      %v2225 = vsel %vm2040, %v2223, %v2224
      %v2226 = vrot.slane %v2224, 4
      %v2227 = vrot.slane %v740, 5
      %v2228 = vsel %vm2040, %v2226, %v2227
      %v2229 = vrot.slane %v2181, 5
      %v2230 = vrot.slane %v2229, 4
      %v2231 = vrot.slane %v551, 5
      %v2232 = vsel %vm2040, %v2230, %v2231
      %v2233 = vrot.slane %v2231, 4
      %v2234 = vrot.slane %v741, 5
      %v2235 = vsel %vm2040, %v2233, %v2234
      %v2236 = vrot.slane %v2182, 5
      %v2237 = vrot.slane %v2236, 4
      %v2238 = vrot.slane %v554, 5
      %v2239 = vsel %vm2040, %v2237, %v2238
      %v2240 = vrot.slane %v2238, 4
      %v2241 = vrot.slane %v742, 5
      %v2242 = vsel %vm2040, %v2240, %v2241
      %v2243 = vrot.slane %v2183, 5
      %v2244 = vrot.slane %v2243, 4
      %v2245 = vrot.slane %v557, 5
      %v2246 = vsel %vm2040, %v2244, %v2245
      %v2247 = vrot.slane %v2245, 4
      %v2248 = vrot.slane %v743, 5
      %v2249 = vsel %vm2040, %v2247, %v2248
      %v2250 = vrot.slane %v2184, 5
      %v2251 = vrot.slane %v2250, 4
      %v2252 = vrot.slane %v560, 5
      %v2253 = vsel %vm2040, %v2251, %v2252
      %v2254 = vrot.slane %v2252, 4
      %v2255 = vrot.slane %v744, 5
      %v2256 = vsel %vm2040, %v2254, %v2255
      %s2257 = scalar_lea.vmem %s197, 160
      %v2258 = vld [vmem:[%s2257] sm:$0x8]
      %v2259 = vld [vmem:[%s2257 + $0x4] sm:$0xf]
      %v2260 = vld [vmem:[%s2257 + $0x8] sm:$0x7]
      %v2261 = vld [vmem:[%s2257 + $0x10] sm:$0x8]
      %v2262 = vld [vmem:[%s2257 + $0x14] sm:$0xf]
      %v2263 = vld [vmem:[%s2257 + $0x18] sm:$0x7]
      %v2264 = vld [vmem:[%s2257 + $0x20] sm:$0x8]
      %v2265 = vld [vmem:[%s2257 + $0x24] sm:$0xf]
      %v2266 = vld [vmem:[%s2257 + $0x28] sm:$0x7]
      %v2267 = vld [vmem:[%s2257 + $0x30] sm:$0x8]
      %v2268 = vld [vmem:[%s2257 + $0x34] sm:$0xf]
      %v2269 = vld [vmem:[%s2257 + $0x38] sm:$0x7]
      %v2270 = vld [vmem:[%s2257 + $0x40] sm:$0x8]
      %v2271 = vld [vmem:[%s2257 + $0x44] sm:$0xf]
      %v2272 = vld [vmem:[%s2257 + $0x48] sm:$0x7]
      %v2273 = vld [vmem:[%s2257 + $0x50] sm:$0x8]
      %v2274 = vld [vmem:[%s2257 + $0x54] sm:$0xf]
      %v2275 = vld [vmem:[%s2257 + $0x58] sm:$0x7]
      %v2276 = vld [vmem:[%s2257 + $0x60] sm:$0x8]
      %v2277 = vld [vmem:[%s2257 + $0x64] sm:$0xf]
      %v2278 = vld [vmem:[%s2257 + $0x68] sm:$0x7]
      %v2279 = vld [vmem:[%s2257 + $0x70] sm:$0x8]
      %v2280 = vld [vmem:[%s2257 + $0x74] sm:$0xf]
      %v2281 = vld [vmem:[%s2257 + $0x78] sm:$0x7]
      %v2306 = vrot.slane %v2258, 7
      %v2307 = vrot.slane %v2306, 4
      %v2308 = vrot.slane %v2259, 7
      %v2309 = vsel %vm1933, %v2307, %v2308
      %v2310 = vrot.slane %v2308, 4
      %v2311 = vrot.slane %v2260, 7
      %v2312 = vsel %vm1933, %v2310, %v2311
      %v2313 = vrot.slane %v2261, 7
      %v2314 = vrot.slane %v2313, 4
      %v2315 = vrot.slane %v2262, 7
      %v2316 = vsel %vm1933, %v2314, %v2315
      %v2317 = vrot.slane %v2315, 4
      %v2318 = vrot.slane %v2263, 7
      %v2319 = vsel %vm1933, %v2317, %v2318
      %v2320 = vrot.slane %v2264, 7
      %v2321 = vrot.slane %v2320, 4
      %v2322 = vrot.slane %v2265, 7
      %v2323 = vsel %vm1933, %v2321, %v2322
      %v2324 = vrot.slane %v2322, 4
      %v2325 = vrot.slane %v2266, 7
      %v2326 = vsel %vm1933, %v2324, %v2325
      %v2327 = vrot.slane %v2267, 7
      %v2328 = vrot.slane %v2327, 4
      %v2329 = vrot.slane %v2268, 7
      %v2330 = vsel %vm1933, %v2328, %v2329
      %v2331 = vrot.slane %v2329, 4
      %v2332 = vrot.slane %v2269, 7
      %v2333 = vsel %vm1933, %v2331, %v2332
      %v2334 = vrot.slane %v2270, 7
      %v2335 = vrot.slane %v2334, 4
      %v2336 = vrot.slane %v2271, 7
      %v2337 = vsel %vm1933, %v2335, %v2336
      %v2338 = vrot.slane %v2336, 4
      %v2339 = vrot.slane %v2272, 7
      %v2340 = vsel %vm1933, %v2338, %v2339
      %v2341 = vrot.slane %v2273, 7
      %v2342 = vrot.slane %v2341, 4
      %v2343 = vrot.slane %v2274, 7
      %v2344 = vsel %vm1933, %v2342, %v2343
      %v2345 = vrot.slane %v2343, 4
      %v2346 = vrot.slane %v2275, 7
      %v2347 = vsel %vm1933, %v2345, %v2346
      %v2348 = vrot.slane %v2276, 7
      %v2349 = vrot.slane %v2348, 4
      %v2350 = vrot.slane %v2277, 7
      %v2351 = vsel %vm1933, %v2349, %v2350
      %v2352 = vrot.slane %v2350, 4
      %v2353 = vrot.slane %v2278, 7
      %v2354 = vsel %vm1933, %v2352, %v2353
      %v2355 = vrot.slane %v2279, 7
      %v2356 = vrot.slane %v2355, 4
      %v2357 = vrot.slane %v2280, 7
      %v2358 = vsel %vm1933, %v2356, %v2357
      %v2359 = vrot.slane %v2357, 4
      %v2360 = vrot.slane %v2281, 7
      %v2361 = vsel %vm1933, %v2359, %v2360
      %v2362 = vld [vmem:[%s2257 + $0x8] sm:$0xf]
      %v2363 = vld [vmem:[%s2257 + $0x18] sm:$0xf]
      %v2364 = vld [vmem:[%s2257 + $0x28] sm:$0xf]
      %v2365 = vld [vmem:[%s2257 + $0x38] sm:$0xf]
      %v2366 = vld [vmem:[%s2257 + $0x48] sm:$0xf]
      %v2367 = vld [vmem:[%s2257 + $0x58] sm:$0xf]
      %v2368 = vld [vmem:[%s2257 + $0x68] sm:$0xf]
      %v2369 = vld [vmem:[%s2257 + $0x78] sm:$0xf]
      %v2370 = vld [vmem:[%s2257 + $0x4] sm:$0xe]
      %v2371 = vld [vmem:[%s2257 + $0xc] sm:$0x1]
      %v2372 = vld [vmem:[%s2257 + $0x14] sm:$0xe]
      %v2373 = vld [vmem:[%s2257 + $0x1c] sm:$0x1]
      %v2374 = vld [vmem:[%s2257 + $0x24] sm:$0xe]
      %v2375 = vld [vmem:[%s2257 + $0x2c] sm:$0x1]
      %v2376 = vld [vmem:[%s2257 + $0x34] sm:$0xe]
      %v2377 = vld [vmem:[%s2257 + $0x3c] sm:$0x1]
      %v2378 = vld [vmem:[%s2257 + $0x44] sm:$0xe]
      %v2379 = vld [vmem:[%s2257 + $0x4c] sm:$0x1]
      %v2380 = vld [vmem:[%s2257 + $0x54] sm:$0xe]
      %v2381 = vld [vmem:[%s2257 + $0x5c] sm:$0x1]
      %v2382 = vld [vmem:[%s2257 + $0x64] sm:$0xe]
      %v2383 = vld [vmem:[%s2257 + $0x6c] sm:$0x1]
      %v2384 = vld [vmem:[%s2257 + $0x74] sm:$0xe]
      %v2385 = vld [vmem:[%s2257 + $0x7c] sm:$0x1]
      %v2410 = vrot.slane %v2370, 5
      %v2411 = vrot.slane %v2410, 4
      %v2412 = vrot.slane %v2362, 5
      %v2413 = vsel %vm2040, %v2411, %v2412
      %v2414 = vrot.slane %v2412, 4
      %v2415 = vrot.slane %v2371, 5
      %v2416 = vsel %vm2040, %v2414, %v2415
      %v2417 = vrot.slane %v2372, 5
      %v2418 = vrot.slane %v2417, 4
      %v2419 = vrot.slane %v2363, 5
      %v2420 = vsel %vm2040, %v2418, %v2419
      %v2421 = vrot.slane %v2419, 4
      %v2422 = vrot.slane %v2373, 5
      %v2423 = vsel %vm2040, %v2421, %v2422
      %v2424 = vrot.slane %v2374, 5
      %v2425 = vrot.slane %v2424, 4
      %v2426 = vrot.slane %v2364, 5
      %v2427 = vsel %vm2040, %v2425, %v2426
      %v2428 = vrot.slane %v2426, 4
      %v2429 = vrot.slane %v2375, 5
      %v2430 = vsel %vm2040, %v2428, %v2429
      %v2431 = vrot.slane %v2376, 5
      %v2432 = vrot.slane %v2431, 4
      %v2433 = vrot.slane %v2365, 5
      %v2434 = vsel %vm2040, %v2432, %v2433
      %v2435 = vrot.slane %v2433, 4
      %v2436 = vrot.slane %v2377, 5
      %v2437 = vsel %vm2040, %v2435, %v2436
      %v2438 = vrot.slane %v2378, 5
      %v2439 = vrot.slane %v2438, 4
      %v2440 = vrot.slane %v2366, 5
      %v2441 = vsel %vm2040, %v2439, %v2440
      %v2442 = vrot.slane %v2440, 4
      %v2443 = vrot.slane %v2379, 5
      %v2444 = vsel %vm2040, %v2442, %v2443
      %v2445 = vrot.slane %v2380, 5
      %v2446 = vrot.slane %v2445, 4
      %v2447 = vrot.slane %v2367, 5
      %v2448 = vsel %vm2040, %v2446, %v2447
      %v2449 = vrot.slane %v2447, 4
      %v2450 = vrot.slane %v2381, 5
      %v2451 = vsel %vm2040, %v2449, %v2450
      %v2452 = vrot.slane %v2382, 5
      %v2453 = vrot.slane %v2452, 4
      %v2454 = vrot.slane %v2368, 5
      %v2455 = vsel %vm2040, %v2453, %v2454
      %v2456 = vrot.slane %v2454, 4
      %v2457 = vrot.slane %v2383, 5
      %v2458 = vsel %vm2040, %v2456, %v2457
      %v2459 = vrot.slane %v2384, 5
      %v2460 = vrot.slane %v2459, 4
      %v2461 = vrot.slane %v2369, 5
      %v2462 = vsel %vm2040, %v2460, %v2461
      %v2463 = vrot.slane %v2461, 4
      %v2464 = vrot.slane %v2385, 5
      %v2465 = vsel %vm2040, %v2463, %v2464
      %v2466 = vunpack.c.l.b16 %v1937
      %v2467 = vunpack.c.l.b16 %v1940
      %v2468 = vunpack.c.l.b16 %v1944
      %v2469 = vunpack.c.l.b16 %v1947
      %v2470 = vunpack.c.l.b16 %v1951
      %v2471 = vunpack.c.l.b16 %v1954
      %v2472 = vunpack.c.l.b16 %v1958
      %v2473 = vunpack.c.l.b16 %v1961
      %v2474 = vunpack.c.l.b16 %v1965
      %v2475 = vunpack.c.l.b16 %v1968
      %v2476 = vunpack.c.l.b16 %v1972
      %v2477 = vunpack.c.l.b16 %v1975
      %v2478 = vunpack.c.l.b16 %v1979
      %v2479 = vunpack.c.l.b16 %v1982
      %v2480 = vunpack.c.l.b16 %v1986
      %v2481 = vunpack.c.l.b16 %v1989
      %v2482 = vpack.c.b16 %v2467, %v2466
      %v2483 = vpack.c.b16 %v2469, %v2468
      %v2484 = vpack.c.b16 %v2471, %v2470
      %v2485 = vpack.c.b16 %v2473, %v2472
      %v2486 = vpack.c.b16 %v2475, %v2474
      %v2487 = vpack.c.b16 %v2477, %v2476
      %v2488 = vpack.c.b16 %v2479, %v2478
      %v2489 = vpack.c.b16 %v2481, %v2480
      %v2490 = vunpack.c.l.b16 %v1884
      %v2491 = vunpack.c.l.b16 %v1990
      %v2492 = vunpack.c.l.b16 %v1887
      %v2493 = vunpack.c.l.b16 %v1991
      %v2494 = vunpack.c.l.b16 %v1890
      %v2495 = vunpack.c.l.b16 %v1992
      %v2496 = vunpack.c.l.b16 %v1893
      %v2497 = vunpack.c.l.b16 %v1993
      %v2498 = vunpack.c.l.b16 %v1896
      %v2499 = vunpack.c.l.b16 %v1994
      %v2500 = vunpack.c.l.b16 %v1899
      %v2501 = vunpack.c.l.b16 %v1995
      %v2502 = vunpack.c.l.b16 %v1902
      %v2503 = vunpack.c.l.b16 %v1996
      %v2504 = vunpack.c.l.b16 %v1905
      %v2505 = vunpack.c.l.b16 %v1997
      %v2506 = vpack.c.b16 %v2491, %v2490
      %v2507 = vpack.c.b16 %v2493, %v2492
      %v2508 = vpack.c.b16 %v2495, %v2494
      %v2509 = vpack.c.b16 %v2497, %v2496
      %v2510 = vpack.c.b16 %v2499, %v2498
      %v2511 = vpack.c.b16 %v2501, %v2500
      %v2512 = vpack.c.b16 %v2503, %v2502
      %v2513 = vpack.c.b16 %v2505, %v2504
      %2514 = vrot.lane.b32.xlu0 %v2506, 16
      %v2515 = vpop.permute.xlu0 %2514
      %2516 = vrot.lane.b32.xlu0 %v2507, 16
      %v2517 = vpop.permute.xlu0 %2516
      %2518 = vrot.lane.b32.xlu0 %v2508, 16
      %v2519 = vpop.permute.xlu0 %2518
      %2520 = vrot.lane.b32.xlu0 %v2509, 16
      %v2521 = vpop.permute.xlu0 %2520
      %2522 = vrot.lane.b32.xlu0 %v2510, 16
      %v2523 = vpop.permute.xlu0 %2522
      %2524 = vrot.lane.b32.xlu0 %v2511, 16
      %v2525 = vpop.permute.xlu0 %2524
      %2526 = vrot.lane.b32.xlu0 %v2512, 16
      %v2527 = vpop.permute.xlu0 %2526
      %2528 = vrot.lane.b32.xlu0 %v2513, 16
      %v2529 = vpop.permute.xlu0 %2528
      %v2530 = vunpack.c.l.b16 %v2044
      %v2531 = vunpack.c.l.b16 %v2047
      %v2532 = vunpack.c.l.b16 %v2051
      %v2533 = vunpack.c.l.b16 %v2054
      %v2534 = vunpack.c.l.b16 %v2058
      %v2535 = vunpack.c.l.b16 %v2061
      %v2536 = vunpack.c.l.b16 %v2065
      %v2537 = vunpack.c.l.b16 %v2068
      %v2538 = vunpack.c.l.b16 %v2072
      %v2539 = vunpack.c.l.b16 %v2075
      %v2540 = vunpack.c.l.b16 %v2079
      %v2541 = vunpack.c.l.b16 %v2082
      %v2542 = vunpack.c.l.b16 %v2086
      %v2543 = vunpack.c.l.b16 %v2089
      %v2544 = vunpack.c.l.b16 %v2093
      %v2545 = vunpack.c.l.b16 %v2096
      %v2546 = vpack.c.b16 %v2531, %v2530
      %v2547 = vpack.c.b16 %v2533, %v2532
      %v2548 = vpack.c.b16 %v2535, %v2534
      %v2549 = vpack.c.b16 %v2537, %v2536
      %v2550 = vpack.c.b16 %v2539, %v2538
      %v2551 = vpack.c.b16 %v2541, %v2540
      %v2552 = vpack.c.b16 %v2543, %v2542
      %v2553 = vpack.c.b16 %v2545, %v2544
      %2554 = vrot.lane.b32.xlu0 %v2546, 32
      %v2555 = vpop.permute.xlu0 %2554
      %2556 = vrot.lane.b32.xlu0 %v2547, 32
      %v2557 = vpop.permute.xlu0 %2556
      %2558 = vrot.lane.b32.xlu0 %v2548, 32
      %v2559 = vpop.permute.xlu0 %2558
      %2560 = vrot.lane.b32.xlu0 %v2549, 32
      %v2561 = vpop.permute.xlu0 %2560
      %2562 = vrot.lane.b32.xlu0 %v2550, 32
      %v2563 = vpop.permute.xlu0 %2562
      %2564 = vrot.lane.b32.xlu0 %v2551, 32
      %v2565 = vpop.permute.xlu0 %2564
      %2566 = vrot.lane.b32.xlu0 %v2552, 32
      %v2567 = vpop.permute.xlu0 %2566
      %2568 = vrot.lane.b32.xlu0 %v2553, 32
      %v2569 = vpop.permute.xlu0 %2568
      %v2570 = vunpack.c.l.b16 %v2124
      %v2571 = vunpack.c.l.b16 %v2127
      %v2572 = vunpack.c.l.b16 %v2131
      %v2573 = vunpack.c.l.b16 %v2134
      %v2574 = vunpack.c.l.b16 %v2138
      %v2575 = vunpack.c.l.b16 %v2141
      %v2576 = vunpack.c.l.b16 %v2145
      %v2577 = vunpack.c.l.b16 %v2148
      %v2578 = vunpack.c.l.b16 %v2152
      %v2579 = vunpack.c.l.b16 %v2155
      %v2580 = vunpack.c.l.b16 %v2159
      %v2581 = vunpack.c.l.b16 %v2162
      %v2582 = vunpack.c.l.b16 %v2166
      %v2583 = vunpack.c.l.b16 %v2169
      %v2584 = vunpack.c.l.b16 %v2173
      %v2585 = vunpack.c.l.b16 %v2176
      %v2586 = vpack.c.b16 %v2571, %v2570
      %v2587 = vpack.c.b16 %v2573, %v2572
      %v2588 = vpack.c.b16 %v2575, %v2574
      %v2589 = vpack.c.b16 %v2577, %v2576
      %v2590 = vpack.c.b16 %v2579, %v2578
      %v2591 = vpack.c.b16 %v2581, %v2580
      %v2592 = vpack.c.b16 %v2583, %v2582
      %v2593 = vpack.c.b16 %v2585, %v2584
      %2594 = vrot.lane.b32.xlu0 %v2586, 48
      %v2595 = vpop.permute.xlu0 %2594
      %2596 = vrot.lane.b32.xlu0 %v2587, 48
      %v2597 = vpop.permute.xlu0 %2596
      %2598 = vrot.lane.b32.xlu0 %v2588, 48
      %v2599 = vpop.permute.xlu0 %2598
      %2600 = vrot.lane.b32.xlu0 %v2589, 48
      %v2601 = vpop.permute.xlu0 %2600
      %2602 = vrot.lane.b32.xlu0 %v2590, 48
      %v2603 = vpop.permute.xlu0 %2602
      %2604 = vrot.lane.b32.xlu0 %v2591, 48
      %v2605 = vpop.permute.xlu0 %2604
      %2606 = vrot.lane.b32.xlu0 %v2592, 48
      %v2607 = vpop.permute.xlu0 %2606
      %2608 = vrot.lane.b32.xlu0 %v2593, 48
      %v2609 = vpop.permute.xlu0 %2608
      %v2610 = vunpack.c.l.b16 %v2204
      %v2611 = vunpack.c.l.b16 %v2207
      %v2612 = vunpack.c.l.b16 %v2211
      %v2613 = vunpack.c.l.b16 %v2214
      %v2614 = vunpack.c.l.b16 %v2218
      %v2615 = vunpack.c.l.b16 %v2221
      %v2616 = vunpack.c.l.b16 %v2225
      %v2617 = vunpack.c.l.b16 %v2228
      %v2618 = vunpack.c.l.b16 %v2232
      %v2619 = vunpack.c.l.b16 %v2235
      %v2620 = vunpack.c.l.b16 %v2239
      %v2621 = vunpack.c.l.b16 %v2242
      %v2622 = vunpack.c.l.b16 %v2246
      %v2623 = vunpack.c.l.b16 %v2249
      %v2624 = vunpack.c.l.b16 %v2253
      %v2625 = vunpack.c.l.b16 %v2256
      %v2626 = vpack.c.b16 %v2611, %v2610
      %v2627 = vpack.c.b16 %v2613, %v2612
      %v2628 = vpack.c.b16 %v2615, %v2614
      %v2629 = vpack.c.b16 %v2617, %v2616
      %v2630 = vpack.c.b16 %v2619, %v2618
      %v2631 = vpack.c.b16 %v2621, %v2620
      %v2632 = vpack.c.b16 %v2623, %v2622
      %v2633 = vpack.c.b16 %v2625, %v2624
      %2634 = vrot.lane.b32.xlu0 %v2626, 80
      %v2635 = vpop.permute.xlu0 %2634
      %2636 = vrot.lane.b32.xlu0 %v2627, 80
      %v2637 = vpop.permute.xlu0 %2636
      %2638 = vrot.lane.b32.xlu0 %v2628, 80
      %v2639 = vpop.permute.xlu0 %2638
      %2640 = vrot.lane.b32.xlu0 %v2629, 80
      %v2641 = vpop.permute.xlu0 %2640
      %2642 = vrot.lane.b32.xlu0 %v2630, 80
      %v2643 = vpop.permute.xlu0 %2642
      %2644 = vrot.lane.b32.xlu0 %v2631, 80
      %v2645 = vpop.permute.xlu0 %2644
      %2646 = vrot.lane.b32.xlu0 %v2632, 80
      %v2647 = vpop.permute.xlu0 %2646
      %2648 = vrot.lane.b32.xlu0 %v2633, 80
      %v2649 = vpop.permute.xlu0 %2648
      %v2650 = vunpack.c.l.b16 %v2309
      %v2651 = vunpack.c.l.b16 %v2312
      %v2652 = vunpack.c.l.b16 %v2316
      %v2653 = vunpack.c.l.b16 %v2319
      %v2654 = vunpack.c.l.b16 %v2323
      %v2655 = vunpack.c.l.b16 %v2326
      %v2656 = vunpack.c.l.b16 %v2330
      %v2657 = vunpack.c.l.b16 %v2333
      %v2658 = vunpack.c.l.b16 %v2337
      %v2659 = vunpack.c.l.b16 %v2340
      %v2660 = vunpack.c.l.b16 %v2344
      %v2661 = vunpack.c.l.b16 %v2347
      %v2662 = vunpack.c.l.b16 %v2351
      %v2663 = vunpack.c.l.b16 %v2354
      %v2664 = vunpack.c.l.b16 %v2358
      %v2665 = vunpack.c.l.b16 %v2361
      %v2666 = vpack.c.b16 %v2651, %v2650
      %v2667 = vpack.c.b16 %v2653, %v2652
      %v2668 = vpack.c.b16 %v2655, %v2654
      %v2669 = vpack.c.b16 %v2657, %v2656
      %v2670 = vpack.c.b16 %v2659, %v2658
      %v2671 = vpack.c.b16 %v2661, %v2660
      %v2672 = vpack.c.b16 %v2663, %v2662
      %v2673 = vpack.c.b16 %v2665, %v2664
      %2674 = vrot.lane.b32.xlu0 %v2666, 96
      %v2675 = vpop.permute.xlu0 %2674
      %2676 = vrot.lane.b32.xlu0 %v2667, 96
      %v2677 = vpop.permute.xlu0 %2676
      %2678 = vrot.lane.b32.xlu0 %v2668, 96
      %v2679 = vpop.permute.xlu0 %2678
      %2680 = vrot.lane.b32.xlu0 %v2669, 96
      %v2681 = vpop.permute.xlu0 %2680
      %2682 = vrot.lane.b32.xlu0 %v2670, 96
      %v2683 = vpop.permute.xlu0 %2682
      %2684 = vrot.lane.b32.xlu0 %v2671, 96
      %v2685 = vpop.permute.xlu0 %2684
      %2686 = vrot.lane.b32.xlu0 %v2672, 96
      %v2687 = vpop.permute.xlu0 %2686
      %2688 = vrot.lane.b32.xlu0 %v2673, 96
      %v2689 = vpop.permute.xlu0 %2688
      %v2690 = vunpack.c.l.b16 %v2259
      %v2691 = vunpack.c.l.b16 %v2362
      %v2692 = vunpack.c.l.b16 %v2262
      %v2693 = vunpack.c.l.b16 %v2363
      %v2694 = vunpack.c.l.b16 %v2265
      %v2695 = vunpack.c.l.b16 %v2364
      %v2696 = vunpack.c.l.b16 %v2268
      %v2697 = vunpack.c.l.b16 %v2365
      %v2698 = vunpack.c.l.b16 %v2271
      %v2699 = vunpack.c.l.b16 %v2366
      %v2700 = vunpack.c.l.b16 %v2274
      %v2701 = vunpack.c.l.b16 %v2367
      %v2702 = vunpack.c.l.b16 %v2277
      %v2703 = vunpack.c.l.b16 %v2368
      %v2704 = vunpack.c.l.b16 %v2280
      %v2705 = vunpack.c.l.b16 %v2369
      %v2706 = vpack.c.b16 %v2691, %v2690
      %v2707 = vpack.c.b16 %v2693, %v2692
      %v2708 = vpack.c.b16 %v2695, %v2694
      %v2709 = vpack.c.b16 %v2697, %v2696
      %v2710 = vpack.c.b16 %v2699, %v2698
      %v2711 = vpack.c.b16 %v2701, %v2700
      %v2712 = vpack.c.b16 %v2703, %v2702
      %v2713 = vpack.c.b16 %v2705, %v2704
      %2714 = vrot.lane.b32.xlu0 %v2706, 112
      %v2715 = vpop.permute.xlu0 %2714
      %2716 = vrot.lane.b32.xlu0 %v2707, 112
      %v2717 = vpop.permute.xlu0 %2716
      %2718 = vrot.lane.b32.xlu0 %v2708, 112
      %v2719 = vpop.permute.xlu0 %2718
      %2720 = vrot.lane.b32.xlu0 %v2709, 112
      %v2721 = vpop.permute.xlu0 %2720
      %2722 = vrot.lane.b32.xlu0 %v2710, 112
      %v2723 = vpop.permute.xlu0 %2722
      %2724 = vrot.lane.b32.xlu0 %v2711, 112
      %v2725 = vpop.permute.xlu0 %2724
      %2726 = vrot.lane.b32.xlu0 %v2712, 112
      %v2727 = vpop.permute.xlu0 %2726
      %2728 = vrot.lane.b32.xlu0 %v2713, 112
      %v2729 = vpop.permute.xlu0 %2728
      %v2730 = vunpack.c.l.b16 %v2413
      %v2731 = vunpack.c.l.b16 %v2416
      %v2732 = vunpack.c.l.b16 %v2420
      %v2733 = vunpack.c.l.b16 %v2423
      %v2734 = vunpack.c.l.b16 %v2427
      %v2735 = vunpack.c.l.b16 %v2430
      %v2736 = vunpack.c.l.b16 %v2434
      %v2737 = vunpack.c.l.b16 %v2437
      %v2738 = vunpack.c.l.b16 %v2441
      %v2739 = vunpack.c.l.b16 %v2444
      %v2740 = vunpack.c.l.b16 %v2448
      %v2741 = vunpack.c.l.b16 %v2451
      %v2742 = vunpack.c.l.b16 %v2455
      %v2743 = vunpack.c.l.b16 %v2458
      %v2744 = vunpack.c.l.b16 %v2462
      %v2745 = vunpack.c.l.b16 %v2465
      %v2746 = vpack.c.b16 %v2731, %v2730
      %v2747 = vpack.c.b16 %v2733, %v2732
      %v2748 = vpack.c.b16 %v2735, %v2734
      %v2749 = vpack.c.b16 %v2737, %v2736
      %v2750 = vpack.c.b16 %v2739, %v2738
      %v2751 = vpack.c.b16 %v2741, %v2740
      %v2752 = vpack.c.b16 %v2743, %v2742
      %v2753 = vpack.c.b16 %v2745, %v2744
      %v2756 = vsel %vm1554, %v2482, %v2515
      %v2759 = vsel %vm1554, %v2483, %v2517
      %v2762 = vsel %vm1554, %v2484, %v2519
      %v2765 = vsel %vm1554, %v2485, %v2521
      %v2768 = vsel %vm1554, %v2486, %v2523
      %v2771 = vsel %vm1554, %v2487, %v2525
      %v2774 = vsel %vm1554, %v2488, %v2527
      %v2777 = vsel %vm1554, %v2489, %v2529
      %v2779 = vsel %vm1579, %v2756, %v2555
      %v2781 = vsel %vm1579, %v2759, %v2557
      %v2783 = vsel %vm1579, %v2762, %v2559
      %v2785 = vsel %vm1579, %v2765, %v2561
      %v2787 = vsel %vm1579, %v2768, %v2563
      %v2789 = vsel %vm1579, %v2771, %v2565
      %v2791 = vsel %vm1579, %v2774, %v2567
      %v2793 = vsel %vm1579, %v2777, %v2569
      %v2795 = vsel %vm1596, %v2779, %v2595
      %v2797 = vsel %vm1596, %v2781, %v2597
      %v2799 = vsel %vm1596, %v2783, %v2599
      %v2801 = vsel %vm1596, %v2785, %v2601
      %v2803 = vsel %vm1596, %v2787, %v2603
      %v2805 = vsel %vm1596, %v2789, %v2605
      %v2807 = vsel %vm1596, %v2791, %v2607
      %v2809 = vsel %vm1596, %v2793, %v2609
      %v2810 = vsel %vm1613, %v2795, %v1379
      %v2811 = vsel %vm1613, %v2797, %v1381
      %v2812 = vsel %vm1613, %v2799, %v1383
      %v2813 = vsel %vm1613, %v2801, %v1385
      %v2814 = vsel %vm1613, %v2803, %v1387
      %v2815 = vsel %vm1613, %v2805, %v1389
      %v2816 = vsel %vm1613, %v2807, %v1391
      %v2817 = vsel %vm1613, %v2809, %v1393
      %v2819 = vsel %vm1630, %v2810, %v2635
      %v2821 = vsel %vm1630, %v2811, %v2637
      %v2823 = vsel %vm1630, %v2812, %v2639
      %v2825 = vsel %vm1630, %v2813, %v2641
      %v2827 = vsel %vm1630, %v2814, %v2643
      %v2829 = vsel %vm1630, %v2815, %v2645
      %v2831 = vsel %vm1630, %v2816, %v2647
      %v2833 = vsel %vm1630, %v2817, %v2649
      %v2835 = vsel %vm1647, %v2819, %v2675
      %v2837 = vsel %vm1647, %v2821, %v2677
      %v2839 = vsel %vm1647, %v2823, %v2679
      %v2841 = vsel %vm1647, %v2825, %v2681
      %v2843 = vsel %vm1647, %v2827, %v2683
      %v2845 = vsel %vm1647, %v2829, %v2685
      %v2847 = vsel %vm1647, %v2831, %v2687
      %v2849 = vsel %vm1647, %v2833, %v2689
      %v2851 = vsel %vm1664, %v2835, %v2715
      %v2854 = vsel %vm1664, %v2837, %v2717
      %v2857 = vsel %vm1664, %v2839, %v2719
      %v2860 = vsel %vm1664, %v2841, %v2721
      %v2863 = vsel %vm1664, %v2843, %v2723
      %v2866 = vsel %vm1664, %v2845, %v2725
      %v2869 = vsel %vm1664, %v2847, %v2727
      %v2872 = vsel %vm1664, %v2849, %v2729
      %s2874 = scalar_lea.vmem %s1, 72
      %v2875 = vld [vmem:[%s2874] sm:$0xf]
      %v2876 = vld [vmem:[%s2874 + $0x4] sm:$0xf]
      %v2877 = vld [vmem:[%s2874 + $0x8] sm:$0xf]
      %v2878 = vld [vmem:[%s2874 + $0xc] sm:$0xf]
      %v2879 = vld [vmem:[%s2874 + $0x10] sm:$0xf]
      %v2880 = vld [vmem:[%s2874 + $0x14] sm:$0xf]
      %v2881 = vld [vmem:[%s2874 + $0x18] sm:$0xf]
      %v2882 = vld [vmem:[%s2874 + $0x1c] sm:$0xf]
      %v2883 = vld [vmem:[%s2874 + $0x20] sm:$0xf]
      %v2884 = vld [vmem:[%s2874 + $0x24] sm:$0xf]
      %v2885 = vld [vmem:[%s2874 + $0x28] sm:$0xf]
      %v2886 = vld [vmem:[%s2874 + $0x2c] sm:$0xf]
      %v2887 = vld [vmem:[%s2874 + $0x30] sm:$0xf]
      %v2888 = vld [vmem:[%s2874 + $0x34] sm:$0xf]
      %v2889 = vld [vmem:[%s2874 + $0x38] sm:$0xf]
      %v2890 = vld [vmem:[%s2874 + $0x3c] sm:$0xf]
      %v2891 = vld [vmem:[%s2874 + $0x40] sm:$0xf]
      %v2892 = vld [vmem:[%s2874 + $0x44] sm:$0xf]
      %v2911 = vunpack.c.l.b16 %v2875
      %v2912 = vunpack.c.l.b16 %v2876
      %v2913 = vunpack.c.l.b16 %v2877
      %v2914 = vunpack.c.l.b16 %v2878
      %v2915 = vunpack.c.l.b16 %v2879
      %v2916 = vunpack.c.l.b16 %v2880
      %v2917 = vunpack.c.l.b16 %v2881
      %v2918 = vunpack.c.l.b16 %v2882
      %v2919 = vunpack.c.l.b16 %v2883
      %v2920 = vunpack.c.l.b16 %v2884
      %v2921 = vunpack.c.l.b16 %v2885
      %v2922 = vunpack.c.l.b16 %v2886
      %v2923 = vunpack.c.l.b16 %v2887
      %v2924 = vunpack.c.l.b16 %v2888
      %v2925 = vunpack.c.l.b16 %v2889
      %v2926 = vunpack.c.l.b16 %v2890
      %v2927 = vunpack.c.l.b16 %v2891
      %v2928 = vunpack.c.l.b16 %v2892
      %v2929 = vpack.c.b16 %v2912, %v2911
      %v2930 = vpack.c.b16 %v2914, %v2913
      %v2931 = vpack.c.b16 %v2916, %v2915
      %v2932 = vpack.c.b16 %v2918, %v2917
      %v2933 = vpack.c.b16 %v2920, %v2919
      %v2934 = vpack.c.b16 %v2922, %v2921
      %v2935 = vpack.c.b16 %v2924, %v2923
      %v2936 = vpack.c.b16 %v2926, %v2925
      %v2937 = vpack.c.b16 %v2928, %v2927
      %v2948 = vsel %vm1554, %v2746, 0
      %v2951 = vsel %vm1554, %v2747, 0
      %v2954 = vsel %vm1554, %v2748, 0
      %v2957 = vsel %vm1554, %v2749, 0
      %v2960 = vsel %vm1554, %v2750, 0
      %v2963 = vsel %vm1554, %v2751, 0
      %v2966 = vsel %vm1554, %v2752, 0
      %v2969 = vsel %vm1554, %v2753, 0
      %2971 = vmatprep.subr.bf16.mxu0 0
      %2972 = vmatpush1.bf16.msra.mxu0 %v2936
      %2973 = vmatprep.subr.bf16.mxu0 0
      %2974 = vmatpush1.bf16.msra.mxu0 %v2935
      %2975 = vmatprep.subr.bf16.mxu0 0
      %2976 = vmatpush1.bf16.msra.mxu0 %v2934
      %2977 = vmatprep.subr.bf16.mxu0 0
      %2978 = vmatpush1.bf16.msra.mxu0 %v2933
      %2979 = vmatprep.subr.bf16.mxu0 0
      %2980 = vmatpush1.bf16.msra.mxu0 %v2932
      %2981 = vmatprep.subr.bf16.mxu0 0
      %2982 = vmatpush1.bf16.msra.mxu0 %v2931
      %2983 = vmatprep.subr.bf16.mxu0 0
      %2984 = vmatpush1.bf16.msra.mxu0 %v2930
      %2985 = vmatprep.subr.bf16.mxu0 0
      %2986 = vmatpush1.bf16.msra.mxu0 %v2929
      %2987 = vmatprep.subr.bf16.mxu0 0
      %2988 = vmatpush2.bf16.msra.mxu0 0
      %2989 = vmatprep.subr.bf16.mxu0 0
      %2990 = vmatpush2.bf16.msra.mxu0 0
      %2991 = vmatprep.subr.bf16.mxu0 0
      %2992 = vmatpush2.bf16.msra.mxu0 0
      %2993 = vmatprep.subr.bf16.mxu0 0
      %2994 = vmatpush2.bf16.msra.mxu0 0
      %2995 = vmatprep.subr.bf16.mxu0 0
      %2996 = vmatpush2.bf16.msra.mxu0 0
      %2997 = vmatprep.subr.bf16.mxu0 0
      %2998 = vmatpush2.bf16.msra.mxu0 0
      %2999 = vmatprep.subr.bf16.mxu0 0
      %3000 = vmatpush2.bf16.msra.mxu0 0
      %3001 = vmatprep.subr.bf16.mxu0 0
      %3002 = vmatpush2.bf16.msra.mxu0 %v2937
      %3003 = vmatprep.mubr.bf16.mxu0 %v2948
      %3004 = vmatmul.mubr.bf16.gmra.mxu0 %v2851
      %v3005 = vpop.f32.mrf.mxu0
      %v3006 = vadd.f32 0.0, %v3005
      %v3007 = vpop.f32.mrf.mxu0
      %v3008 = vpop.f32.mrf.mxu0
      %v3009 = vadd.f32 0.0, %v3008
      %v3010 = vpop.f32.mrf.mxu0
      %3011 = vmatprep.mubr.bf16.mxu0 %v2951
      %3012 = vmatmul.mubr.bf16.gmra.mxu0 %v2854
      %v3013 = vpop.f32.mrf.mxu0
      %v3014 = vadd.f32 0.0, %v3013
      %v3015 = vpop.f32.mrf.mxu0
      %v3016 = vpop.f32.mrf.mxu0
      %v3017 = vadd.f32 0.0, %v3016
      %v3018 = vpop.f32.mrf.mxu0
      %3019 = vmatprep.mubr.bf16.mxu0 %v2954
      %3020 = vmatmul.mubr.bf16.gmra.mxu0 %v2857
      %v3021 = vpop.f32.mrf.mxu0
      %v3022 = vadd.f32 0.0, %v3021
      %v3023 = vpop.f32.mrf.mxu0
      %v3024 = vpop.f32.mrf.mxu0
      %v3025 = vadd.f32 0.0, %v3024
      %v3026 = vpop.f32.mrf.mxu0
      %3027 = vmatprep.mubr.bf16.mxu0 %v2957
      %3028 = vmatmul.mubr.bf16.gmra.mxu0 %v2860
      %v3029 = vpop.f32.mrf.mxu0
      %v3030 = vadd.f32 0.0, %v3029
      %v3031 = vpop.f32.mrf.mxu0
      %v3032 = vpop.f32.mrf.mxu0
      %v3033 = vadd.f32 0.0, %v3032
      %v3034 = vpop.f32.mrf.mxu0
      %3035 = vmatprep.mubr.bf16.mxu0 %v2960
      %3036 = vmatmul.mubr.bf16.gmra.mxu0 %v2863
      %v3037 = vpop.f32.mrf.mxu0
      %v3038 = vadd.f32 0.0, %v3037
      %v3039 = vpop.f32.mrf.mxu0
      %v3040 = vpop.f32.mrf.mxu0
      %v3041 = vadd.f32 0.0, %v3040
      %v3042 = vpop.f32.mrf.mxu0
      %3043 = vmatprep.mubr.bf16.mxu0 %v2963
      %3044 = vmatmul.mubr.bf16.gmra.mxu0 %v2866
      %v3045 = vpop.f32.mrf.mxu0
      %v3046 = vadd.f32 0.0, %v3045
      %v3047 = vpop.f32.mrf.mxu0
      %v3048 = vpop.f32.mrf.mxu0
      %v3049 = vadd.f32 0.0, %v3048
      %v3050 = vpop.f32.mrf.mxu0
      %3051 = vmatprep.mubr.bf16.mxu0 %v2966
      %3052 = vmatmul.mubr.bf16.gmra.mxu0 %v2869
      %v3053 = vpop.f32.mrf.mxu0
      %v3054 = vadd.f32 0.0, %v3053
      %v3055 = vpop.f32.mrf.mxu0
      %v3056 = vpop.f32.mrf.mxu0
      %v3057 = vadd.f32 0.0, %v3056
      %v3058 = vpop.f32.mrf.mxu0
      %3059 = vmatprep.mubr.bf16.mxu0 %v2969
      %3060 = vmatmul.mubr.bf16.gmra.mxu0 %v2872
      %v3061 = vpop.f32.mrf.mxu0
      %v3062 = vadd.f32 0.0, %v3061
      %v3063 = vpop.f32.mrf.mxu0
      %v3064 = vpop.f32.mrf.mxu0
      %v3065 = vadd.f32 0.0, %v3064
      %v3066 = vpop.f32.mrf.mxu0
      %3067 = vdwg.mxu0
      %s3068 = scalar_lea.vmem %s197, 64
      %v3069 = vld [vmem:[%s3068] sm:$0xc]
      %v3070 = vld [vmem:[%s3068 + $0x4] sm:$0xf]
      %v3071 = vld [vmem:[%s3068 + $0x8] sm:$0x3]
      %v3072 = vld [vmem:[%s3068 + $0x10] sm:$0xc]
      %v3073 = vld [vmem:[%s3068 + $0x14] sm:$0xf]
      %v3074 = vld [vmem:[%s3068 + $0x18] sm:$0x3]
      %v3075 = vld [vmem:[%s3068 + $0x20] sm:$0xc]
      %v3076 = vld [vmem:[%s3068 + $0x24] sm:$0xf]
      %v3077 = vld [vmem:[%s3068 + $0x28] sm:$0x3]
      %v3078 = vld [vmem:[%s3068 + $0x30] sm:$0xc]
      %v3079 = vld [vmem:[%s3068 + $0x34] sm:$0xf]
      %v3080 = vld [vmem:[%s3068 + $0x38] sm:$0x3]
      %v3081 = vld [vmem:[%s3068 + $0x40] sm:$0xc]
      %v3082 = vld [vmem:[%s3068 + $0x44] sm:$0xf]
      %v3083 = vld [vmem:[%s3068 + $0x48] sm:$0x3]
      %v3084 = vld [vmem:[%s3068 + $0x50] sm:$0xc]
      %v3085 = vld [vmem:[%s3068 + $0x54] sm:$0xf]
      %v3086 = vld [vmem:[%s3068 + $0x58] sm:$0x3]
      %v3087 = vld [vmem:[%s3068 + $0x60] sm:$0xc]
      %v3088 = vld [vmem:[%s3068 + $0x64] sm:$0xf]
      %v3089 = vld [vmem:[%s3068 + $0x68] sm:$0x3]
      %v3090 = vld [vmem:[%s3068 + $0x70] sm:$0xc]
      %v3091 = vld [vmem:[%s3068 + $0x74] sm:$0xf]
      %v3092 = vld [vmem:[%s3068 + $0x78] sm:$0x3]
      %vm3117 = vcmask 1041408
      %vm3118 = vcmask 1045508
      %vm3119 = vmor %vm3117, %vm3118
      %v3120 = vrot.slane %v3069, 6
      %v3121 = vrot.slane %v3120, 4
      %v3122 = vrot.slane %v3070, 6
      %v3123 = vsel %vm3119, %v3121, %v3122
      %v3124 = vrot.slane %v3122, 4
      %v3125 = vrot.slane %v3071, 6
      %v3126 = vsel %vm3119, %v3124, %v3125
      %v3127 = vrot.slane %v3072, 6
      %v3128 = vrot.slane %v3127, 4
      %v3129 = vrot.slane %v3073, 6
      %v3130 = vsel %vm3119, %v3128, %v3129
      %v3131 = vrot.slane %v3129, 4
      %v3132 = vrot.slane %v3074, 6
      %v3133 = vsel %vm3119, %v3131, %v3132
      %v3134 = vrot.slane %v3075, 6
      %v3135 = vrot.slane %v3134, 4
      %v3136 = vrot.slane %v3076, 6
      %v3137 = vsel %vm3119, %v3135, %v3136
      %v3138 = vrot.slane %v3136, 4
      %v3139 = vrot.slane %v3077, 6
      %v3140 = vsel %vm3119, %v3138, %v3139
      %v3141 = vrot.slane %v3078, 6
      %v3142 = vrot.slane %v3141, 4
      %v3143 = vrot.slane %v3079, 6
      %v3144 = vsel %vm3119, %v3142, %v3143
      %v3145 = vrot.slane %v3143, 4
      %v3146 = vrot.slane %v3080, 6
      %v3147 = vsel %vm3119, %v3145, %v3146
      %v3148 = vrot.slane %v3081, 6
      %v3149 = vrot.slane %v3148, 4
      %v3150 = vrot.slane %v3082, 6
      %v3151 = vsel %vm3119, %v3149, %v3150
      %v3152 = vrot.slane %v3150, 4
      %v3153 = vrot.slane %v3083, 6
      %v3154 = vsel %vm3119, %v3152, %v3153
      %v3155 = vrot.slane %v3084, 6
      %v3156 = vrot.slane %v3155, 4
      %v3157 = vrot.slane %v3085, 6
      %v3158 = vsel %vm3119, %v3156, %v3157
      %v3159 = vrot.slane %v3157, 4
      %v3160 = vrot.slane %v3086, 6
      %v3161 = vsel %vm3119, %v3159, %v3160
      %v3162 = vrot.slane %v3087, 6
      %v3163 = vrot.slane %v3162, 4
      %v3164 = vrot.slane %v3088, 6
      %v3165 = vsel %vm3119, %v3163, %v3164
      %v3166 = vrot.slane %v3164, 4
      %v3167 = vrot.slane %v3089, 6
      %v3168 = vsel %vm3119, %v3166, %v3167
      %v3169 = vrot.slane %v3090, 6
      %v3170 = vrot.slane %v3169, 4
      %v3171 = vrot.slane %v3091, 6
      %v3172 = vsel %vm3119, %v3170, %v3171
      %v3173 = vrot.slane %v3171, 4
      %v3174 = vrot.slane %v3092, 6
      %v3175 = vsel %vm3119, %v3173, %v3174
      %v3176 = vld [vmem:[%s3068 + $0x8] sm:$0xf]
      %v3177 = vld [vmem:[%s3068 + $0x18] sm:$0xf]
      %v3178 = vld [vmem:[%s3068 + $0x28] sm:$0xf]
      %v3179 = vld [vmem:[%s3068 + $0x38] sm:$0xf]
      %v3180 = vld [vmem:[%s3068 + $0x48] sm:$0xf]
      %v3181 = vld [vmem:[%s3068 + $0x58] sm:$0xf]
      %v3182 = vld [vmem:[%s3068 + $0x68] sm:$0xf]
      %v3183 = vld [vmem:[%s3068 + $0x78] sm:$0xf]
      %v3184 = vld [vmem:[%s3068 + $0x4] sm:$0xc]
      %v3185 = vld [vmem:[%s3068 + $0xc] sm:$0x3]
      %v3186 = vld [vmem:[%s3068 + $0x14] sm:$0xc]
      %v3187 = vld [vmem:[%s3068 + $0x1c] sm:$0x3]
      %v3188 = vld [vmem:[%s3068 + $0x24] sm:$0xc]
      %v3189 = vld [vmem:[%s3068 + $0x2c] sm:$0x3]
      %v3190 = vld [vmem:[%s3068 + $0x34] sm:$0xc]
      %v3191 = vld [vmem:[%s3068 + $0x3c] sm:$0x3]
      %v3192 = vld [vmem:[%s3068 + $0x44] sm:$0xc]
      %v3193 = vld [vmem:[%s3068 + $0x4c] sm:$0x3]
      %v3194 = vld [vmem:[%s3068 + $0x54] sm:$0xc]
      %v3195 = vld [vmem:[%s3068 + $0x5c] sm:$0x3]
      %v3196 = vld [vmem:[%s3068 + $0x64] sm:$0xc]
      %v3197 = vld [vmem:[%s3068 + $0x6c] sm:$0x3]
      %v3198 = vld [vmem:[%s3068 + $0x74] sm:$0xc]
      %v3199 = vld [vmem:[%s3068 + $0x7c] sm:$0x3]
      %v3224 = vrot.slane %v3184, 6
      %v3225 = vrot.slane %v3224, 4
      %v3226 = vrot.slane %v3176, 6
      %v3227 = vsel %vm3119, %v3225, %v3226
      %v3228 = vrot.slane %v3226, 4
      %v3229 = vrot.slane %v3185, 6
      %v3230 = vsel %vm3119, %v3228, %v3229
      %v3231 = vrot.slane %v3186, 6
      %v3232 = vrot.slane %v3231, 4
      %v3233 = vrot.slane %v3177, 6
      %v3234 = vsel %vm3119, %v3232, %v3233
      %v3235 = vrot.slane %v3233, 4
      %v3236 = vrot.slane %v3187, 6
      %v3237 = vsel %vm3119, %v3235, %v3236
      %v3238 = vrot.slane %v3188, 6
      %v3239 = vrot.slane %v3238, 4
      %v3240 = vrot.slane %v3178, 6
      %v3241 = vsel %vm3119, %v3239, %v3240
      %v3242 = vrot.slane %v3240, 4
      %v3243 = vrot.slane %v3189, 6
      %v3244 = vsel %vm3119, %v3242, %v3243
      %v3245 = vrot.slane %v3190, 6
      %v3246 = vrot.slane %v3245, 4
      %v3247 = vrot.slane %v3179, 6
      %v3248 = vsel %vm3119, %v3246, %v3247
      %v3249 = vrot.slane %v3247, 4
      %v3250 = vrot.slane %v3191, 6
      %v3251 = vsel %vm3119, %v3249, %v3250
      %v3252 = vrot.slane %v3192, 6
      %v3253 = vrot.slane %v3252, 4
      %v3254 = vrot.slane %v3180, 6
      %v3255 = vsel %vm3119, %v3253, %v3254
      %v3256 = vrot.slane %v3254, 4
      %v3257 = vrot.slane %v3193, 6
      %v3258 = vsel %vm3119, %v3256, %v3257
      %v3259 = vrot.slane %v3194, 6
      %v3260 = vrot.slane %v3259, 4
      %v3261 = vrot.slane %v3181, 6
      %v3262 = vsel %vm3119, %v3260, %v3261
      %v3263 = vrot.slane %v3261, 4
      %v3264 = vrot.slane %v3195, 6
      %v3265 = vsel %vm3119, %v3263, %v3264
      %v3266 = vrot.slane %v3196, 6
      %v3267 = vrot.slane %v3266, 4
      %v3268 = vrot.slane %v3182, 6
      %v3269 = vsel %vm3119, %v3267, %v3268
      %v3270 = vrot.slane %v3268, 4
      %v3271 = vrot.slane %v3197, 6
      %v3272 = vsel %vm3119, %v3270, %v3271
      %v3273 = vrot.slane %v3198, 6
      %v3274 = vrot.slane %v3273, 4
      %v3275 = vrot.slane %v3183, 6
      %v3276 = vsel %vm3119, %v3274, %v3275
      %v3277 = vrot.slane %v3275, 4
      %v3278 = vrot.slane %v3199, 6
      %v3279 = vsel %vm3119, %v3277, %v3278
      %v3280 = vld [vmem:[%s536] sm:$0xc]
      %v3281 = vld [vmem:[%s536 + $0x8] sm:$0x3]
      %v3282 = vld [vmem:[%s536 + $0x10] sm:$0xc]
      %v3283 = vld [vmem:[%s536 + $0x18] sm:$0x3]
      %v3284 = vld [vmem:[%s536 + $0x20] sm:$0xc]
      %v3285 = vld [vmem:[%s536 + $0x28] sm:$0x3]
      %v3286 = vld [vmem:[%s536 + $0x30] sm:$0xc]
      %v3287 = vld [vmem:[%s536 + $0x38] sm:$0x3]
      %v3288 = vld [vmem:[%s536 + $0x40] sm:$0xc]
      %v3289 = vld [vmem:[%s536 + $0x48] sm:$0x3]
      %v3290 = vld [vmem:[%s536 + $0x50] sm:$0xc]
      %v3291 = vld [vmem:[%s536 + $0x58] sm:$0x3]
      %v3292 = vld [vmem:[%s536 + $0x60] sm:$0xc]
      %v3293 = vld [vmem:[%s536 + $0x68] sm:$0x3]
      %v3294 = vld [vmem:[%s536 + $0x70] sm:$0xc]
      %v3295 = vld [vmem:[%s536 + $0x78] sm:$0x3]
      %v3312 = vrot.slane %v3280, 6
      %v3313 = vrot.slane %v3312, 4
      %v3314 = vrot.slane %v538, 6
      %v3315 = vsel %vm3119, %v3313, %v3314
      %v3316 = vrot.slane %v3314, 4
      %v3317 = vrot.slane %v3281, 6
      %v3318 = vsel %vm3119, %v3316, %v3317
      %v3319 = vrot.slane %v3282, 6
      %v3320 = vrot.slane %v3319, 4
      %v3321 = vrot.slane %v541, 6
      %v3322 = vsel %vm3119, %v3320, %v3321
      %v3323 = vrot.slane %v3321, 4
      %v3324 = vrot.slane %v3283, 6
      %v3325 = vsel %vm3119, %v3323, %v3324
      %v3326 = vrot.slane %v3284, 6
      %v3327 = vrot.slane %v3326, 4
      %v3328 = vrot.slane %v544, 6
      %v3329 = vsel %vm3119, %v3327, %v3328
      %v3330 = vrot.slane %v3328, 4
      %v3331 = vrot.slane %v3285, 6
      %v3332 = vsel %vm3119, %v3330, %v3331
      %v3333 = vrot.slane %v3286, 6
      %v3334 = vrot.slane %v3333, 4
      %v3335 = vrot.slane %v547, 6
      %v3336 = vsel %vm3119, %v3334, %v3335
      %v3337 = vrot.slane %v3335, 4
      %v3338 = vrot.slane %v3287, 6
      %v3339 = vsel %vm3119, %v3337, %v3338
      %v3340 = vrot.slane %v3288, 6
      %v3341 = vrot.slane %v3340, 4
      %v3342 = vrot.slane %v550, 6
      %v3343 = vsel %vm3119, %v3341, %v3342
      %v3344 = vrot.slane %v3342, 4
      %v3345 = vrot.slane %v3289, 6
      %v3346 = vsel %vm3119, %v3344, %v3345
      %v3347 = vrot.slane %v3290, 6
      %v3348 = vrot.slane %v3347, 4
      %v3349 = vrot.slane %v553, 6
      %v3350 = vsel %vm3119, %v3348, %v3349
      %v3351 = vrot.slane %v3349, 4
      %v3352 = vrot.slane %v3291, 6
      %v3353 = vsel %vm3119, %v3351, %v3352
      %v3354 = vrot.slane %v3292, 6
      %v3355 = vrot.slane %v3354, 4
      %v3356 = vrot.slane %v556, 6
      %v3357 = vsel %vm3119, %v3355, %v3356
      %v3358 = vrot.slane %v3356, 4
      %v3359 = vrot.slane %v3293, 6
      %v3360 = vsel %vm3119, %v3358, %v3359
      %v3361 = vrot.slane %v3294, 6
      %v3362 = vrot.slane %v3361, 4
      %v3363 = vrot.slane %v559, 6
      %v3364 = vsel %vm3119, %v3362, %v3363
      %v3365 = vrot.slane %v3363, 4
      %v3366 = vrot.slane %v3295, 6
      %v3367 = vsel %vm3119, %v3365, %v3366
      %v3368 = vld [vmem:[%s536 + $0x4] sm:$0xc]
      %v3369 = vld [vmem:[%s536 + $0xc] sm:$0x3]
      %v3370 = vld [vmem:[%s536 + $0x14] sm:$0xc]
      %v3371 = vld [vmem:[%s536 + $0x1c] sm:$0x3]
      %v3372 = vld [vmem:[%s536 + $0x24] sm:$0xc]
      %v3373 = vld [vmem:[%s536 + $0x2c] sm:$0x3]
      %v3374 = vld [vmem:[%s536 + $0x34] sm:$0xc]
      %v3375 = vld [vmem:[%s536 + $0x3c] sm:$0x3]
      %v3376 = vld [vmem:[%s536 + $0x44] sm:$0xc]
      %v3377 = vld [vmem:[%s536 + $0x4c] sm:$0x3]
      %v3378 = vld [vmem:[%s536 + $0x54] sm:$0xc]
      %v3379 = vld [vmem:[%s536 + $0x5c] sm:$0x3]
      %v3380 = vld [vmem:[%s536 + $0x64] sm:$0xc]
      %v3381 = vld [vmem:[%s536 + $0x6c] sm:$0x3]
      %v3382 = vld [vmem:[%s536 + $0x74] sm:$0xc]
      %v3383 = vld [vmem:[%s536 + $0x7c] sm:$0x3]
      %v3400 = vrot.slane %v3368, 6
      %v3401 = vrot.slane %v3400, 4
      %v3402 = vrot.slane %v539, 6
      %v3403 = vsel %vm3119, %v3401, %v3402
      %v3404 = vrot.slane %v3402, 4
      %v3405 = vrot.slane %v3369, 6
      %v3406 = vsel %vm3119, %v3404, %v3405
      %v3407 = vrot.slane %v3370, 6
      %v3408 = vrot.slane %v3407, 4
      %v3409 = vrot.slane %v542, 6
      %v3410 = vsel %vm3119, %v3408, %v3409
      %v3411 = vrot.slane %v3409, 4
      %v3412 = vrot.slane %v3371, 6
      %v3413 = vsel %vm3119, %v3411, %v3412
      %v3414 = vrot.slane %v3372, 6
      %v3415 = vrot.slane %v3414, 4
      %v3416 = vrot.slane %v545, 6
      %v3417 = vsel %vm3119, %v3415, %v3416
      %v3418 = vrot.slane %v3416, 4
      %v3419 = vrot.slane %v3373, 6
      %v3420 = vsel %vm3119, %v3418, %v3419
      %v3421 = vrot.slane %v3374, 6
      %v3422 = vrot.slane %v3421, 4
      %v3423 = vrot.slane %v548, 6
      %v3424 = vsel %vm3119, %v3422, %v3423
      %v3425 = vrot.slane %v3423, 4
      %v3426 = vrot.slane %v3375, 6
      %v3427 = vsel %vm3119, %v3425, %v3426
      %v3428 = vrot.slane %v3376, 6
      %v3429 = vrot.slane %v3428, 4
      %v3430 = vrot.slane %v551, 6
      %v3431 = vsel %vm3119, %v3429, %v3430
      %v3432 = vrot.slane %v3430, 4
      %v3433 = vrot.slane %v3377, 6
      %v3434 = vsel %vm3119, %v3432, %v3433
      %v3435 = vrot.slane %v3378, 6
      %v3436 = vrot.slane %v3435, 4
      %v3437 = vrot.slane %v554, 6
      %v3438 = vsel %vm3119, %v3436, %v3437
      %v3439 = vrot.slane %v3437, 4
      %v3440 = vrot.slane %v3379, 6
      %v3441 = vsel %vm3119, %v3439, %v3440
      %v3442 = vrot.slane %v3380, 6
      %v3443 = vrot.slane %v3442, 4
      %v3444 = vrot.slane %v557, 6
      %v3445 = vsel %vm3119, %v3443, %v3444
      %v3446 = vrot.slane %v3444, 4
      %v3447 = vrot.slane %v3381, 6
      %v3448 = vsel %vm3119, %v3446, %v3447
      %v3449 = vrot.slane %v3382, 6
      %v3450 = vrot.slane %v3449, 4
      %v3451 = vrot.slane %v560, 6
      %v3452 = vsel %vm3119, %v3450, %v3451
      %v3453 = vrot.slane %v3451, 4
      %v3454 = vrot.slane %v3383, 6
      %v3455 = vsel %vm3119, %v3453, %v3454
      %s3456 = scalar_lea.vmem %s197, 192
      %v3457 = vld [vmem:[%s3456] sm:$0xc]
      %v3458 = vld [vmem:[%s3456 + $0x4] sm:$0xf]
      %v3459 = vld [vmem:[%s3456 + $0x8] sm:$0x3]
      %v3460 = vld [vmem:[%s3456 + $0x10] sm:$0xc]
      %v3461 = vld [vmem:[%s3456 + $0x14] sm:$0xf]
      %v3462 = vld [vmem:[%s3456 + $0x18] sm:$0x3]
      %v3463 = vld [vmem:[%s3456 + $0x20] sm:$0xc]
      %v3464 = vld [vmem:[%s3456 + $0x24] sm:$0xf]
      %v3465 = vld [vmem:[%s3456 + $0x28] sm:$0x3]
      %v3466 = vld [vmem:[%s3456 + $0x30] sm:$0xc]
      %v3467 = vld [vmem:[%s3456 + $0x34] sm:$0xf]
      %v3468 = vld [vmem:[%s3456 + $0x38] sm:$0x3]
      %v3469 = vld [vmem:[%s3456 + $0x40] sm:$0xc]
      %v3470 = vld [vmem:[%s3456 + $0x44] sm:$0xf]
      %v3471 = vld [vmem:[%s3456 + $0x48] sm:$0x3]
      %v3472 = vld [vmem:[%s3456 + $0x50] sm:$0xc]
      %v3473 = vld [vmem:[%s3456 + $0x54] sm:$0xf]
      %v3474 = vld [vmem:[%s3456 + $0x58] sm:$0x3]
      %v3475 = vld [vmem:[%s3456 + $0x60] sm:$0xc]
      %v3476 = vld [vmem:[%s3456 + $0x64] sm:$0xf]
      %v3477 = vld [vmem:[%s3456 + $0x68] sm:$0x3]
      %v3478 = vld [vmem:[%s3456 + $0x70] sm:$0xc]
      %v3479 = vld [vmem:[%s3456 + $0x74] sm:$0xf]
      %v3480 = vld [vmem:[%s3456 + $0x78] sm:$0x3]
      %v3505 = vrot.slane %v3457, 6
      %v3506 = vrot.slane %v3505, 4
      %v3507 = vrot.slane %v3458, 6
      %v3508 = vsel %vm3119, %v3506, %v3507
      %v3509 = vrot.slane %v3507, 4
      %v3510 = vrot.slane %v3459, 6
      %v3511 = vsel %vm3119, %v3509, %v3510
      %v3512 = vrot.slane %v3460, 6
      %v3513 = vrot.slane %v3512, 4
      %v3514 = vrot.slane %v3461, 6
      %v3515 = vsel %vm3119, %v3513, %v3514
      %v3516 = vrot.slane %v3514, 4
      %v3517 = vrot.slane %v3462, 6
      %v3518 = vsel %vm3119, %v3516, %v3517
      %v3519 = vrot.slane %v3463, 6
      %v3520 = vrot.slane %v3519, 4
      %v3521 = vrot.slane %v3464, 6
      %v3522 = vsel %vm3119, %v3520, %v3521
      %v3523 = vrot.slane %v3521, 4
      %v3524 = vrot.slane %v3465, 6
      %v3525 = vsel %vm3119, %v3523, %v3524
      %v3526 = vrot.slane %v3466, 6
      %v3527 = vrot.slane %v3526, 4
      %v3528 = vrot.slane %v3467, 6
      %v3529 = vsel %vm3119, %v3527, %v3528
      %v3530 = vrot.slane %v3528, 4
      %v3531 = vrot.slane %v3468, 6
      %v3532 = vsel %vm3119, %v3530, %v3531
      %v3533 = vrot.slane %v3469, 6
      %v3534 = vrot.slane %v3533, 4
      %v3535 = vrot.slane %v3470, 6
      %v3536 = vsel %vm3119, %v3534, %v3535
      %v3537 = vrot.slane %v3535, 4
      %v3538 = vrot.slane %v3471, 6
      %v3539 = vsel %vm3119, %v3537, %v3538
      %v3540 = vrot.slane %v3472, 6
      %v3541 = vrot.slane %v3540, 4
      %v3542 = vrot.slane %v3473, 6
      %v3543 = vsel %vm3119, %v3541, %v3542
      %v3544 = vrot.slane %v3542, 4
      %v3545 = vrot.slane %v3474, 6
      %v3546 = vsel %vm3119, %v3544, %v3545
      %v3547 = vrot.slane %v3475, 6
      %v3548 = vrot.slane %v3547, 4
      %v3549 = vrot.slane %v3476, 6
      %v3550 = vsel %vm3119, %v3548, %v3549
      %v3551 = vrot.slane %v3549, 4
      %v3552 = vrot.slane %v3477, 6
      %v3553 = vsel %vm3119, %v3551, %v3552
      %v3554 = vrot.slane %v3478, 6
      %v3555 = vrot.slane %v3554, 4
      %v3556 = vrot.slane %v3479, 6
      %v3557 = vsel %vm3119, %v3555, %v3556
      %v3558 = vrot.slane %v3556, 4
      %v3559 = vrot.slane %v3480, 6
      %v3560 = vsel %vm3119, %v3558, %v3559
      %v3561 = vld [vmem:[%s3456 + $0x8] sm:$0xf]
      %v3562 = vld [vmem:[%s3456 + $0x18] sm:$0xf]
      %v3563 = vld [vmem:[%s3456 + $0x28] sm:$0xf]
      %v3564 = vld [vmem:[%s3456 + $0x38] sm:$0xf]
      %v3565 = vld [vmem:[%s3456 + $0x48] sm:$0xf]
      %v3566 = vld [vmem:[%s3456 + $0x58] sm:$0xf]
      %v3567 = vld [vmem:[%s3456 + $0x68] sm:$0xf]
      %v3568 = vld [vmem:[%s3456 + $0x78] sm:$0xf]
      %v3569 = vld [vmem:[%s3456 + $0x4] sm:$0xc]
      %v3570 = vld [vmem:[%s3456 + $0xc] sm:$0x3]
      %v3571 = vld [vmem:[%s3456 + $0x14] sm:$0xc]
      %v3572 = vld [vmem:[%s3456 + $0x1c] sm:$0x3]
      %v3573 = vld [vmem:[%s3456 + $0x24] sm:$0xc]
      %v3574 = vld [vmem:[%s3456 + $0x2c] sm:$0x3]
      %v3575 = vld [vmem:[%s3456 + $0x34] sm:$0xc]
      %v3576 = vld [vmem:[%s3456 + $0x3c] sm:$0x3]
      %v3577 = vld [vmem:[%s3456 + $0x44] sm:$0xc]
      %v3578 = vld [vmem:[%s3456 + $0x4c] sm:$0x3]
      %v3579 = vld [vmem:[%s3456 + $0x54] sm:$0xc]
      %v3580 = vld [vmem:[%s3456 + $0x5c] sm:$0x3]
      %v3581 = vld [vmem:[%s3456 + $0x64] sm:$0xc]
      %v3582 = vld [vmem:[%s3456 + $0x6c] sm:$0x3]
      %v3583 = vld [vmem:[%s3456 + $0x74] sm:$0xc]
      %v3584 = vld [vmem:[%s3456 + $0x7c] sm:$0x3]
      %v3609 = vrot.slane %v3569, 6
      %v3610 = vrot.slane %v3609, 4
      %v3611 = vrot.slane %v3561, 6
      %v3612 = vsel %vm3119, %v3610, %v3611
      %v3613 = vrot.slane %v3611, 4
      %v3614 = vrot.slane %v3570, 6
      %v3615 = vsel %vm3119, %v3613, %v3614
      %v3616 = vrot.slane %v3571, 6
      %v3617 = vrot.slane %v3616, 4
      %v3618 = vrot.slane %v3562, 6
      %v3619 = vsel %vm3119, %v3617, %v3618
      %v3620 = vrot.slane %v3618, 4
      %v3621 = vrot.slane %v3572, 6
      %v3622 = vsel %vm3119, %v3620, %v3621
      %v3623 = vrot.slane %v3573, 6
      %v3624 = vrot.slane %v3623, 4
      %v3625 = vrot.slane %v3563, 6
      %v3626 = vsel %vm3119, %v3624, %v3625
      %v3627 = vrot.slane %v3625, 4
      %v3628 = vrot.slane %v3574, 6
      %v3629 = vsel %vm3119, %v3627, %v3628
      %v3630 = vrot.slane %v3575, 6
      %v3631 = vrot.slane %v3630, 4
      %v3632 = vrot.slane %v3564, 6
      %v3633 = vsel %vm3119, %v3631, %v3632
      %v3634 = vrot.slane %v3632, 4
      %v3635 = vrot.slane %v3576, 6
      %v3636 = vsel %vm3119, %v3634, %v3635
      %v3637 = vrot.slane %v3577, 6
      %v3638 = vrot.slane %v3637, 4
      %v3639 = vrot.slane %v3565, 6
      %v3640 = vsel %vm3119, %v3638, %v3639
      %v3641 = vrot.slane %v3639, 4
      %v3642 = vrot.slane %v3578, 6
      %v3643 = vsel %vm3119, %v3641, %v3642
      %v3644 = vrot.slane %v3579, 6
      %v3645 = vrot.slane %v3644, 4
      %v3646 = vrot.slane %v3566, 6
      %v3647 = vsel %vm3119, %v3645, %v3646
      %v3648 = vrot.slane %v3646, 4
      %v3649 = vrot.slane %v3580, 6
      %v3650 = vsel %vm3119, %v3648, %v3649
      %v3651 = vrot.slane %v3581, 6
      %v3652 = vrot.slane %v3651, 4
      %v3653 = vrot.slane %v3567, 6
      %v3654 = vsel %vm3119, %v3652, %v3653
      %v3655 = vrot.slane %v3653, 4
      %v3656 = vrot.slane %v3582, 6
      %v3657 = vsel %vm3119, %v3655, %v3656
      %v3658 = vrot.slane %v3583, 6
      %v3659 = vrot.slane %v3658, 4
      %v3660 = vrot.slane %v3568, 6
      %v3661 = vsel %vm3119, %v3659, %v3660
      %v3662 = vrot.slane %v3660, 4
      %v3663 = vrot.slane %v3584, 6
      %v3664 = vsel %vm3119, %v3662, %v3663
      %v3665 = vunpack.c.l.b16 %v3123
      %v3666 = vunpack.c.l.b16 %v3126
      %v3667 = vunpack.c.l.b16 %v3130
      %v3668 = vunpack.c.l.b16 %v3133
      %v3669 = vunpack.c.l.b16 %v3137
      %v3670 = vunpack.c.l.b16 %v3140
      %v3671 = vunpack.c.l.b16 %v3144
      %v3672 = vunpack.c.l.b16 %v3147
      %v3673 = vunpack.c.l.b16 %v3151
      %v3674 = vunpack.c.l.b16 %v3154
      %v3675 = vunpack.c.l.b16 %v3158
      %v3676 = vunpack.c.l.b16 %v3161
      %v3677 = vunpack.c.l.b16 %v3165
      %v3678 = vunpack.c.l.b16 %v3168
      %v3679 = vunpack.c.l.b16 %v3172
      %v3680 = vunpack.c.l.b16 %v3175
      %v3681 = vpack.c.b16 %v3666, %v3665
      %v3682 = vpack.c.b16 %v3668, %v3667
      %v3683 = vpack.c.b16 %v3670, %v3669
      %v3684 = vpack.c.b16 %v3672, %v3671
      %v3685 = vpack.c.b16 %v3674, %v3673
      %v3686 = vpack.c.b16 %v3676, %v3675
      %v3687 = vpack.c.b16 %v3678, %v3677
      %v3688 = vpack.c.b16 %v3680, %v3679
      %v3689 = vunpack.c.l.b16 %v3070
      %v3690 = vunpack.c.l.b16 %v3176
      %v3691 = vunpack.c.l.b16 %v3073
      %v3692 = vunpack.c.l.b16 %v3177
      %v3693 = vunpack.c.l.b16 %v3076
      %v3694 = vunpack.c.l.b16 %v3178
      %v3695 = vunpack.c.l.b16 %v3079
      %v3696 = vunpack.c.l.b16 %v3179
      %v3697 = vunpack.c.l.b16 %v3082
      %v3698 = vunpack.c.l.b16 %v3180
      %v3699 = vunpack.c.l.b16 %v3085
      %v3700 = vunpack.c.l.b16 %v3181
      %v3701 = vunpack.c.l.b16 %v3088
      %v3702 = vunpack.c.l.b16 %v3182
      %v3703 = vunpack.c.l.b16 %v3091
      %v3704 = vunpack.c.l.b16 %v3183
      %v3705 = vpack.c.b16 %v3690, %v3689
      %v3706 = vpack.c.b16 %v3692, %v3691
      %v3707 = vpack.c.b16 %v3694, %v3693
      %v3708 = vpack.c.b16 %v3696, %v3695
      %v3709 = vpack.c.b16 %v3698, %v3697
      %v3710 = vpack.c.b16 %v3700, %v3699
      %v3711 = vpack.c.b16 %v3702, %v3701
      %v3712 = vpack.c.b16 %v3704, %v3703
      %3713 = vrot.lane.b32.xlu0 %v3705, 16
      %v3714 = vpop.permute.xlu0 %3713
      %3715 = vrot.lane.b32.xlu0 %v3706, 16
      %v3716 = vpop.permute.xlu0 %3715
      %3717 = vrot.lane.b32.xlu0 %v3707, 16
      %v3718 = vpop.permute.xlu0 %3717
      %3719 = vrot.lane.b32.xlu0 %v3708, 16
      %v3720 = vpop.permute.xlu0 %3719
      %3721 = vrot.lane.b32.xlu0 %v3709, 16
      %v3722 = vpop.permute.xlu0 %3721
      %3723 = vrot.lane.b32.xlu0 %v3710, 16
      %v3724 = vpop.permute.xlu0 %3723
      %3725 = vrot.lane.b32.xlu0 %v3711, 16
      %v3726 = vpop.permute.xlu0 %3725
      %3727 = vrot.lane.b32.xlu0 %v3712, 16
      %v3728 = vpop.permute.xlu0 %3727
      %v3729 = vunpack.c.l.b16 %v3227
      %v3730 = vunpack.c.l.b16 %v3230
      %v3731 = vunpack.c.l.b16 %v3234
      %v3732 = vunpack.c.l.b16 %v3237
      %v3733 = vunpack.c.l.b16 %v3241
      %v3734 = vunpack.c.l.b16 %v3244
      %v3735 = vunpack.c.l.b16 %v3248
      %v3736 = vunpack.c.l.b16 %v3251
      %v3737 = vunpack.c.l.b16 %v3255
      %v3738 = vunpack.c.l.b16 %v3258
      %v3739 = vunpack.c.l.b16 %v3262
      %v3740 = vunpack.c.l.b16 %v3265
      %v3741 = vunpack.c.l.b16 %v3269
      %v3742 = vunpack.c.l.b16 %v3272
      %v3743 = vunpack.c.l.b16 %v3276
      %v3744 = vunpack.c.l.b16 %v3279
      %v3745 = vpack.c.b16 %v3730, %v3729
      %v3746 = vpack.c.b16 %v3732, %v3731
      %v3747 = vpack.c.b16 %v3734, %v3733
      %v3748 = vpack.c.b16 %v3736, %v3735
      %v3749 = vpack.c.b16 %v3738, %v3737
      %v3750 = vpack.c.b16 %v3740, %v3739
      %v3751 = vpack.c.b16 %v3742, %v3741
      %v3752 = vpack.c.b16 %v3744, %v3743
      %3753 = vrot.lane.b32.xlu0 %v3745, 32
      %v3754 = vpop.permute.xlu0 %3753
      %3755 = vrot.lane.b32.xlu0 %v3746, 32
      %v3756 = vpop.permute.xlu0 %3755
      %3757 = vrot.lane.b32.xlu0 %v3747, 32
      %v3758 = vpop.permute.xlu0 %3757
      %3759 = vrot.lane.b32.xlu0 %v3748, 32
      %v3760 = vpop.permute.xlu0 %3759
      %3761 = vrot.lane.b32.xlu0 %v3749, 32
      %v3762 = vpop.permute.xlu0 %3761
      %3763 = vrot.lane.b32.xlu0 %v3750, 32
      %v3764 = vpop.permute.xlu0 %3763
      %3765 = vrot.lane.b32.xlu0 %v3751, 32
      %v3766 = vpop.permute.xlu0 %3765
      %3767 = vrot.lane.b32.xlu0 %v3752, 32
      %v3768 = vpop.permute.xlu0 %3767
      %v3769 = vunpack.c.l.b16 %v3315
      %v3770 = vunpack.c.l.b16 %v3318
      %v3771 = vunpack.c.l.b16 %v3322
      %v3772 = vunpack.c.l.b16 %v3325
      %v3773 = vunpack.c.l.b16 %v3329
      %v3774 = vunpack.c.l.b16 %v3332
      %v3775 = vunpack.c.l.b16 %v3336
      %v3776 = vunpack.c.l.b16 %v3339
      %v3777 = vunpack.c.l.b16 %v3343
      %v3778 = vunpack.c.l.b16 %v3346
      %v3779 = vunpack.c.l.b16 %v3350
      %v3780 = vunpack.c.l.b16 %v3353
      %v3781 = vunpack.c.l.b16 %v3357
      %v3782 = vunpack.c.l.b16 %v3360
      %v3783 = vunpack.c.l.b16 %v3364
      %v3784 = vunpack.c.l.b16 %v3367
      %v3785 = vpack.c.b16 %v3770, %v3769
      %v3786 = vpack.c.b16 %v3772, %v3771
      %v3787 = vpack.c.b16 %v3774, %v3773
      %v3788 = vpack.c.b16 %v3776, %v3775
      %v3789 = vpack.c.b16 %v3778, %v3777
      %v3790 = vpack.c.b16 %v3780, %v3779
      %v3791 = vpack.c.b16 %v3782, %v3781
      %v3792 = vpack.c.b16 %v3784, %v3783
      %3793 = vrot.lane.b32.xlu0 %v3785, 48
      %v3794 = vpop.permute.xlu0 %3793
      %3795 = vrot.lane.b32.xlu0 %v3786, 48
      %v3796 = vpop.permute.xlu0 %3795
      %3797 = vrot.lane.b32.xlu0 %v3787, 48
      %v3798 = vpop.permute.xlu0 %3797
      %3799 = vrot.lane.b32.xlu0 %v3788, 48
      %v3800 = vpop.permute.xlu0 %3799
      %3801 = vrot.lane.b32.xlu0 %v3789, 48
      %v3802 = vpop.permute.xlu0 %3801
      %3803 = vrot.lane.b32.xlu0 %v3790, 48
      %v3804 = vpop.permute.xlu0 %3803
      %3805 = vrot.lane.b32.xlu0 %v3791, 48
      %v3806 = vpop.permute.xlu0 %3805
      %3807 = vrot.lane.b32.xlu0 %v3792, 48
      %v3808 = vpop.permute.xlu0 %3807
      %v3809 = vunpack.c.l.b16 %v3403
      %v3810 = vunpack.c.l.b16 %v3406
      %v3811 = vunpack.c.l.b16 %v3410
      %v3812 = vunpack.c.l.b16 %v3413
      %v3813 = vunpack.c.l.b16 %v3417
      %v3814 = vunpack.c.l.b16 %v3420
      %v3815 = vunpack.c.l.b16 %v3424
      %v3816 = vunpack.c.l.b16 %v3427
      %v3817 = vunpack.c.l.b16 %v3431
      %v3818 = vunpack.c.l.b16 %v3434
      %v3819 = vunpack.c.l.b16 %v3438
      %v3820 = vunpack.c.l.b16 %v3441
      %v3821 = vunpack.c.l.b16 %v3445
      %v3822 = vunpack.c.l.b16 %v3448
      %v3823 = vunpack.c.l.b16 %v3452
      %v3824 = vunpack.c.l.b16 %v3455
      %v3825 = vpack.c.b16 %v3810, %v3809
      %v3826 = vpack.c.b16 %v3812, %v3811
      %v3827 = vpack.c.b16 %v3814, %v3813
      %v3828 = vpack.c.b16 %v3816, %v3815
      %v3829 = vpack.c.b16 %v3818, %v3817
      %v3830 = vpack.c.b16 %v3820, %v3819
      %v3831 = vpack.c.b16 %v3822, %v3821
      %v3832 = vpack.c.b16 %v3824, %v3823
      %3833 = vrot.lane.b32.xlu0 %v3825, 80
      %v3834 = vpop.permute.xlu0 %3833
      %3835 = vrot.lane.b32.xlu0 %v3826, 80
      %v3836 = vpop.permute.xlu0 %3835
      %3837 = vrot.lane.b32.xlu0 %v3827, 80
      %v3838 = vpop.permute.xlu0 %3837
      %3839 = vrot.lane.b32.xlu0 %v3828, 80
      %v3840 = vpop.permute.xlu0 %3839
      %3841 = vrot.lane.b32.xlu0 %v3829, 80
      %v3842 = vpop.permute.xlu0 %3841
      %3843 = vrot.lane.b32.xlu0 %v3830, 80
      %v3844 = vpop.permute.xlu0 %3843
      %3845 = vrot.lane.b32.xlu0 %v3831, 80
      %v3846 = vpop.permute.xlu0 %3845
      %3847 = vrot.lane.b32.xlu0 %v3832, 80
      %v3848 = vpop.permute.xlu0 %3847
      %v3849 = vunpack.c.l.b16 %v3508
      %v3850 = vunpack.c.l.b16 %v3511
      %v3851 = vunpack.c.l.b16 %v3515
      %v3852 = vunpack.c.l.b16 %v3518
      %v3853 = vunpack.c.l.b16 %v3522
      %v3854 = vunpack.c.l.b16 %v3525
      %v3855 = vunpack.c.l.b16 %v3529
      %v3856 = vunpack.c.l.b16 %v3532
      %v3857 = vunpack.c.l.b16 %v3536
      %v3858 = vunpack.c.l.b16 %v3539
      %v3859 = vunpack.c.l.b16 %v3543
      %v3860 = vunpack.c.l.b16 %v3546
      %v3861 = vunpack.c.l.b16 %v3550
      %v3862 = vunpack.c.l.b16 %v3553
      %v3863 = vunpack.c.l.b16 %v3557
      %v3864 = vunpack.c.l.b16 %v3560
      %v3865 = vpack.c.b16 %v3850, %v3849
      %v3866 = vpack.c.b16 %v3852, %v3851
      %v3867 = vpack.c.b16 %v3854, %v3853
      %v3868 = vpack.c.b16 %v3856, %v3855
      %v3869 = vpack.c.b16 %v3858, %v3857
      %v3870 = vpack.c.b16 %v3860, %v3859
      %v3871 = vpack.c.b16 %v3862, %v3861
      %v3872 = vpack.c.b16 %v3864, %v3863
      %3873 = vrot.lane.b32.xlu0 %v3865, 96
      %v3874 = vpop.permute.xlu0 %3873
      %3875 = vrot.lane.b32.xlu0 %v3866, 96
      %v3876 = vpop.permute.xlu0 %3875
      %3877 = vrot.lane.b32.xlu0 %v3867, 96
      %v3878 = vpop.permute.xlu0 %3877
      %3879 = vrot.lane.b32.xlu0 %v3868, 96
      %v3880 = vpop.permute.xlu0 %3879
      %3881 = vrot.lane.b32.xlu0 %v3869, 96
      %v3882 = vpop.permute.xlu0 %3881
      %3883 = vrot.lane.b32.xlu0 %v3870, 96
      %v3884 = vpop.permute.xlu0 %3883
      %3885 = vrot.lane.b32.xlu0 %v3871, 96
      %v3886 = vpop.permute.xlu0 %3885
      %3887 = vrot.lane.b32.xlu0 %v3872, 96
      %v3888 = vpop.permute.xlu0 %3887
      %v3889 = vunpack.c.l.b16 %v3458
      %v3890 = vunpack.c.l.b16 %v3561
      %v3891 = vunpack.c.l.b16 %v3461
      %v3892 = vunpack.c.l.b16 %v3562
      %v3893 = vunpack.c.l.b16 %v3464
      %v3894 = vunpack.c.l.b16 %v3563
      %v3895 = vunpack.c.l.b16 %v3467
      %v3896 = vunpack.c.l.b16 %v3564
      %v3897 = vunpack.c.l.b16 %v3470
      %v3898 = vunpack.c.l.b16 %v3565
      %v3899 = vunpack.c.l.b16 %v3473
      %v3900 = vunpack.c.l.b16 %v3566
      %v3901 = vunpack.c.l.b16 %v3476
      %v3902 = vunpack.c.l.b16 %v3567
      %v3903 = vunpack.c.l.b16 %v3479
      %v3904 = vunpack.c.l.b16 %v3568
      %v3905 = vpack.c.b16 %v3890, %v3889
      %v3906 = vpack.c.b16 %v3892, %v3891
      %v3907 = vpack.c.b16 %v3894, %v3893
      %v3908 = vpack.c.b16 %v3896, %v3895
      %v3909 = vpack.c.b16 %v3898, %v3897
      %v3910 = vpack.c.b16 %v3900, %v3899
      %v3911 = vpack.c.b16 %v3902, %v3901
      %v3912 = vpack.c.b16 %v3904, %v3903
      %3913 = vrot.lane.b32.xlu0 %v3905, 112
      %v3914 = vpop.permute.xlu0 %3913
      %3915 = vrot.lane.b32.xlu0 %v3906, 112
      %v3916 = vpop.permute.xlu0 %3915
      %3917 = vrot.lane.b32.xlu0 %v3907, 112
      %v3918 = vpop.permute.xlu0 %3917
      %3919 = vrot.lane.b32.xlu0 %v3908, 112
      %v3920 = vpop.permute.xlu0 %3919
      %3921 = vrot.lane.b32.xlu0 %v3909, 112
      %v3922 = vpop.permute.xlu0 %3921
      %3923 = vrot.lane.b32.xlu0 %v3910, 112
      %v3924 = vpop.permute.xlu0 %3923
      %3925 = vrot.lane.b32.xlu0 %v3911, 112
      %v3926 = vpop.permute.xlu0 %3925
      %3927 = vrot.lane.b32.xlu0 %v3912, 112
      %v3928 = vpop.permute.xlu0 %3927
      %v3929 = vunpack.c.l.b16 %v3612
      %v3930 = vunpack.c.l.b16 %v3615
      %v3931 = vunpack.c.l.b16 %v3619
      %v3932 = vunpack.c.l.b16 %v3622
      %v3933 = vunpack.c.l.b16 %v3626
      %v3934 = vunpack.c.l.b16 %v3629
      %v3935 = vunpack.c.l.b16 %v3633
      %v3936 = vunpack.c.l.b16 %v3636
      %v3937 = vunpack.c.l.b16 %v3640
      %v3938 = vunpack.c.l.b16 %v3643
      %v3939 = vunpack.c.l.b16 %v3647
      %v3940 = vunpack.c.l.b16 %v3650
      %v3941 = vunpack.c.l.b16 %v3654
      %v3942 = vunpack.c.l.b16 %v3657
      %v3943 = vunpack.c.l.b16 %v3661
      %v3944 = vunpack.c.l.b16 %v3664
      %v3945 = vpack.c.b16 %v3930, %v3929
      %v3946 = vpack.c.b16 %v3932, %v3931
      %v3947 = vpack.c.b16 %v3934, %v3933
      %v3948 = vpack.c.b16 %v3936, %v3935
      %v3949 = vpack.c.b16 %v3938, %v3937
      %v3950 = vpack.c.b16 %v3940, %v3939
      %v3951 = vpack.c.b16 %v3942, %v3941
      %v3952 = vpack.c.b16 %v3944, %v3943
      %v3955 = vsel %vm1554, %v3681, %v3714
      %v3958 = vsel %vm1554, %v3682, %v3716
      %v3961 = vsel %vm1554, %v3683, %v3718
      %v3964 = vsel %vm1554, %v3684, %v3720
      %v3967 = vsel %vm1554, %v3685, %v3722
      %v3970 = vsel %vm1554, %v3686, %v3724
      %v3973 = vsel %vm1554, %v3687, %v3726
      %v3976 = vsel %vm1554, %v3688, %v3728
      %v3978 = vsel %vm1579, %v3955, %v3754
      %v3980 = vsel %vm1579, %v3958, %v3756
      %v3982 = vsel %vm1579, %v3961, %v3758
      %v3984 = vsel %vm1579, %v3964, %v3760
      %v3986 = vsel %vm1579, %v3967, %v3762
      %v3988 = vsel %vm1579, %v3970, %v3764
      %v3990 = vsel %vm1579, %v3973, %v3766
      %v3992 = vsel %vm1579, %v3976, %v3768
      %v3994 = vsel %vm1596, %v3978, %v3794
      %v3996 = vsel %vm1596, %v3980, %v3796
      %v3998 = vsel %vm1596, %v3982, %v3798
      %v4000 = vsel %vm1596, %v3984, %v3800
      %v4002 = vsel %vm1596, %v3986, %v3802
      %v4004 = vsel %vm1596, %v3988, %v3804
      %v4006 = vsel %vm1596, %v3990, %v3806
      %v4008 = vsel %vm1596, %v3992, %v3808
      %v4009 = vsel %vm1613, %v3994, %v1379
      %v4010 = vsel %vm1613, %v3996, %v1381
      %v4011 = vsel %vm1613, %v3998, %v1383
      %v4012 = vsel %vm1613, %v4000, %v1385
      %v4013 = vsel %vm1613, %v4002, %v1387
      %v4014 = vsel %vm1613, %v4004, %v1389
      %v4015 = vsel %vm1613, %v4006, %v1391
      %v4016 = vsel %vm1613, %v4008, %v1393
      %v4018 = vsel %vm1630, %v4009, %v3834
      %v4020 = vsel %vm1630, %v4010, %v3836
      %v4022 = vsel %vm1630, %v4011, %v3838
      %v4024 = vsel %vm1630, %v4012, %v3840
      %v4026 = vsel %vm1630, %v4013, %v3842
      %v4028 = vsel %vm1630, %v4014, %v3844
      %v4030 = vsel %vm1630, %v4015, %v3846
      %v4032 = vsel %vm1630, %v4016, %v3848
      %v4034 = vsel %vm1647, %v4018, %v3874
      %v4036 = vsel %vm1647, %v4020, %v3876
      %v4038 = vsel %vm1647, %v4022, %v3878
      %v4040 = vsel %vm1647, %v4024, %v3880
      %v4042 = vsel %vm1647, %v4026, %v3882
      %v4044 = vsel %vm1647, %v4028, %v3884
      %v4046 = vsel %vm1647, %v4030, %v3886
      %v4048 = vsel %vm1647, %v4032, %v3888
      %v4050 = vsel %vm1664, %v4034, %v3914
      %v4053 = vsel %vm1664, %v4036, %v3916
      %v4056 = vsel %vm1664, %v4038, %v3918
      %v4059 = vsel %vm1664, %v4040, %v3920
      %v4062 = vsel %vm1664, %v4042, %v3922
      %v4065 = vsel %vm1664, %v4044, %v3924
      %v4068 = vsel %vm1664, %v4046, %v3926
      %v4071 = vsel %vm1664, %v4048, %v3928
      %s4073 = scalar_lea.vmem %s1, 144
      %v4074 = vld [vmem:[%s4073] sm:$0xf]
      %v4075 = vld [vmem:[%s4073 + $0x4] sm:$0xf]
      %v4076 = vld [vmem:[%s4073 + $0x8] sm:$0xf]
      %v4077 = vld [vmem:[%s4073 + $0xc] sm:$0xf]
      %v4078 = vld [vmem:[%s4073 + $0x10] sm:$0xf]
      %v4079 = vld [vmem:[%s4073 + $0x14] sm:$0xf]
      %v4080 = vld [vmem:[%s4073 + $0x18] sm:$0xf]
      %v4081 = vld [vmem:[%s4073 + $0x1c] sm:$0xf]
      %v4082 = vld [vmem:[%s4073 + $0x20] sm:$0xf]
      %v4083 = vld [vmem:[%s4073 + $0x24] sm:$0xf]
      %v4084 = vld [vmem:[%s4073 + $0x28] sm:$0xf]
      %v4085 = vld [vmem:[%s4073 + $0x2c] sm:$0xf]
      %v4086 = vld [vmem:[%s4073 + $0x30] sm:$0xf]
      %v4087 = vld [vmem:[%s4073 + $0x34] sm:$0xf]
      %v4088 = vld [vmem:[%s4073 + $0x38] sm:$0xf]
      %v4089 = vld [vmem:[%s4073 + $0x3c] sm:$0xf]
      %v4090 = vld [vmem:[%s4073 + $0x40] sm:$0xf]
      %v4091 = vld [vmem:[%s4073 + $0x44] sm:$0xf]
      %v4110 = vunpack.c.l.b16 %v4074
      %v4111 = vunpack.c.l.b16 %v4075
      %v4112 = vunpack.c.l.b16 %v4076
      %v4113 = vunpack.c.l.b16 %v4077
      %v4114 = vunpack.c.l.b16 %v4078
      %v4115 = vunpack.c.l.b16 %v4079
      %v4116 = vunpack.c.l.b16 %v4080
      %v4117 = vunpack.c.l.b16 %v4081
      %v4118 = vunpack.c.l.b16 %v4082
      %v4119 = vunpack.c.l.b16 %v4083
      %v4120 = vunpack.c.l.b16 %v4084
      %v4121 = vunpack.c.l.b16 %v4085
      %v4122 = vunpack.c.l.b16 %v4086
      %v4123 = vunpack.c.l.b16 %v4087
      %v4124 = vunpack.c.l.b16 %v4088
      %v4125 = vunpack.c.l.b16 %v4089
      %v4126 = vunpack.c.l.b16 %v4090
      %v4127 = vunpack.c.l.b16 %v4091
      %v4128 = vpack.c.b16 %v4111, %v4110
      %v4129 = vpack.c.b16 %v4113, %v4112
      %v4130 = vpack.c.b16 %v4115, %v4114
      %v4131 = vpack.c.b16 %v4117, %v4116
      %v4132 = vpack.c.b16 %v4119, %v4118
      %v4133 = vpack.c.b16 %v4121, %v4120
      %v4134 = vpack.c.b16 %v4123, %v4122
      %v4135 = vpack.c.b16 %v4125, %v4124
      %v4136 = vpack.c.b16 %v4127, %v4126
      %v4147 = vsel %vm1554, %v3945, 0
      %v4150 = vsel %vm1554, %v3946, 0
      %v4153 = vsel %vm1554, %v3947, 0
      %v4156 = vsel %vm1554, %v3948, 0
      %v4159 = vsel %vm1554, %v3949, 0
      %v4162 = vsel %vm1554, %v3950, 0
      %v4165 = vsel %vm1554, %v3951, 0
      %v4168 = vsel %vm1554, %v3952, 0
      %4170 = vmatprep.subr.bf16.mxu0 0
      %4171 = vmatpush1.bf16.msra.mxu0 %v4135
      %4172 = vmatprep.subr.bf16.mxu0 0
      %4173 = vmatpush1.bf16.msra.mxu0 %v4134
      %4174 = vmatprep.subr.bf16.mxu0 0
      %4175 = vmatpush1.bf16.msra.mxu0 %v4133
      %4176 = vmatprep.subr.bf16.mxu0 0
      %4177 = vmatpush1.bf16.msra.mxu0 %v4132
      %4178 = vmatprep.subr.bf16.mxu0 0
      %4179 = vmatpush1.bf16.msra.mxu0 %v4131
      %4180 = vmatprep.subr.bf16.mxu0 0
      %4181 = vmatpush1.bf16.msra.mxu0 %v4130
      %4182 = vmatprep.subr.bf16.mxu0 0
      %4183 = vmatpush1.bf16.msra.mxu0 %v4129
      %4184 = vmatprep.subr.bf16.mxu0 0
      %4185 = vmatpush1.bf16.msra.mxu0 %v4128
      %4186 = vmatprep.subr.bf16.mxu0 0
      %4187 = vmatpush2.bf16.msra.mxu0 0
      %4188 = vmatprep.subr.bf16.mxu0 0
      %4189 = vmatpush2.bf16.msra.mxu0 0
      %4190 = vmatprep.subr.bf16.mxu0 0
      %4191 = vmatpush2.bf16.msra.mxu0 0
      %4192 = vmatprep.subr.bf16.mxu0 0
      %4193 = vmatpush2.bf16.msra.mxu0 0
      %4194 = vmatprep.subr.bf16.mxu0 0
      %4195 = vmatpush2.bf16.msra.mxu0 0
      %4196 = vmatprep.subr.bf16.mxu0 0
      %4197 = vmatpush2.bf16.msra.mxu0 0
      %4198 = vmatprep.subr.bf16.mxu0 0
      %4199 = vmatpush2.bf16.msra.mxu0 0
      %4200 = vmatprep.subr.bf16.mxu0 0
      %4201 = vmatpush2.bf16.msra.mxu0 %v4136
      %4202 = vmatprep.mubr.bf16.mxu0 %v4147
      %4203 = vmatmul.mubr.bf16.gmra.mxu0 %v4050
      %v4204 = vpop.f32.mrf.mxu0
      %v4205 = vadd.f32 0.0, %v4204
      %v4206 = vpop.f32.mrf.mxu0
      %v4207 = vpop.f32.mrf.mxu0
      %v4208 = vadd.f32 0.0, %v4207
      %v4209 = vpop.f32.mrf.mxu0
      %4210 = vmatprep.mubr.bf16.mxu0 %v4150
      %4211 = vmatmul.mubr.bf16.gmra.mxu0 %v4053
      %v4212 = vpop.f32.mrf.mxu0
      %v4213 = vadd.f32 0.0, %v4212
      %v4214 = vpop.f32.mrf.mxu0
      %v4215 = vpop.f32.mrf.mxu0
      %v4216 = vadd.f32 0.0, %v4215
      %v4217 = vpop.f32.mrf.mxu0
      %4218 = vmatprep.mubr.bf16.mxu0 %v4153
      %4219 = vmatmul.mubr.bf16.gmra.mxu0 %v4056
      %v4220 = vpop.f32.mrf.mxu0
      %v4221 = vadd.f32 0.0, %v4220
      %v4222 = vpop.f32.mrf.mxu0
      %v4223 = vpop.f32.mrf.mxu0
      %v4224 = vadd.f32 0.0, %v4223
      %v4225 = vpop.f32.mrf.mxu0
      %4226 = vmatprep.mubr.bf16.mxu0 %v4156
      %4227 = vmatmul.mubr.bf16.gmra.mxu0 %v4059
      %v4228 = vpop.f32.mrf.mxu0
      %v4229 = vadd.f32 0.0, %v4228
      %v4230 = vpop.f32.mrf.mxu0
      %v4231 = vpop.f32.mrf.mxu0
      %v4232 = vadd.f32 0.0, %v4231
      %v4233 = vpop.f32.mrf.mxu0
      %4234 = vmatprep.mubr.bf16.mxu0 %v4159
      %4235 = vmatmul.mubr.bf16.gmra.mxu0 %v4062
      %v4236 = vpop.f32.mrf.mxu0
      %v4237 = vadd.f32 0.0, %v4236
      %v4238 = vpop.f32.mrf.mxu0
      %v4239 = vpop.f32.mrf.mxu0
      %v4240 = vadd.f32 0.0, %v4239
      %v4241 = vpop.f32.mrf.mxu0
      %4242 = vmatprep.mubr.bf16.mxu0 %v4162
      %4243 = vmatmul.mubr.bf16.gmra.mxu0 %v4065
      %v4244 = vpop.f32.mrf.mxu0
      %v4245 = vadd.f32 0.0, %v4244
      %v4246 = vpop.f32.mrf.mxu0
      %v4247 = vpop.f32.mrf.mxu0
      %v4248 = vadd.f32 0.0, %v4247
      %v4249 = vpop.f32.mrf.mxu0
      %4250 = vmatprep.mubr.bf16.mxu0 %v4165
      %4251 = vmatmul.mubr.bf16.gmra.mxu0 %v4068
      %v4252 = vpop.f32.mrf.mxu0
      %v4253 = vadd.f32 0.0, %v4252
      %v4254 = vpop.f32.mrf.mxu0
      %v4255 = vpop.f32.mrf.mxu0
      %v4256 = vadd.f32 0.0, %v4255
      %v4257 = vpop.f32.mrf.mxu0
      %4258 = vmatprep.mubr.bf16.mxu0 %v4168
      %4259 = vmatmul.mubr.bf16.gmra.mxu0 %v4071
      %v4260 = vpop.f32.mrf.mxu0
      %v4261 = vadd.f32 0.0, %v4260
      %v4262 = vpop.f32.mrf.mxu0
      %v4263 = vpop.f32.mrf.mxu0
      %v4264 = vadd.f32 0.0, %v4263
      %v4265 = vpop.f32.mrf.mxu0
      %4266 = vdwg.mxu0
      %v4267 = vld [vmem:[%s197] sm:$0xf]
      %v4268 = vld [vmem:[%s197 + $0x4] sm:$0xf]
      %v4269 = vld [vmem:[%s197 + $0x10] sm:$0xf]
      %v4270 = vld [vmem:[%s197 + $0x14] sm:$0xf]
      %v4271 = vld [vmem:[%s197 + $0x20] sm:$0xf]
      %v4272 = vld [vmem:[%s197 + $0x24] sm:$0xf]
      %v4273 = vld [vmem:[%s197 + $0x30] sm:$0xf]
      %v4274 = vld [vmem:[%s197 + $0x34] sm:$0xf]
      %v4275 = vld [vmem:[%s197 + $0x40] sm:$0xf]
      %v4276 = vld [vmem:[%s197 + $0x44] sm:$0xf]
      %v4277 = vld [vmem:[%s197 + $0x50] sm:$0xf]
      %v4278 = vld [vmem:[%s197 + $0x54] sm:$0xf]
      %v4279 = vld [vmem:[%s197 + $0x60] sm:$0xf]
      %v4280 = vld [vmem:[%s197 + $0x64] sm:$0xf]
      %v4281 = vld [vmem:[%s197 + $0x70] sm:$0xf]
      %v4282 = vld [vmem:[%s197 + $0x74] sm:$0xf]
      %v4283 = vld [vmem:[%s197 + $0x8] sm:$0xf]
      %v4284 = vld [vmem:[%s197 + $0x18] sm:$0xf]
      %v4285 = vld [vmem:[%s197 + $0x28] sm:$0xf]
      %v4286 = vld [vmem:[%s197 + $0x38] sm:$0xf]
      %v4287 = vld [vmem:[%s197 + $0x48] sm:$0xf]
      %v4288 = vld [vmem:[%s197 + $0x58] sm:$0xf]
      %v4289 = vld [vmem:[%s197 + $0x68] sm:$0xf]
      %v4290 = vld [vmem:[%s197 + $0x78] sm:$0xf]
      %v4291 = vld [vmem:[%s197 + $0xc] sm:$0xf]
      %v4292 = vld [vmem:[%s197 + $0x1c] sm:$0xf]
      %v4293 = vld [vmem:[%s197 + $0x2c] sm:$0xf]
      %v4294 = vld [vmem:[%s197 + $0x3c] sm:$0xf]
      %v4295 = vld [vmem:[%s197 + $0x4c] sm:$0xf]
      %v4296 = vld [vmem:[%s197 + $0x5c] sm:$0xf]
      %v4297 = vld [vmem:[%s197 + $0x6c] sm:$0xf]
      %v4298 = vld [vmem:[%s197 + $0x7c] sm:$0xf]
      %v4299 = vld [vmem:[%s536] sm:$0xf]
      %v4300 = vld [vmem:[%s536 + $0x4] sm:$0xf]
      %v4301 = vld [vmem:[%s536 + $0x10] sm:$0xf]
      %v4302 = vld [vmem:[%s536 + $0x14] sm:$0xf]
      %v4303 = vld [vmem:[%s536 + $0x20] sm:$0xf]
      %v4304 = vld [vmem:[%s536 + $0x24] sm:$0xf]
      %v4305 = vld [vmem:[%s536 + $0x30] sm:$0xf]
      %v4306 = vld [vmem:[%s536 + $0x34] sm:$0xf]
      %v4307 = vld [vmem:[%s536 + $0x40] sm:$0xf]
      %v4308 = vld [vmem:[%s536 + $0x44] sm:$0xf]
      %v4309 = vld [vmem:[%s536 + $0x50] sm:$0xf]
      %v4310 = vld [vmem:[%s536 + $0x54] sm:$0xf]
      %v4311 = vld [vmem:[%s536 + $0x60] sm:$0xf]
      %v4312 = vld [vmem:[%s536 + $0x64] sm:$0xf]
      %v4313 = vld [vmem:[%s536 + $0x70] sm:$0xf]
      %v4314 = vld [vmem:[%s536 + $0x74] sm:$0xf]
      %v4315 = vld [vmem:[%s536 + $0xc] sm:$0xf]
      %v4316 = vld [vmem:[%s536 + $0x1c] sm:$0xf]
      %v4317 = vld [vmem:[%s536 + $0x2c] sm:$0xf]
      %v4318 = vld [vmem:[%s536 + $0x3c] sm:$0xf]
      %v4319 = vld [vmem:[%s536 + $0x4c] sm:$0xf]
      %v4320 = vld [vmem:[%s536 + $0x5c] sm:$0xf]
      %v4321 = vld [vmem:[%s536 + $0x6c] sm:$0xf]
      %v4322 = vld [vmem:[%s536 + $0x7c] sm:$0xf]
      %s4323 = scalar_lea.vmem %s197, 256
      %v4324 = vld [vmem:[%s4323] sm:$0xf]
      %v4325 = vld [vmem:[%s4323 + $0x4] sm:$0xf]
      %v4326 = vld [vmem:[%s4323 + $0x10] sm:$0xf]
      %v4327 = vld [vmem:[%s4323 + $0x14] sm:$0xf]
      %v4328 = vld [vmem:[%s4323 + $0x20] sm:$0xf]
      %v4329 = vld [vmem:[%s4323 + $0x24] sm:$0xf]
      %v4330 = vld [vmem:[%s4323 + $0x30] sm:$0xf]
      %v4331 = vld [vmem:[%s4323 + $0x34] sm:$0xf]
      %v4332 = vld [vmem:[%s4323 + $0x40] sm:$0xf]
      %v4333 = vld [vmem:[%s4323 + $0x44] sm:$0xf]
      %v4334 = vld [vmem:[%s4323 + $0x50] sm:$0xf]
      %v4335 = vld [vmem:[%s4323 + $0x54] sm:$0xf]
      %v4336 = vld [vmem:[%s4323 + $0x60] sm:$0xf]
      %v4337 = vld [vmem:[%s4323 + $0x64] sm:$0xf]
      %v4338 = vld [vmem:[%s4323 + $0x70] sm:$0xf]
      %v4339 = vld [vmem:[%s4323 + $0x74] sm:$0xf]
      %v4340 = vld [vmem:[%s4323 + $0x8] sm:$0xf]
      %v4341 = vld [vmem:[%s4323 + $0x18] sm:$0xf]
      %v4342 = vld [vmem:[%s4323 + $0x28] sm:$0xf]
      %v4343 = vld [vmem:[%s4323 + $0x38] sm:$0xf]
      %v4344 = vld [vmem:[%s4323 + $0x48] sm:$0xf]
      %v4345 = vld [vmem:[%s4323 + $0x58] sm:$0xf]
      %v4346 = vld [vmem:[%s4323 + $0x68] sm:$0xf]
      %v4347 = vld [vmem:[%s4323 + $0x78] sm:$0xf]
      %v4348 = vld [vmem:[%s4323 + $0xc] sm:$0xf]
      %v4349 = vld [vmem:[%s4323 + $0x1c] sm:$0xf]
      %v4350 = vld [vmem:[%s4323 + $0x2c] sm:$0xf]
      %v4351 = vld [vmem:[%s4323 + $0x3c] sm:$0xf]
      %v4352 = vld [vmem:[%s4323 + $0x4c] sm:$0xf]
      %v4353 = vld [vmem:[%s4323 + $0x5c] sm:$0xf]
      %v4354 = vld [vmem:[%s4323 + $0x6c] sm:$0xf]
      %v4355 = vld [vmem:[%s4323 + $0x7c] sm:$0xf]
      %v4372 = vunpack.c.l.b16 %v4267
      %v4373 = vunpack.c.l.b16 %v4268
      %v4374 = vunpack.c.l.b16 %v4269
      %v4375 = vunpack.c.l.b16 %v4270
      %v4376 = vunpack.c.l.b16 %v4271
      %v4377 = vunpack.c.l.b16 %v4272
      %v4378 = vunpack.c.l.b16 %v4273
      %v4379 = vunpack.c.l.b16 %v4274
      %v4380 = vunpack.c.l.b16 %v4275
      %v4381 = vunpack.c.l.b16 %v4276
      %v4382 = vunpack.c.l.b16 %v4277
      %v4383 = vunpack.c.l.b16 %v4278
      %v4384 = vunpack.c.l.b16 %v4279
      %v4385 = vunpack.c.l.b16 %v4280
      %v4386 = vunpack.c.l.b16 %v4281
      %v4387 = vunpack.c.l.b16 %v4282
      %v4388 = vpack.c.b16 %v4373, %v4372
      %v4389 = vpack.c.b16 %v4375, %v4374
      %v4390 = vpack.c.b16 %v4377, %v4376
      %v4391 = vpack.c.b16 %v4379, %v4378
      %v4392 = vpack.c.b16 %v4381, %v4380
      %v4393 = vpack.c.b16 %v4383, %v4382
      %v4394 = vpack.c.b16 %v4385, %v4384
      %v4395 = vpack.c.b16 %v4387, %v4386
      %v4404 = vunpack.c.l.b16 %v4283
      %v4405 = vunpack.c.l.b16 %v4284
      %v4406 = vunpack.c.l.b16 %v4285
      %v4407 = vunpack.c.l.b16 %v4286
      %v4408 = vunpack.c.l.b16 %v4287
      %v4409 = vunpack.c.l.b16 %v4288
      %v4410 = vunpack.c.l.b16 %v4289
      %v4411 = vunpack.c.l.b16 %v4290
      %v4412 = vpack.c.b16 %v4404, %v4373
      %v4413 = vpack.c.b16 %v4405, %v4375
      %v4414 = vpack.c.b16 %v4406, %v4377
      %v4415 = vpack.c.b16 %v4407, %v4379
      %v4416 = vpack.c.b16 %v4408, %v4381
      %v4417 = vpack.c.b16 %v4409, %v4383
      %v4418 = vpack.c.b16 %v4410, %v4385
      %v4419 = vpack.c.b16 %v4411, %v4387
      %4420 = vrot.lane.b32.xlu0 %v4412, 16
      %v4421 = vpop.permute.xlu0 %4420
      %4422 = vrot.lane.b32.xlu0 %v4413, 16
      %v4423 = vpop.permute.xlu0 %4422
      %4424 = vrot.lane.b32.xlu0 %v4414, 16
      %v4425 = vpop.permute.xlu0 %4424
      %4426 = vrot.lane.b32.xlu0 %v4415, 16
      %v4427 = vpop.permute.xlu0 %4426
      %4428 = vrot.lane.b32.xlu0 %v4416, 16
      %v4429 = vpop.permute.xlu0 %4428
      %4430 = vrot.lane.b32.xlu0 %v4417, 16
      %v4431 = vpop.permute.xlu0 %4430
      %4432 = vrot.lane.b32.xlu0 %v4418, 16
      %v4433 = vpop.permute.xlu0 %4432
      %4434 = vrot.lane.b32.xlu0 %v4419, 16
      %v4435 = vpop.permute.xlu0 %4434
      %v4444 = vunpack.c.l.b16 %v4291
      %v4445 = vunpack.c.l.b16 %v4292
      %v4446 = vunpack.c.l.b16 %v4293
      %v4447 = vunpack.c.l.b16 %v4294
      %v4448 = vunpack.c.l.b16 %v4295
      %v4449 = vunpack.c.l.b16 %v4296
      %v4450 = vunpack.c.l.b16 %v4297
      %v4451 = vunpack.c.l.b16 %v4298
      %v4452 = vpack.c.b16 %v4444, %v4404
      %v4453 = vpack.c.b16 %v4445, %v4405
      %v4454 = vpack.c.b16 %v4446, %v4406
      %v4455 = vpack.c.b16 %v4447, %v4407
      %v4456 = vpack.c.b16 %v4448, %v4408
      %v4457 = vpack.c.b16 %v4449, %v4409
      %v4458 = vpack.c.b16 %v4450, %v4410
      %v4459 = vpack.c.b16 %v4451, %v4411
      %4460 = vrot.lane.b32.xlu0 %v4452, 32
      %v4461 = vpop.permute.xlu0 %4460
      %4462 = vrot.lane.b32.xlu0 %v4453, 32
      %v4463 = vpop.permute.xlu0 %4462
      %4464 = vrot.lane.b32.xlu0 %v4454, 32
      %v4465 = vpop.permute.xlu0 %4464
      %4466 = vrot.lane.b32.xlu0 %v4455, 32
      %v4467 = vpop.permute.xlu0 %4466
      %4468 = vrot.lane.b32.xlu0 %v4456, 32
      %v4469 = vpop.permute.xlu0 %4468
      %4470 = vrot.lane.b32.xlu0 %v4457, 32
      %v4471 = vpop.permute.xlu0 %4470
      %4472 = vrot.lane.b32.xlu0 %v4458, 32
      %v4473 = vpop.permute.xlu0 %4472
      %4474 = vrot.lane.b32.xlu0 %v4459, 32
      %v4475 = vpop.permute.xlu0 %4474
      %v4492 = vunpack.c.l.b16 %v4299
      %v4493 = vunpack.c.l.b16 %v4300
      %v4494 = vunpack.c.l.b16 %v4301
      %v4495 = vunpack.c.l.b16 %v4302
      %v4496 = vunpack.c.l.b16 %v4303
      %v4497 = vunpack.c.l.b16 %v4304
      %v4498 = vunpack.c.l.b16 %v4305
      %v4499 = vunpack.c.l.b16 %v4306
      %v4500 = vunpack.c.l.b16 %v4307
      %v4501 = vunpack.c.l.b16 %v4308
      %v4502 = vunpack.c.l.b16 %v4309
      %v4503 = vunpack.c.l.b16 %v4310
      %v4504 = vunpack.c.l.b16 %v4311
      %v4505 = vunpack.c.l.b16 %v4312
      %v4506 = vunpack.c.l.b16 %v4313
      %v4507 = vunpack.c.l.b16 %v4314
      %v4508 = vpack.c.b16 %v4493, %v4492
      %v4509 = vpack.c.b16 %v4495, %v4494
      %v4510 = vpack.c.b16 %v4497, %v4496
      %v4511 = vpack.c.b16 %v4499, %v4498
      %v4512 = vpack.c.b16 %v4501, %v4500
      %v4513 = vpack.c.b16 %v4503, %v4502
      %v4514 = vpack.c.b16 %v4505, %v4504
      %v4515 = vpack.c.b16 %v4507, %v4506
      %4516 = vrot.lane.b32.xlu0 %v4508, 48
      %v4517 = vpop.permute.xlu0 %4516
      %4518 = vrot.lane.b32.xlu0 %v4509, 48
      %v4519 = vpop.permute.xlu0 %4518
      %4520 = vrot.lane.b32.xlu0 %v4510, 48
      %v4521 = vpop.permute.xlu0 %4520
      %4522 = vrot.lane.b32.xlu0 %v4511, 48
      %v4523 = vpop.permute.xlu0 %4522
      %4524 = vrot.lane.b32.xlu0 %v4512, 48
      %v4525 = vpop.permute.xlu0 %4524
      %4526 = vrot.lane.b32.xlu0 %v4513, 48
      %v4527 = vpop.permute.xlu0 %4526
      %4528 = vrot.lane.b32.xlu0 %v4514, 48
      %v4529 = vpop.permute.xlu0 %4528
      %4530 = vrot.lane.b32.xlu0 %v4515, 48
      %v4531 = vpop.permute.xlu0 %4530
      %v4540 = vunpack.c.l.b16 %v4315
      %v4541 = vunpack.c.l.b16 %v4316
      %v4542 = vunpack.c.l.b16 %v4317
      %v4543 = vunpack.c.l.b16 %v4318
      %v4544 = vunpack.c.l.b16 %v4319
      %v4545 = vunpack.c.l.b16 %v4320
      %v4546 = vunpack.c.l.b16 %v4321
      %v4547 = vunpack.c.l.b16 %v4322
      %v4548 = vpack.c.b16 %v4540, %v1355
      %v4549 = vpack.c.b16 %v4541, %v1357
      %v4550 = vpack.c.b16 %v4542, %v1359
      %v4551 = vpack.c.b16 %v4543, %v1361
      %v4552 = vpack.c.b16 %v4544, %v1363
      %v4553 = vpack.c.b16 %v4545, %v1365
      %v4554 = vpack.c.b16 %v4546, %v1367
      %v4555 = vpack.c.b16 %v4547, %v1369
      %4556 = vrot.lane.b32.xlu0 %v4548, 80
      %v4557 = vpop.permute.xlu0 %4556
      %4558 = vrot.lane.b32.xlu0 %v4549, 80
      %v4559 = vpop.permute.xlu0 %4558
      %4560 = vrot.lane.b32.xlu0 %v4550, 80
      %v4561 = vpop.permute.xlu0 %4560
      %4562 = vrot.lane.b32.xlu0 %v4551, 80
      %v4563 = vpop.permute.xlu0 %4562
      %4564 = vrot.lane.b32.xlu0 %v4552, 80
      %v4565 = vpop.permute.xlu0 %4564
      %4566 = vrot.lane.b32.xlu0 %v4553, 80
      %v4567 = vpop.permute.xlu0 %4566
      %4568 = vrot.lane.b32.xlu0 %v4554, 80
      %v4569 = vpop.permute.xlu0 %4568
      %4570 = vrot.lane.b32.xlu0 %v4555, 80
      %v4571 = vpop.permute.xlu0 %4570
      %v4588 = vunpack.c.l.b16 %v4324
      %v4589 = vunpack.c.l.b16 %v4325
      %v4590 = vunpack.c.l.b16 %v4326
      %v4591 = vunpack.c.l.b16 %v4327
      %v4592 = vunpack.c.l.b16 %v4328
      %v4593 = vunpack.c.l.b16 %v4329
      %v4594 = vunpack.c.l.b16 %v4330
      %v4595 = vunpack.c.l.b16 %v4331
      %v4596 = vunpack.c.l.b16 %v4332
      %v4597 = vunpack.c.l.b16 %v4333
      %v4598 = vunpack.c.l.b16 %v4334
      %v4599 = vunpack.c.l.b16 %v4335
      %v4600 = vunpack.c.l.b16 %v4336
      %v4601 = vunpack.c.l.b16 %v4337
      %v4602 = vunpack.c.l.b16 %v4338
      %v4603 = vunpack.c.l.b16 %v4339
      %v4604 = vpack.c.b16 %v4589, %v4588
      %v4605 = vpack.c.b16 %v4591, %v4590
      %v4606 = vpack.c.b16 %v4593, %v4592
      %v4607 = vpack.c.b16 %v4595, %v4594
      %v4608 = vpack.c.b16 %v4597, %v4596
      %v4609 = vpack.c.b16 %v4599, %v4598
      %v4610 = vpack.c.b16 %v4601, %v4600
      %v4611 = vpack.c.b16 %v4603, %v4602
      %4612 = vrot.lane.b32.xlu0 %v4604, 96
      %v4613 = vpop.permute.xlu0 %4612
      %4614 = vrot.lane.b32.xlu0 %v4605, 96
      %v4615 = vpop.permute.xlu0 %4614
      %4616 = vrot.lane.b32.xlu0 %v4606, 96
      %v4617 = vpop.permute.xlu0 %4616
      %4618 = vrot.lane.b32.xlu0 %v4607, 96
      %v4619 = vpop.permute.xlu0 %4618
      %4620 = vrot.lane.b32.xlu0 %v4608, 96
      %v4621 = vpop.permute.xlu0 %4620
      %4622 = vrot.lane.b32.xlu0 %v4609, 96
      %v4623 = vpop.permute.xlu0 %4622
      %4624 = vrot.lane.b32.xlu0 %v4610, 96
      %v4625 = vpop.permute.xlu0 %4624
      %4626 = vrot.lane.b32.xlu0 %v4611, 96
      %v4627 = vpop.permute.xlu0 %4626
      %v4636 = vunpack.c.l.b16 %v4340
      %v4637 = vunpack.c.l.b16 %v4341
      %v4638 = vunpack.c.l.b16 %v4342
      %v4639 = vunpack.c.l.b16 %v4343
      %v4640 = vunpack.c.l.b16 %v4344
      %v4641 = vunpack.c.l.b16 %v4345
      %v4642 = vunpack.c.l.b16 %v4346
      %v4643 = vunpack.c.l.b16 %v4347
      %v4644 = vpack.c.b16 %v4636, %v4589
      %v4645 = vpack.c.b16 %v4637, %v4591
      %v4646 = vpack.c.b16 %v4638, %v4593
      %v4647 = vpack.c.b16 %v4639, %v4595
      %v4648 = vpack.c.b16 %v4640, %v4597
      %v4649 = vpack.c.b16 %v4641, %v4599
      %v4650 = vpack.c.b16 %v4642, %v4601
      %v4651 = vpack.c.b16 %v4643, %v4603
      %4652 = vrot.lane.b32.xlu0 %v4644, 112
      %v4653 = vpop.permute.xlu0 %4652
      %4654 = vrot.lane.b32.xlu0 %v4645, 112
      %v4655 = vpop.permute.xlu0 %4654
      %4656 = vrot.lane.b32.xlu0 %v4646, 112
      %v4657 = vpop.permute.xlu0 %4656
      %4658 = vrot.lane.b32.xlu0 %v4647, 112
      %v4659 = vpop.permute.xlu0 %4658
      %4660 = vrot.lane.b32.xlu0 %v4648, 112
      %v4661 = vpop.permute.xlu0 %4660
      %4662 = vrot.lane.b32.xlu0 %v4649, 112
      %v4663 = vpop.permute.xlu0 %4662
      %4664 = vrot.lane.b32.xlu0 %v4650, 112
      %v4665 = vpop.permute.xlu0 %4664
      %4666 = vrot.lane.b32.xlu0 %v4651, 112
      %v4667 = vpop.permute.xlu0 %4666
      %v4676 = vunpack.c.l.b16 %v4348
      %v4677 = vunpack.c.l.b16 %v4349
      %v4678 = vunpack.c.l.b16 %v4350
      %v4679 = vunpack.c.l.b16 %v4351
      %v4680 = vunpack.c.l.b16 %v4352
      %v4681 = vunpack.c.l.b16 %v4353
      %v4682 = vunpack.c.l.b16 %v4354
      %v4683 = vunpack.c.l.b16 %v4355
      %v4684 = vpack.c.b16 %v4676, %v4636
      %v4685 = vpack.c.b16 %v4677, %v4637
      %v4686 = vpack.c.b16 %v4678, %v4638
      %v4687 = vpack.c.b16 %v4679, %v4639
      %v4688 = vpack.c.b16 %v4680, %v4640
      %v4689 = vpack.c.b16 %v4681, %v4641
      %v4690 = vpack.c.b16 %v4682, %v4642
      %v4691 = vpack.c.b16 %v4683, %v4643
      %v4694 = vsel %vm1554, %v4388, %v4421
      %v4697 = vsel %vm1554, %v4389, %v4423
      %v4700 = vsel %vm1554, %v4390, %v4425
      %v4703 = vsel %vm1554, %v4391, %v4427
      %v4706 = vsel %vm1554, %v4392, %v4429
      %v4709 = vsel %vm1554, %v4393, %v4431
      %v4712 = vsel %vm1554, %v4394, %v4433
      %v4715 = vsel %vm1554, %v4395, %v4435
      %v4717 = vsel %vm1579, %v4694, %v4461
      %v4719 = vsel %vm1579, %v4697, %v4463
      %v4721 = vsel %vm1579, %v4700, %v4465
      %v4723 = vsel %vm1579, %v4703, %v4467
      %v4725 = vsel %vm1579, %v4706, %v4469
      %v4727 = vsel %vm1579, %v4709, %v4471
      %v4729 = vsel %vm1579, %v4712, %v4473
      %v4731 = vsel %vm1579, %v4715, %v4475
      %v4733 = vsel %vm1596, %v4717, %v4517
      %v4735 = vsel %vm1596, %v4719, %v4519
      %v4737 = vsel %vm1596, %v4721, %v4521
      %v4739 = vsel %vm1596, %v4723, %v4523
      %v4741 = vsel %vm1596, %v4725, %v4525
      %v4743 = vsel %vm1596, %v4727, %v4527
      %v4745 = vsel %vm1596, %v4729, %v4529
      %v4747 = vsel %vm1596, %v4731, %v4531
      %v4748 = vsel %vm1613, %v4733, %v1379
      %v4749 = vsel %vm1613, %v4735, %v1381
      %v4750 = vsel %vm1613, %v4737, %v1383
      %v4751 = vsel %vm1613, %v4739, %v1385
      %v4752 = vsel %vm1613, %v4741, %v1387
      %v4753 = vsel %vm1613, %v4743, %v1389
      %v4754 = vsel %vm1613, %v4745, %v1391
      %v4755 = vsel %vm1613, %v4747, %v1393
      %v4757 = vsel %vm1630, %v4748, %v4557
      %v4759 = vsel %vm1630, %v4749, %v4559
      %v4761 = vsel %vm1630, %v4750, %v4561
      %v4763 = vsel %vm1630, %v4751, %v4563
      %v4765 = vsel %vm1630, %v4752, %v4565
      %v4767 = vsel %vm1630, %v4753, %v4567
      %v4769 = vsel %vm1630, %v4754, %v4569
      %v4771 = vsel %vm1630, %v4755, %v4571
      %v4773 = vsel %vm1647, %v4757, %v4613
      %v4775 = vsel %vm1647, %v4759, %v4615
      %v4777 = vsel %vm1647, %v4761, %v4617
      %v4779 = vsel %vm1647, %v4763, %v4619
      %v4781 = vsel %vm1647, %v4765, %v4621
      %v4783 = vsel %vm1647, %v4767, %v4623
      %v4785 = vsel %vm1647, %v4769, %v4625
      %v4787 = vsel %vm1647, %v4771, %v4627
      %v4789 = vsel %vm1664, %v4773, %v4653
      %v4792 = vsel %vm1664, %v4775, %v4655
      %v4795 = vsel %vm1664, %v4777, %v4657
      %v4798 = vsel %vm1664, %v4779, %v4659
      %v4801 = vsel %vm1664, %v4781, %v4661
      %v4804 = vsel %vm1664, %v4783, %v4663
      %v4807 = vsel %vm1664, %v4785, %v4665
      %v4810 = vsel %vm1664, %v4787, %v4667
      %s4812 = scalar_lea.vmem %s1, 216
      %v4813 = vld [vmem:[%s4812] sm:$0xf]
      %v4814 = vld [vmem:[%s4812 + $0x4] sm:$0xf]
      %v4815 = vld [vmem:[%s4812 + $0x8] sm:$0xf]
      %v4816 = vld [vmem:[%s4812 + $0xc] sm:$0xf]
      %v4817 = vld [vmem:[%s4812 + $0x10] sm:$0xf]
      %v4818 = vld [vmem:[%s4812 + $0x14] sm:$0xf]
      %v4819 = vld [vmem:[%s4812 + $0x18] sm:$0xf]
      %v4820 = vld [vmem:[%s4812 + $0x1c] sm:$0xf]
      %v4821 = vld [vmem:[%s4812 + $0x20] sm:$0xf]
      %v4822 = vld [vmem:[%s4812 + $0x24] sm:$0xf]
      %v4823 = vld [vmem:[%s4812 + $0x28] sm:$0xf]
      %v4824 = vld [vmem:[%s4812 + $0x2c] sm:$0xf]
      %v4825 = vld [vmem:[%s4812 + $0x30] sm:$0xf]
      %v4826 = vld [vmem:[%s4812 + $0x34] sm:$0xf]
      %v4827 = vld [vmem:[%s4812 + $0x38] sm:$0xf]
      %v4828 = vld [vmem:[%s4812 + $0x3c] sm:$0xf]
      %v4829 = vld [vmem:[%s4812 + $0x40] sm:$0xf]
      %v4830 = vld [vmem:[%s4812 + $0x44] sm:$0xf]
      %v4849 = vunpack.c.l.b16 %v4813
      %v4850 = vunpack.c.l.b16 %v4814
      %v4851 = vunpack.c.l.b16 %v4815
      %v4852 = vunpack.c.l.b16 %v4816
      %v4853 = vunpack.c.l.b16 %v4817
      %v4854 = vunpack.c.l.b16 %v4818
      %v4855 = vunpack.c.l.b16 %v4819
      %v4856 = vunpack.c.l.b16 %v4820
      %v4857 = vunpack.c.l.b16 %v4821
      %v4858 = vunpack.c.l.b16 %v4822
      %v4859 = vunpack.c.l.b16 %v4823
      %v4860 = vunpack.c.l.b16 %v4824
      %v4861 = vunpack.c.l.b16 %v4825
      %v4862 = vunpack.c.l.b16 %v4826
      %v4863 = vunpack.c.l.b16 %v4827
      %v4864 = vunpack.c.l.b16 %v4828
      %v4865 = vunpack.c.l.b16 %v4829
      %v4866 = vunpack.c.l.b16 %v4830
      %v4867 = vpack.c.b16 %v4850, %v4849
      %v4868 = vpack.c.b16 %v4852, %v4851
      %v4869 = vpack.c.b16 %v4854, %v4853
      %v4870 = vpack.c.b16 %v4856, %v4855
      %v4871 = vpack.c.b16 %v4858, %v4857
      %v4872 = vpack.c.b16 %v4860, %v4859
      %v4873 = vpack.c.b16 %v4862, %v4861
      %v4874 = vpack.c.b16 %v4864, %v4863
      %v4875 = vpack.c.b16 %v4866, %v4865
      %v4886 = vsel %vm1554, %v4684, 0
      %v4889 = vsel %vm1554, %v4685, 0
      %v4892 = vsel %vm1554, %v4686, 0
      %v4895 = vsel %vm1554, %v4687, 0
      %v4898 = vsel %vm1554, %v4688, 0
      %v4901 = vsel %vm1554, %v4689, 0
      %v4904 = vsel %vm1554, %v4690, 0
      %v4907 = vsel %vm1554, %v4691, 0
      %4909 = vmatprep.subr.bf16.mxu0 0
      %4910 = vmatpush1.bf16.msra.mxu0 %v4874
      %4911 = vmatprep.subr.bf16.mxu0 0
      %4912 = vmatpush1.bf16.msra.mxu0 %v4873
      %4913 = vmatprep.subr.bf16.mxu0 0
      %4914 = vmatpush1.bf16.msra.mxu0 %v4872
      %4915 = vmatprep.subr.bf16.mxu0 0
      %4916 = vmatpush1.bf16.msra.mxu0 %v4871
      %4917 = vmatprep.subr.bf16.mxu0 0
      %4918 = vmatpush1.bf16.msra.mxu0 %v4870
      %4919 = vmatprep.subr.bf16.mxu0 0
      %4920 = vmatpush1.bf16.msra.mxu0 %v4869
      %4921 = vmatprep.subr.bf16.mxu0 0
      %4922 = vmatpush1.bf16.msra.mxu0 %v4868
      %4923 = vmatprep.subr.bf16.mxu0 0
      %4924 = vmatpush1.bf16.msra.mxu0 %v4867
      %4925 = vmatprep.subr.bf16.mxu0 0
      %4926 = vmatpush2.bf16.msra.mxu0 0
      %4927 = vmatprep.subr.bf16.mxu0 0
      %4928 = vmatpush2.bf16.msra.mxu0 0
      %4929 = vmatprep.subr.bf16.mxu0 0
      %4930 = vmatpush2.bf16.msra.mxu0 0
      %4931 = vmatprep.subr.bf16.mxu0 0
      %4932 = vmatpush2.bf16.msra.mxu0 0
      %4933 = vmatprep.subr.bf16.mxu0 0
      %4934 = vmatpush2.bf16.msra.mxu0 0
      %4935 = vmatprep.subr.bf16.mxu0 0
      %4936 = vmatpush2.bf16.msra.mxu0 0
      %4937 = vmatprep.subr.bf16.mxu0 0
      %4938 = vmatpush2.bf16.msra.mxu0 0
      %4939 = vmatprep.subr.bf16.mxu0 0
      %4940 = vmatpush2.bf16.msra.mxu0 %v4875
      %4941 = vmatprep.mubr.bf16.mxu0 %v4886
      %4942 = vmatmul.mubr.bf16.gmra.mxu0 %v4789
      %v4943 = vpop.f32.mrf.mxu0
      %v4944 = vadd.f32 0.0, %v4943
      %v4945 = vpop.f32.mrf.mxu0
      %v4946 = vpop.f32.mrf.mxu0
      %v4947 = vadd.f32 0.0, %v4946
      %v4948 = vpop.f32.mrf.mxu0
      %4949 = vmatprep.mubr.bf16.mxu0 %v4889
      %4950 = vmatmul.mubr.bf16.gmra.mxu0 %v4792
      %v4951 = vpop.f32.mrf.mxu0
      %v4952 = vadd.f32 0.0, %v4951
      %v4953 = vpop.f32.mrf.mxu0
      %v4954 = vpop.f32.mrf.mxu0
      %v4955 = vadd.f32 0.0, %v4954
      %v4956 = vpop.f32.mrf.mxu0
      %4957 = vmatprep.mubr.bf16.mxu0 %v4892
      %4958 = vmatmul.mubr.bf16.gmra.mxu0 %v4795
      %v4959 = vpop.f32.mrf.mxu0
      %v4960 = vadd.f32 0.0, %v4959
      %v4961 = vpop.f32.mrf.mxu0
      %v4962 = vpop.f32.mrf.mxu0
      %v4963 = vadd.f32 0.0, %v4962
      %v4964 = vpop.f32.mrf.mxu0
      %4965 = vmatprep.mubr.bf16.mxu0 %v4895
      %4966 = vmatmul.mubr.bf16.gmra.mxu0 %v4798
      %v4967 = vpop.f32.mrf.mxu0
      %v4968 = vadd.f32 0.0, %v4967
      %v4969 = vpop.f32.mrf.mxu0
      %v4970 = vpop.f32.mrf.mxu0
      %v4971 = vadd.f32 0.0, %v4970
      %v4972 = vpop.f32.mrf.mxu0
      %4973 = vmatprep.mubr.bf16.mxu0 %v4898
      %4974 = vmatmul.mubr.bf16.gmra.mxu0 %v4801
      %v4975 = vpop.f32.mrf.mxu0
      %v4976 = vadd.f32 0.0, %v4975
      %v4977 = vpop.f32.mrf.mxu0
      %v4978 = vpop.f32.mrf.mxu0
      %v4979 = vadd.f32 0.0, %v4978
      %v4980 = vpop.f32.mrf.mxu0
      %4981 = vmatprep.mubr.bf16.mxu0 %v4901
      %4982 = vmatmul.mubr.bf16.gmra.mxu0 %v4804
      %v4983 = vpop.f32.mrf.mxu0
      %v4984 = vadd.f32 0.0, %v4983
      %v4985 = vpop.f32.mrf.mxu0
      %v4986 = vpop.f32.mrf.mxu0
      %v4987 = vadd.f32 0.0, %v4986
      %v4988 = vpop.f32.mrf.mxu0
      %4989 = vmatprep.mubr.bf16.mxu0 %v4904
      %4990 = vmatmul.mubr.bf16.gmra.mxu0 %v4807
      %v4991 = vpop.f32.mrf.mxu0
      %v4992 = vadd.f32 0.0, %v4991
      %v4993 = vpop.f32.mrf.mxu0
      %v4994 = vpop.f32.mrf.mxu0
      %v4995 = vadd.f32 0.0, %v4994
      %v4996 = vpop.f32.mrf.mxu0
      %4997 = vmatprep.mubr.bf16.mxu0 %v4907
      %4998 = vmatmul.mubr.bf16.gmra.mxu0 %v4810
      %v4999 = vpop.f32.mrf.mxu0
      %v5000 = vadd.f32 0.0, %v4999
      %v5001 = vpop.f32.mrf.mxu0
      %v5002 = vpop.f32.mrf.mxu0
      %v5003 = vadd.f32 0.0, %v5002
      %v5004 = vpop.f32.mrf.mxu0
      %5005 = vdwg.mxu0
      %5022 = vrot.lane.b32.xlu0 %v3006, 4
      %v5023 = vpop.permute.xlu0 %5022
      %5024 = vrot.lane.b32.xlu0 %v3009, 4
      %v5025 = vpop.permute.xlu0 %5024
      %5026 = vrot.lane.b32.xlu0 %v3014, 4
      %v5027 = vpop.permute.xlu0 %5026
      %5028 = vrot.lane.b32.xlu0 %v3017, 4
      %v5029 = vpop.permute.xlu0 %5028
      %5030 = vrot.lane.b32.xlu0 %v3022, 4
      %v5031 = vpop.permute.xlu0 %5030
      %5032 = vrot.lane.b32.xlu0 %v3025, 4
      %v5033 = vpop.permute.xlu0 %5032
      %5034 = vrot.lane.b32.xlu0 %v3030, 4
      %v5035 = vpop.permute.xlu0 %5034
      %5036 = vrot.lane.b32.xlu0 %v3033, 4
      %v5037 = vpop.permute.xlu0 %5036
      %5038 = vrot.lane.b32.xlu0 %v3038, 4
      %v5039 = vpop.permute.xlu0 %5038
      %5040 = vrot.lane.b32.xlu0 %v3041, 4
      %v5041 = vpop.permute.xlu0 %5040
      %5042 = vrot.lane.b32.xlu0 %v3046, 4
      %v5043 = vpop.permute.xlu0 %5042
      %5044 = vrot.lane.b32.xlu0 %v3049, 4
      %v5045 = vpop.permute.xlu0 %5044
      %5046 = vrot.lane.b32.xlu0 %v3054, 4
      %v5047 = vpop.permute.xlu0 %5046
      %5048 = vrot.lane.b32.xlu0 %v3057, 4
      %v5049 = vpop.permute.xlu0 %5048
      %5050 = vrot.lane.b32.xlu0 %v3062, 4
      %v5051 = vpop.permute.xlu0 %5050
      %5052 = vrot.lane.b32.xlu0 %v3065, 4
      %v5053 = vpop.permute.xlu0 %5052
      %5086 = vrot.lane.b32.xlu0 %v4205, 8
      %v5087 = vpop.permute.xlu0 %5086
      %5088 = vrot.lane.b32.xlu0 %v4208, 8
      %v5089 = vpop.permute.xlu0 %5088
      %5090 = vrot.lane.b32.xlu0 %v4213, 8
      %v5091 = vpop.permute.xlu0 %5090
      %5092 = vrot.lane.b32.xlu0 %v4216, 8
      %v5093 = vpop.permute.xlu0 %5092
      %5094 = vrot.lane.b32.xlu0 %v4221, 8
      %v5095 = vpop.permute.xlu0 %5094
      %5096 = vrot.lane.b32.xlu0 %v4224, 8
      %v5097 = vpop.permute.xlu0 %5096
      %5098 = vrot.lane.b32.xlu0 %v4229, 8
      %v5099 = vpop.permute.xlu0 %5098
      %5100 = vrot.lane.b32.xlu0 %v4232, 8
      %v5101 = vpop.permute.xlu0 %5100
      %5102 = vrot.lane.b32.xlu0 %v4237, 8
      %v5103 = vpop.permute.xlu0 %5102
      %5104 = vrot.lane.b32.xlu0 %v4240, 8
      %v5105 = vpop.permute.xlu0 %5104
      %5106 = vrot.lane.b32.xlu0 %v4245, 8
      %v5107 = vpop.permute.xlu0 %5106
      %5108 = vrot.lane.b32.xlu0 %v4248, 8
      %v5109 = vpop.permute.xlu0 %5108
      %5110 = vrot.lane.b32.xlu0 %v4253, 8
      %v5111 = vpop.permute.xlu0 %5110
      %5112 = vrot.lane.b32.xlu0 %v4256, 8
      %v5113 = vpop.permute.xlu0 %5112
      %5114 = vrot.lane.b32.xlu0 %v4261, 8
      %v5115 = vpop.permute.xlu0 %5114
      %5116 = vrot.lane.b32.xlu0 %v4264, 8
      %v5117 = vpop.permute.xlu0 %5116
      %5150 = vrot.lane.b32.xlu0 %v4944, 12
      %v5151 = vpop.permute.xlu0 %5150
      %5152 = vrot.lane.b32.xlu0 %v4947, 12
      %v5153 = vpop.permute.xlu0 %5152
      %5154 = vrot.lane.b32.xlu0 %v4952, 12
      %v5155 = vpop.permute.xlu0 %5154
      %5156 = vrot.lane.b32.xlu0 %v4955, 12
      %v5157 = vpop.permute.xlu0 %5156
      %5158 = vrot.lane.b32.xlu0 %v4960, 12
      %v5159 = vpop.permute.xlu0 %5158
      %5160 = vrot.lane.b32.xlu0 %v4963, 12
      %v5161 = vpop.permute.xlu0 %5160
      %5162 = vrot.lane.b32.xlu0 %v4968, 12
      %v5163 = vpop.permute.xlu0 %5162
      %5164 = vrot.lane.b32.xlu0 %v4971, 12
      %v5165 = vpop.permute.xlu0 %5164
      %5166 = vrot.lane.b32.xlu0 %v4976, 12
      %v5167 = vpop.permute.xlu0 %5166
      %5168 = vrot.lane.b32.xlu0 %v4979, 12
      %v5169 = vpop.permute.xlu0 %5168
      %5170 = vrot.lane.b32.xlu0 %v4984, 12
      %v5171 = vpop.permute.xlu0 %5170
      %5172 = vrot.lane.b32.xlu0 %v4987, 12
      %v5173 = vpop.permute.xlu0 %5172
      %5174 = vrot.lane.b32.xlu0 %v4992, 12
      %v5175 = vpop.permute.xlu0 %5174
      %5176 = vrot.lane.b32.xlu0 %v4995, 12
      %v5177 = vpop.permute.xlu0 %5176
      %5178 = vrot.lane.b32.xlu0 %v5000, 12
      %v5179 = vpop.permute.xlu0 %5178
      %5180 = vrot.lane.b32.xlu0 %v5003, 12
      %v5181 = vpop.permute.xlu0 %5180
      %vm5198 = vcmask 31744
      %v5199 = vsel %vm5198, %v1820, %v5023
      %v5200 = vsel %vm5198, %v1823, %v5025
      %v5201 = vsel %vm5198, %v1828, %v5027
      %v5202 = vsel %vm5198, %v1831, %v5029
      %v5203 = vsel %vm5198, %v1836, %v5031
      %v5204 = vsel %vm5198, %v1839, %v5033
      %v5205 = vsel %vm5198, %v1844, %v5035
      %v5206 = vsel %vm5198, %v1847, %v5037
      %v5207 = vsel %vm5198, %v1852, %v5039
      %v5208 = vsel %vm5198, %v1855, %v5041
      %v5209 = vsel %vm5198, %v1860, %v5043
      %v5210 = vsel %vm5198, %v1863, %v5045
      %v5211 = vsel %vm5198, %v1868, %v5047
      %v5212 = vsel %vm5198, %v1871, %v5049
      %v5213 = vsel %vm5198, %v1876, %v5051
      %v5214 = vsel %vm5198, %v1879, %v5053
      %vm5215 = vcmask 64512
      %v5216 = vsel %vm5215, %v5199, %v5087
      %v5217 = vsel %vm5215, %v5200, %v5089
      %v5218 = vsel %vm5215, %v5201, %v5091
      %v5219 = vsel %vm5215, %v5202, %v5093
      %v5220 = vsel %vm5215, %v5203, %v5095
      %v5221 = vsel %vm5215, %v5204, %v5097
      %v5222 = vsel %vm5215, %v5205, %v5099
      %v5223 = vsel %vm5215, %v5206, %v5101
      %v5224 = vsel %vm5215, %v5207, %v5103
      %v5225 = vsel %vm5215, %v5208, %v5105
      %v5226 = vsel %vm5215, %v5209, %v5107
      %v5227 = vsel %vm5215, %v5210, %v5109
      %v5228 = vsel %vm5215, %v5211, %v5111
      %v5229 = vsel %vm5215, %v5212, %v5113
      %v5230 = vsel %vm5215, %v5213, %v5115
      %v5231 = vsel %vm5215, %v5214, %v5117
      %vm5232 = vcmask 97280
      %v5233 = vsel %vm5232, %v5216, %v5151
      %v5234 = vsel %vm5232, %v5217, %v5153
      %v5235 = vsel %vm5232, %v5218, %v5155
      %v5236 = vsel %vm5232, %v5219, %v5157
      %v5237 = vsel %vm5232, %v5220, %v5159
      %v5238 = vsel %vm5232, %v5221, %v5161
      %v5239 = vsel %vm5232, %v5222, %v5163
      %v5240 = vsel %vm5232, %v5223, %v5165
      %v5241 = vsel %vm5232, %v5224, %v5167
      %v5242 = vsel %vm5232, %v5225, %v5169
      %v5243 = vsel %vm5232, %v5226, %v5171
      %v5244 = vsel %vm5232, %v5227, %v5173
      %v5245 = vsel %vm5232, %v5228, %v5175
      %v5246 = vsel %vm5232, %v5229, %v5177
      %v5247 = vsel %vm5232, %v5230, %v5179
      %v5248 = vsel %vm5232, %v5231, %v5181
      %v5249 = vld [vmem:[%s2] sm:$0x1]
      %v5251 = vlaneseq
      %v5252 = vshrl.u32 %v5251, 7
      %v5253 = vsub.s32 0, %v5252
      %v5254 = vrot.slane %v5249, %v5253
      %v5256 = vadd.f32 %v5233, %v5254
      %v5257 = vadd.f32 %v5234, %v5254
      %v5258 = vadd.f32 %v5235, %v5254
      %v5259 = vadd.f32 %v5236, %v5254
      %v5260 = vadd.f32 %v5237, %v5254
      %v5261 = vadd.f32 %v5238, %v5254
      %v5262 = vadd.f32 %v5239, %v5254
      %v5263 = vadd.f32 %v5240, %v5254
      %v5264 = vadd.f32 %v5241, %v5254
      %v5265 = vadd.f32 %v5242, %v5254
      %v5266 = vadd.f32 %v5243, %v5254
      %v5267 = vadd.f32 %v5244, %v5254
      %v5268 = vadd.f32 %v5245, %v5254
      %v5269 = vadd.f32 %v5246, %v5254
      %v5270 = vadd.f32 %v5247, %v5254
      %v5271 = vadd.f32 %v5248, %v5254
      %v5272 = vmax.f32 %v5256, 0.0
      %v5273 = vmax.f32 %v5257, 0.0
      %v5274 = vmax.f32 %v5258, 0.0
      %v5275 = vmax.f32 %v5259, 0.0
      %v5276 = vmax.f32 %v5260, 0.0
      %v5277 = vmax.f32 %v5261, 0.0
      %v5278 = vmax.f32 %v5262, 0.0
      %v5279 = vmax.f32 %v5263, 0.0
      %v5280 = vmax.f32 %v5264, 0.0
      %v5281 = vmax.f32 %v5265, 0.0
      %v5282 = vmax.f32 %v5266, 0.0
      %v5283 = vmax.f32 %v5267, 0.0
      %v5284 = vmax.f32 %v5268, 0.0
      %v5285 = vmax.f32 %v5269, 0.0
      %v5286 = vmax.f32 %v5270, 0.0
      %v5287 = vmax.f32 %v5271, 0.0
      %5288 = vst.msk [vmem:[%s206] sm:$0xff] %vm1554, %v5272
      %5289 = vst.msk [vmem:[%s206 + $0x8] sm:$0xff] %vm1554, %v5273
      %5290 = vst.msk [vmem:[%s206 + $0x10] sm:$0xff] %vm1554, %v5274
      %5291 = vst.msk [vmem:[%s206 + $0x18] sm:$0xff] %vm1554, %v5275
      %5292 = vst.msk [vmem:[%s206 + $0x20] sm:$0xff] %vm1554, %v5276
      %5293 = vst.msk [vmem:[%s206 + $0x28] sm:$0xff] %vm1554, %v5277
      %5294 = vst.msk [vmem:[%s206 + $0x30] sm:$0xff] %vm1554, %v5278
      %5295 = vst.msk [vmem:[%s206 + $0x38] sm:$0xff] %vm1554, %v5279
      %5296 = vst.msk [vmem:[%s206 + $0x40] sm:$0xff] %vm1554, %v5280
      %5297 = vst.msk [vmem:[%s206 + $0x48] sm:$0xff] %vm1554, %v5281
      %5298 = vst.msk [vmem:[%s206 + $0x50] sm:$0xff] %vm1554, %v5282
      %5299 = vst.msk [vmem:[%s206 + $0x58] sm:$0xff] %vm1554, %v5283
      %5300 = vst.msk [vmem:[%s206 + $0x60] sm:$0xff] %vm1554, %v5284
      %5301 = vst.msk [vmem:[%s206 + $0x68] sm:$0xff] %vm1554, %v5285
      %5302 = vst.msk [vmem:[%s206 + $0x70] sm:$0xff] %vm1554, %v5286
      %5303 = vst.msk [vmem:[%s206 + $0x78] sm:$0xff] %vm1554, %v5287
      %s5304 = smul.u32 16, %s19
      %p5305 = scmp.lt.s32.totalorder %s18, 1
      %s5306 = scalar_select %p5305, %s18, 1
      %p5307 = scmp.lt.s32.totalorder %s5304, 31
      %s5308 = scalar_select %p5307, %s5304, 31
      %s5309 = smul.addr %s5306, 32
      %s5310 = sadd.s32 %s5308, %s5309
      %s5311 = smul.addr %s5310, 8
      %s5312 = scalar_lea.vmem %s3, %s5311
      // Predicated region
      $region33: #{atnconv_forward.3} parent=31 // pred_check
        %p5313 = pneg %p116
      $region34: #{atnconv_forward.3} parent=31 // pred_check_branch
        %5315 = sbr.rel (%p5313) target = $region36
      $region35: #{atnconv_forward.3} parent=31 // pred_region
        %s5316 = smul.u32 16, %s19
      $region36: #{atnconv_forward.3} parent=31 // pred_fallthru
        _
    $region32: #{atnconv_forward.3} parent=5 // pred_fallthru
      _
    %p5317 = scmp.le.s32.totalorder 2, %s9
    // Predicated region
    $region37: #{atnconv_forward.3} parent=5 // pred_check
      %p5318 = pneg %p5317
    $region38: #{atnconv_forward.3} parent=5 // pred_check_branch
      %5320 = sbr.rel (%p5318) target = $region40
    $region39: #{atnconv_forward.3} parent=5 // pred_region
      %s5321 = ssub.s32 %s9, 2
      // Predicated region
      $region41: #{atnconv_forward.3} parent=39 // pred_check
        %p5322 = pneg %p122
      $region42: #{atnconv_forward.3} parent=39 // pred_check_branch
        %5324 = sbr.rel (%p5322) target = $region44
      $region43: #{atnconv_forward.3} parent=39 // pred_region
        %s5325 = smul.u32 16, %s21
        %p5326 = scmp.lt.s32.totalorder %s20, 1
        %s5327 = scalar_select %p5326, %s20, 1
        %p5328 = scmp.lt.s32.totalorder %s5325, 31
        %s5329 = scalar_select %p5328, %s5325, 31
        %s5330 = smul.addr %s5327, 32
        %s5331 = sadd.s32 %s5329, %s5330
        %s5332 = smul.addr %s5331, 8
        %s5333 = scalar_lea.vmem %s3, %s5332
      $region44: #{atnconv_forward.3} parent=39 // pred_fallthru
        _
    $region40: #{atnconv_forward.3} parent=5 // pred_fallthru
      _
  $region6: #{atnconv_forward.3} parent=0 // loop_footer
    %s13 = sadd.s32 1, %s9
  $region7: #{atnconv_forward.3} parent=0 // loop_footer_branch
    %8 = sbr.rel target = $region3
  $region8: #{atnconv_forward.3} parent=0 // loop_exit
    _

</llo_original>
